<compile_context>
chip_gen: v7x
topology: tpu7x:2x2x1
jax: 0.10.0
libtpu: 0.0.40
codegen_flags: <defaults>
</compile_context>

<pallas_src>
import jax
import jax.numpy as jnp
from jax.experimental import pallas as pl
from jax.experimental.pallas import tpu as pltpu  # noqa: F401  (TPU-specific knobs)

IN_F = 28 * 28      # 784
HID = 2048
OUT_F = 10
OUT_PAD = 128       # lane-dense padded output width


def overfitnet_kernel(x_ref, w1_ref, b1_ref, w2_ref, b2_ref, o_ref):
    # h = relu(x @ W1 + b1)   -- bf16 operands, f32 MXU accumulation
    h = jnp.dot(x_ref[...], w1_ref[...], preferred_element_type=jnp.float32)
    h = jnp.maximum(h + b1_ref[...], 0.0)
    # out = h @ W2 + b2       -- bf16 operands again, f32 accumulation;
    # W2 / b2 were zero-padded to 128 lanes once at param-prep time.
    o_ref[...] = (jnp.dot(h.astype(jnp.bfloat16), w2_ref[...],
                          preferred_element_type=jnp.float32)
                  + b2_ref[...])


def prepare_params(w1, b1, w2, b2):
    """One-time conversion of the PyTorch-layout params to the kernel layout.

    Call this once (e.g. when building the train/eval state), NOT per forward.
    w1: (784, 2048)  b1: (2048,)   [stored (in, out), i.e. transposed vs PyTorch]
    w2: (2048, 10)   b2: (10,)
    """
    w1_bf = w1.astype(jnp.bfloat16)                                   # 3.2 MB
    b1_2d = b1.reshape(1, HID).astype(jnp.float32)
    w2_p = (jnp.zeros((HID, OUT_PAD), jnp.bfloat16)                   # 0.5 MB
            .at[:, :OUT_F].set(w2.astype(jnp.bfloat16)))
    b2_p = jnp.zeros((1, OUT_PAD), jnp.float32).at[0, :OUT_F].set(b2)
    return w1_bf, b1_2d, w2_p, b2_p


def overfitnet_forward(x, w1_bf, b1_2d, w2_p, b2_p):
    """Forward pass. x: (B, 1, 28, 28) or (B, 784); params from prepare_params."""
    x = x.reshape(-1, IN_F).astype(jnp.bfloat16)   # the .view(-1, 28*28); tiny cast
    B = x.shape[0]

    out_pad = pl.pallas_call(
        overfitnet_kernel,
        out_shape=jax.ShapeDtypeStruct((B, OUT_PAD), jnp.float32),
        in_specs=[
            pl.BlockSpec((B, IN_F), lambda: (0, 0)),        # x       (full, bf16)
            pl.BlockSpec((IN_F, HID), lambda: (0, 0)),      # W1      (full, bf16)
            pl.BlockSpec((1, HID), lambda: (0, 0)),         # b1      (f32)
            pl.BlockSpec((HID, OUT_PAD), lambda: (0, 0)),   # W2      (full, bf16, pre-padded)
            pl.BlockSpec((1, OUT_PAD), lambda: (0, 0)),     # b2      (f32, pre-padded)
        ],
        out_specs=pl.BlockSpec((B, OUT_PAD), lambda: (0, 0)),
    )(x, w1_bf, b1_2d, w2_p, b2_p)

    return out_pad[:, :OUT_F]


def init_params(key):
    k1, k2, k3, k4 = jax.random.split(key, 4)
    # deterministic synthetic init (PyTorch-style uniform bounds)
    bound1 = 1.0 / (IN_F ** 0.5)
    bound2 = 1.0 / (HID ** 0.5)
    w1 = jax.random.uniform(k1, (IN_F, HID), jnp.float32, -bound1, bound1)
    b1 = jax.random.uniform(k2, (HID,), jnp.float32, -bound1, bound1)
    w2 = jax.random.uniform(k3, (HID, OUT_F), jnp.float32, -bound2, bound2)
    b2 = jax.random.uniform(k4, (OUT_F,), jnp.float32, -bound2, bound2)
    return w1, b1, w2, b2


if __name__ == "__main__":
    key = jax.random.PRNGKey(0)
    kx, kp = jax.random.split(key)
    B = 8
    # MNIST-like input (B, 1, 28, 28); forward flattens it to (B, 784)
    x_img = jax.random.normal(kx, (B, 1, 28, 28), jnp.float32)
    w1, b1, w2, b2 = init_params(kp)

    # One-time param prep (bf16 cast + 128-lane padding), outside the hot path.
    w1_bf, b1_2d, w2_p, b2_p = prepare_params(w1, b1, w2, b2)
    w1_bf, b1_2d, w2_p, b2_p = jax.block_until_ready((w1_bf, b1_2d, w2_p, b2_p))

    out = overfitnet_forward(x_img, w1_bf, b1_2d, w2_p, b2_p)
    jax.block_until_ready(out)

    # pure-JAX reference mirroring the kernel's bf16 quantization of x/W1/h/W2
    # (intentional precision choice: bf16 MXU operands, f32 accumulation)
    x_flat = x_img.reshape(-1, IN_F)
    x_q = x_flat.astype(jnp.bfloat16).astype(jnp.float32)
    w1_q = w1.astype(jnp.bfloat16).astype(jnp.float32)
    h_ref = jnp.maximum(x_q @ w1_q + b1.reshape(1, HID), 0.0)
    h_q = h_ref.astype(jnp.bfloat16).astype(jnp.float32)
    w2_q = w2.astype(jnp.bfloat16).astype(jnp.float32)
    ref = h_q @ w2_q + b2.reshape(1, OUT_F)

    assert out.shape == (B, OUT_F)
    assert jnp.allclose(out, ref, atol=5e-3, rtol=5e-3), \
        float(jnp.max(jnp.abs(out - ref)))

    print("KERNEL_OK")
</pallas_src>

<mosaic_0001>
module attributes {stable_mosaic.version = 11 : i64} {
  func.func @overfitnet_kernel(%arg0: memref<8x784xbf16, #tpu.memory_space<vmem>>, %arg1: memref<784x2048xbf16, #tpu.memory_space<vmem>>, %arg2: memref<1x2048xf32, #tpu.memory_space<vmem>>, %arg3: memref<2048x128xbf16, #tpu.memory_space<vmem>>, %arg4: memref<1x128xf32, #tpu.memory_space<vmem>>, %arg5: memref<8x128xf32, #tpu.memory_space<vmem>>) attributes {dimension_semantics = [], scalar_prefetch = 0 : i64, scratch_operands = 0 : i64, tpu.core_type = #tpu.core_type<tc>} {
    %c0 = arith.constant 0 : index
    %c0_0 = arith.constant 0 : index
    %0 = vector.load %arg0[%c0, %c0_0] : memref<8x784xbf16, #tpu.memory_space<vmem>>, vector<8x784xbf16>
    %c0_1 = arith.constant 0 : index
    %c0_2 = arith.constant 0 : index
    %1 = vector.load %arg1[%c0_1, %c0_2] : memref<784x2048xbf16, #tpu.memory_space<vmem>>, vector<784x2048xbf16>
    %cst = arith.constant dense<0.000000e+00> : vector<8x2048xf32>
    %2 = tpu.matmul %0, %1, %cst {dimension_numbers = #tpu.dot_dimension_numbers<[1], [0], [0], [1], [0, 0, 1, 1], [], []>} : vector<8x784xbf16>, vector<784x2048xbf16>, vector<8x2048xf32> -> vector<8x2048xf32>
    %c0_3 = arith.constant 0 : index
    %c0_4 = arith.constant 0 : index
    %3 = vector.load %arg2[%c0_3, %c0_4] : memref<1x2048xf32, #tpu.memory_space<vmem>>, vector<1x2048xf32>
    %4 = vector.broadcast %3 : vector<1x2048xf32> to vector<8x2048xf32>
    %5 = arith.addf %2, %4 : vector<8x2048xf32>
    %cst_5 = arith.constant 0.000000e+00 : f32
    %6 = vector.broadcast %cst_5 : f32 to vector<8x2048xf32>
    %7 = arith.maximumf %5, %6 : vector<8x2048xf32>
    %8 = arith.truncf %7 : vector<8x2048xf32> to vector<8x2048xbf16>
    %c0_6 = arith.constant 0 : index
    %c0_7 = arith.constant 0 : index
    %9 = vector.load %arg3[%c0_6, %c0_7] : memref<2048x128xbf16, #tpu.memory_space<vmem>>, vector<2048x128xbf16>
    %cst_8 = arith.constant dense<0.000000e+00> : vector<8x128xf32>
    %10 = tpu.matmul %8, %9, %cst_8 {dimension_numbers = #tpu.dot_dimension_numbers<[1], [0], [0], [1], [0, 0, 1, 1], [], []>} : vector<8x2048xbf16>, vector<2048x128xbf16>, vector<8x128xf32> -> vector<8x128xf32>
    %c0_9 = arith.constant 0 : index
    %c0_10 = arith.constant 0 : index
    %11 = vector.load %arg4[%c0_9, %c0_10] : memref<1x128xf32, #tpu.memory_space<vmem>>, vector<1x128xf32>
    %12 = vector.broadcast %11 : vector<1x128xf32> to vector<8x128xf32>
    %13 = arith.addf %10, %12 : vector<8x128xf32>
    %c0_11 = arith.constant 0 : index
    %c0_12 = arith.constant 0 : index
    %14 = vector.load %arg5[%c0_11, %c0_12] : memref<8x128xf32, #tpu.memory_space<vmem>>, vector<8x128xf32>
    tpu.vector_store %arg5[%c0_11, %c0_12], %13 {strides = array<i32>} : memref<8x128xf32, #tpu.memory_space<vmem>>, vector<8x128xf32>,
    return
  }
}

</mosaic_0001>

<llo_original>
// kernel: tpu_custom_call.1
$region0: #{tpu_custom_call.1}
  #allocation0 [shape = 'u32[]', space=smem, size = 0x4, offset = 0x4, fixed_abs, tag = 'smem constant byte address 0x4 - core index']
  #allocation1 [shape = 'u32[144,128]{1,0:T(1,128)}', space=vmem, size = 0x12000, scoped, tag = 'internal scratch']
  %s0 = inlined_call_operand.hbm [shape: bf16[8,784], index: 0, kind: input, shape index: {}]
  %s1 = inlined_call_operand.hbm [shape: bf16[784,2048], index: 1, kind: input, shape index: {}]
  %s2 = inlined_call_operand.hbm [shape: f32[1,2048], index: 2, kind: input, shape index: {}]
  %s3 = inlined_call_operand.hbm [shape: bf16[2048,128], index: 3, kind: input, shape index: {}]
  %s4 = inlined_call_operand.hbm [shape: f32[1,128], index: 4, kind: input, shape index: {}]
  %s5 = inlined_call_operand.hbm [shape: f32[8,128], index: 5, kind: output, shape index: {}]
  %s6 = sld [smem:[#allocation0]]
  $region50: #{tpu_custom_call.1} parent=0
    _
  %s8 = ssub.s32 1, %s6
  %s9 = scalar_select 0, %s8, %s6
  $region1: #{tpu_custom_call.1} parent=0
    #allocation2 [shape = 'u8[14336]{0}', space=vmem, size = 0x3800, scoped, tag = 'input window, operand 0, single buffered']
    #allocation3 [shape = 's32[1]{0}', space=sflag, size = 0x4, scoped, tag = 'scoped memory for tpu_custom_call.1']
    #allocation4 [shape = 's32[1]{0}', space=sflag, size = 0x4, scoped, tag = 'scoped memory for tpu_custom_call.1']
    #allocation5 [shape = 'u8[3211264]{0}', space=vmem, size = 0x310000, scoped, tag = 'input window, operand 1, single buffered']
    #allocation6 [shape = 's32[1]{0}', space=sflag, size = 0x4, scoped, tag = 'scoped memory for tpu_custom_call.1']
    #allocation7 [shape = 'u8[8192]{0}', space=vmem, size = 0x2000, scoped, tag = 'input window, operand 2, single buffered']
    #allocation8 [shape = 'u8[524288]{0}', space=vmem, size = 0x80000, scoped, tag = 'input window, operand 3, single buffered']
    #allocation9 [shape = 's32[1]{0}', space=sflag, size = 0x4, scoped, tag = 'scoped memory for tpu_custom_call.1']
    #allocation10 [shape = 'u8[512]{0}', space=vmem, size = 0x400, scoped, tag = 'input window, operand 4, single buffered']
    #allocation11 [shape = 'u8[4096]{0}', space=vmem, size = 0x1000, scoped, tag = 'output window, operand 0, single buffered']
    %10 = vsyncpa [#allocation3], 0
    %11 = vsyncpa [#allocation6], 0
    %12 = vsyncpa [#allocation9], 0
    %13 = vsyncpa [#allocation4], 0
    // Predicated region
    $region2: #{tpu_custom_call.1} parent=1 // pred_check
      _
    $region3: #{tpu_custom_call.1} parent=1 // pred_check_branch
      %15 = sbr.rel (0) target = $region5
    $region4: #{tpu_custom_call.1} parent=1 // pred_region
      %s17 = ssub.s32 448, 448
      %18 = vsyncadd [#allocation3], %s17
      %s20 = sshll.u32 [#allocation2], 4
      %s21 = int_to_ptr.vmem [resolvable:$true] %s20
      %23 = dma.hbm_to_vmem [thread:$0]  %s0, 448, %s21, [#allocation3]
    $region5: #{tpu_custom_call.1} parent=1 // pred_fallthru
      _
    // Predicated region
    $region6: #{tpu_custom_call.1} parent=1 // pred_check
      _
    $region7: #{tpu_custom_call.1} parent=1 // pred_check_branch
      %25 = sbr.rel (0) target = $region9
    $region8: #{tpu_custom_call.1} parent=1 // pred_region
      %s27 = ssub.s32 100352, 100352
      %28 = vsyncadd [#allocation6], %s27
      %s29 = sshll.u32 [#allocation5], 4
      %s30 = int_to_ptr.vmem [resolvable:$true] %s29
      %35 = dma.hbm_to_vmem [thread:$0]  %s1, 100352, %s30, [#allocation6], 1024, 1024, 64
    $region9: #{tpu_custom_call.1} parent=1 // pred_fallthru
      _
    // Predicated region
    $region10: #{tpu_custom_call.1} parent=1 // pred_check
      _
    $region11: #{tpu_custom_call.1} parent=1 // pred_check_branch
      %37 = sbr.rel (0) target = $region13
    $region12: #{tpu_custom_call.1} parent=1 // pred_region
      %s39 = ssub.s32 256, 256
      %40 = vsyncadd [#allocation6], %s39
      %s42 = sshll.u32 [#allocation7], 4
      %s43 = int_to_ptr.vmem [resolvable:$true] %s42
      %45 = dma.hbm_to_vmem [thread:$0]  %s2, 256, %s43, [#allocation6]
    $region13: #{tpu_custom_call.1} parent=1 // pred_fallthru
      _
    // Predicated region
    $region14: #{tpu_custom_call.1} parent=1 // pred_check
      _
    $region15: #{tpu_custom_call.1} parent=1 // pred_check_branch
      %47 = sbr.rel (0) target = $region17
    $region16: #{tpu_custom_call.1} parent=1 // pred_region
      %s49 = ssub.s32 16384, 16384
      %50 = vsyncadd [#allocation9], %s49
      %s51 = sshll.u32 [#allocation8], 4
      %s52 = int_to_ptr.vmem [resolvable:$true] %s51
      %57 = dma.hbm_to_vmem [thread:$0]  %s3, 16384, %s52, [#allocation9], 64, 64, 4
    $region17: #{tpu_custom_call.1} parent=1 // pred_fallthru
      _
    // Predicated region
    $region18: #{tpu_custom_call.1} parent=1 // pred_check
      _
    $region19: #{tpu_custom_call.1} parent=1 // pred_check_branch
      %59 = sbr.rel (0) target = $region21
    $region20: #{tpu_custom_call.1} parent=1 // pred_region
      %s61 = ssub.s32 16, 16
      %62 = vsyncadd [#allocation9], %s61
      %s64 = sshll.u32 [#allocation10], 4
      %s65 = int_to_ptr.vmem [resolvable:$true] %s64
      %67 = dma.hbm_to_vmem [thread:$0]  %s4, 16, %s65, [#allocation9]
    $region21: #{tpu_custom_call.1} parent=1 // pred_fallthru
      _
    // Predicated region
    $region22: #{tpu_custom_call.1} parent=1 // pred_check
      _
    $region23: #{tpu_custom_call.1} parent=1 // pred_check_branch
      %69 = sbr.rel (0) target = $region25
    $region24: #{tpu_custom_call.1} parent=1 // pred_region
      %70 = dma.done [#allocation3], 448
    $region25: #{tpu_custom_call.1} parent=1 // pred_fallthru
      _
    // Predicated region
    $region26: #{tpu_custom_call.1} parent=1 // pred_check
      _
    $region27: #{tpu_custom_call.1} parent=1 // pred_check_branch
      %72 = sbr.rel (0) target = $region29
    $region28: #{tpu_custom_call.1} parent=1 // pred_region
      %73 = dma.done [#allocation6], 100352
    $region29: #{tpu_custom_call.1} parent=1 // pred_fallthru
      _
    // Predicated region
    $region30: #{tpu_custom_call.1} parent=1 // pred_check
      _
    $region31: #{tpu_custom_call.1} parent=1 // pred_check_branch
      %75 = sbr.rel (0) target = $region33
    $region32: #{tpu_custom_call.1} parent=1 // pred_region
      %76 = dma.done [#allocation6], 256
    $region33: #{tpu_custom_call.1} parent=1 // pred_fallthru
      _
    // Predicated region
    $region34: #{tpu_custom_call.1} parent=1 // pred_check
      _
    $region35: #{tpu_custom_call.1} parent=1 // pred_check_branch
      %78 = sbr.rel (0) target = $region37
    $region36: #{tpu_custom_call.1} parent=1 // pred_region
      %79 = dma.done [#allocation9], 16384
    $region37: #{tpu_custom_call.1} parent=1 // pred_fallthru
      _
    // Predicated region
    $region38: #{tpu_custom_call.1} parent=1 // pred_check
      _
    $region39: #{tpu_custom_call.1} parent=1 // pred_check_branch
      %81 = sbr.rel (0) target = $region41
    $region40: #{tpu_custom_call.1} parent=1 // pred_region
      %82 = dma.done [#allocation9], 16
    $region41: #{tpu_custom_call.1} parent=1 // pred_fallthru
      _
    %v84 = vld [vmem:[#allocation2] sm:$0xff]
    %v85 = vld [vmem:[#allocation2 + $0x8] sm:$0xff]
    %v86 = vld [vmem:[#allocation2 + $0x10] sm:$0xff]
    %v87 = vld [vmem:[#allocation2 + $0x18] sm:$0xf]
    %v88 = vld [vmem:[#allocation5] sm:$0xff]
    %v89 = vld [vmem:[#allocation5 + $0x8] sm:$0xff]
    %v90 = vld [vmem:[#allocation5 + $0x10] sm:$0xff]
    %v91 = vld [vmem:[#allocation5 + $0x18] sm:$0xff]
    %v92 = vld [vmem:[#allocation5 + $0x20] sm:$0xff]
    %v93 = vld [vmem:[#allocation5 + $0x28] sm:$0xff]
    %v94 = vld [vmem:[#allocation5 + $0x30] sm:$0xff]
    %v95 = vld [vmem:[#allocation5 + $0x38] sm:$0xff]
    %v96 = vld [vmem:[#allocation5 + $0x40] sm:$0xff]
    %v97 = vld [vmem:[#allocation5 + $0x48] sm:$0xff]
    %v98 = vld [vmem:[#allocation5 + $0x50] sm:$0xff]
    %v99 = vld [vmem:[#allocation5 + $0x58] sm:$0xff]
    %v100 = vld [vmem:[#allocation5 + $0x60] sm:$0xff]
    %v101 = vld [vmem:[#allocation5 + $0x68] sm:$0xff]
    %v102 = vld [vmem:[#allocation5 + $0x70] sm:$0xff]
    %v103 = vld [vmem:[#allocation5 + $0x78] sm:$0xff]
    %v104 = vld [vmem:[#allocation5 + $0x80] sm:$0xff]
    %v105 = vld [vmem:[#allocation5 + $0x88] sm:$0xff]
    %v106 = vld [vmem:[#allocation5 + $0x90] sm:$0xff]
    %v107 = vld [vmem:[#allocation5 + $0x98] sm:$0xff]
    %v108 = vld [vmem:[#allocation5 + $0xa0] sm:$0xff]
    %v109 = vld [vmem:[#allocation5 + $0xa8] sm:$0xff]
    %v110 = vld [vmem:[#allocation5 + $0xb0] sm:$0xff]
    %v111 = vld [vmem:[#allocation5 + $0xb8] sm:$0xff]
    %v112 = vld [vmem:[#allocation5 + $0xc0] sm:$0xff]
    %v113 = vld [vmem:[#allocation5 + $0xc8] sm:$0xff]
    %v114 = vld [vmem:[#allocation5 + $0xd0] sm:$0xff]
    %v115 = vld [vmem:[#allocation5 + $0xd8] sm:$0xff]
    %v116 = vld [vmem:[#allocation5 + $0xe0] sm:$0xff]
    %v117 = vld [vmem:[#allocation5 + $0xe8] sm:$0xff]
    %v118 = vld [vmem:[#allocation5 + $0xf0] sm:$0xff]
    %v119 = vld [vmem:[#allocation5 + $0xf8] sm:$0xff]
    %v120 = vld [vmem:[#allocation5 + $0x100] sm:$0xff]
    %v121 = vld [vmem:[#allocation5 + $0x108] sm:$0xff]
    %v122 = vld [vmem:[#allocation5 + $0x110] sm:$0xff]
    %v123 = vld [vmem:[#allocation5 + $0x118] sm:$0xff]
    %v124 = vld [vmem:[#allocation5 + $0x120] sm:$0xff]
    %v125 = vld [vmem:[#allocation5 + $0x128] sm:$0xff]
    %v126 = vld [vmem:[#allocation5 + $0x130] sm:$0xff]
    %v127 = vld [vmem:[#allocation5 + $0x138] sm:$0xff]
    %v128 = vld [vmem:[#allocation5 + $0x140] sm:$0xff]
    %v129 = vld [vmem:[#allocation5 + $0x148] sm:$0xff]
    %v130 = vld [vmem:[#allocation5 + $0x150] sm:$0xff]
    %v131 = vld [vmem:[#allocation5 + $0x158] sm:$0xff]
    %v132 = vld [vmem:[#allocation5 + $0x160] sm:$0xff]
    %v133 = vld [vmem:[#allocation5 + $0x168] sm:$0xff]
    %v134 = vld [vmem:[#allocation5 + $0x170] sm:$0xff]
    %v135 = vld [vmem:[#allocation5 + $0x178] sm:$0xff]
    %v136 = vld [vmem:[#allocation5 + $0x180] sm:$0xff]
    %v137 = vld [vmem:[#allocation5 + $0x188] sm:$0xff]
    %v138 = vld [vmem:[#allocation5 + $0x190] sm:$0xff]
    %v139 = vld [vmem:[#allocation5 + $0x198] sm:$0xff]
    %v140 = vld [vmem:[#allocation5 + $0x1a0] sm:$0xff]
    %v141 = vld [vmem:[#allocation5 + $0x1a8] sm:$0xff]
    %v142 = vld [vmem:[#allocation5 + $0x1b0] sm:$0xff]
    %v143 = vld [vmem:[#allocation5 + $0x1b8] sm:$0xff]
    %v144 = vld [vmem:[#allocation5 + $0x1c0] sm:$0xff]
    %v145 = vld [vmem:[#allocation5 + $0x1c8] sm:$0xff]
    %v146 = vld [vmem:[#allocation5 + $0x1d0] sm:$0xff]
    %v147 = vld [vmem:[#allocation5 + $0x1d8] sm:$0xff]
    %v148 = vld [vmem:[#allocation5 + $0x1e0] sm:$0xff]
    %v149 = vld [vmem:[#allocation5 + $0x1e8] sm:$0xff]
    %v150 = vld [vmem:[#allocation5 + $0x1f0] sm:$0xff]
    %v151 = vld [vmem:[#allocation5 + $0x1f8] sm:$0xff]
    %v152 = vld [vmem:[#allocation5 + $0x200] sm:$0xff]
    %v153 = vld [vmem:[#allocation5 + $0x208] sm:$0xff]
    %v154 = vld [vmem:[#allocation5 + $0x210] sm:$0xff]
    %v155 = vld [vmem:[#allocation5 + $0x218] sm:$0xff]
    %v156 = vld [vmem:[#allocation5 + $0x220] sm:$0xff]
    %v157 = vld [vmem:[#allocation5 + $0x228] sm:$0xff]
    %v158 = vld [vmem:[#allocation5 + $0x230] sm:$0xff]
    %v159 = vld [vmem:[#allocation5 + $0x238] sm:$0xff]
    %v160 = vld [vmem:[#allocation5 + $0x240] sm:$0xff]
    %v161 = vld [vmem:[#allocation5 + $0x248] sm:$0xff]
    %v162 = vld [vmem:[#allocation5 + $0x250] sm:$0xff]
    %v163 = vld [vmem:[#allocation5 + $0x258] sm:$0xff]
    %v164 = vld [vmem:[#allocation5 + $0x260] sm:$0xff]
    %v165 = vld [vmem:[#allocation5 + $0x268] sm:$0xff]
    %v166 = vld [vmem:[#allocation5 + $0x270] sm:$0xff]
    %v167 = vld [vmem:[#allocation5 + $0x278] sm:$0xff]
    %v168 = vld [vmem:[#allocation5 + $0x280] sm:$0xff]
    %v169 = vld [vmem:[#allocation5 + $0x288] sm:$0xff]
    %v170 = vld [vmem:[#allocation5 + $0x290] sm:$0xff]
    %v171 = vld [vmem:[#allocation5 + $0x298] sm:$0xff]
    %v172 = vld [vmem:[#allocation5 + $0x2a0] sm:$0xff]
    %v173 = vld [vmem:[#allocation5 + $0x2a8] sm:$0xff]
    %v174 = vld [vmem:[#allocation5 + $0x2b0] sm:$0xff]
    %v175 = vld [vmem:[#allocation5 + $0x2b8] sm:$0xff]
    %v176 = vld [vmem:[#allocation5 + $0x2c0] sm:$0xff]
    %v177 = vld [vmem:[#allocation5 + $0x2c8] sm:$0xff]
    %v178 = vld [vmem:[#allocation5 + $0x2d0] sm:$0xff]
    %v179 = vld [vmem:[#allocation5 + $0x2d8] sm:$0xff]
    %v180 = vld [vmem:[#allocation5 + $0x2e0] sm:$0xff]
    %v181 = vld [vmem:[#allocation5 + $0x2e8] sm:$0xff]
    %v182 = vld [vmem:[#allocation5 + $0x2f0] sm:$0xff]
    %v183 = vld [vmem:[#allocation5 + $0x2f8] sm:$0xff]
    %v184 = vld [vmem:[#allocation5 + $0x300] sm:$0xff]
    %v185 = vld [vmem:[#allocation5 + $0x308] sm:$0xff]
    %v186 = vld [vmem:[#allocation5 + $0x310] sm:$0xff]
    %v187 = vld [vmem:[#allocation5 + $0x318] sm:$0xff]
    %v188 = vld [vmem:[#allocation5 + $0x320] sm:$0xff]
    %v189 = vld [vmem:[#allocation5 + $0x328] sm:$0xff]
    %v190 = vld [vmem:[#allocation5 + $0x330] sm:$0xff]
    %v191 = vld [vmem:[#allocation5 + $0x338] sm:$0xff]
    %v192 = vld [vmem:[#allocation5 + $0x340] sm:$0xff]
    %v193 = vld [vmem:[#allocation5 + $0x348] sm:$0xff]
    %v194 = vld [vmem:[#allocation5 + $0x350] sm:$0xff]
    %v195 = vld [vmem:[#allocation5 + $0x358] sm:$0xff]
    %v196 = vld [vmem:[#allocation5 + $0x360] sm:$0xff]
    %v197 = vld [vmem:[#allocation5 + $0x368] sm:$0xff]
    %v198 = vld [vmem:[#allocation5 + $0x370] sm:$0xff]
    %v199 = vld [vmem:[#allocation5 + $0x378] sm:$0xff]
    %v200 = vld [vmem:[#allocation5 + $0x380] sm:$0xff]
    %v201 = vld [vmem:[#allocation5 + $0x388] sm:$0xff]
    %v202 = vld [vmem:[#allocation5 + $0x390] sm:$0xff]
    %v203 = vld [vmem:[#allocation5 + $0x398] sm:$0xff]
    %v204 = vld [vmem:[#allocation5 + $0x3a0] sm:$0xff]
    %v205 = vld [vmem:[#allocation5 + $0x3a8] sm:$0xff]
    %v206 = vld [vmem:[#allocation5 + $0x3b0] sm:$0xff]
    %v207 = vld [vmem:[#allocation5 + $0x3b8] sm:$0xff]
    %v208 = vld [vmem:[#allocation5 + $0x3c0] sm:$0xff]
    %v209 = vld [vmem:[#allocation5 + $0x3c8] sm:$0xff]
    %v210 = vld [vmem:[#allocation5 + $0x3d0] sm:$0xff]
    %v211 = vld [vmem:[#allocation5 + $0x3d8] sm:$0xff]
    %v212 = vld [vmem:[#allocation5 + $0x3e0] sm:$0xff]
    %v213 = vld [vmem:[#allocation5 + $0x3e8] sm:$0xff]
    %v214 = vld [vmem:[#allocation5 + $0x3f0] sm:$0xff]
    %v215 = vld [vmem:[#allocation5 + $0x3f8] sm:$0xff]
    %v216 = vld [vmem:[#allocation5 + $0x400] sm:$0xff]
    %v217 = vld [vmem:[#allocation5 + $0x408] sm:$0xff]
    %v218 = vld [vmem:[#allocation5 + $0x410] sm:$0xff]
    %v219 = vld [vmem:[#allocation5 + $0x418] sm:$0xff]
    %v220 = vld [vmem:[#allocation5 + $0x420] sm:$0xff]
    %v221 = vld [vmem:[#allocation5 + $0x428] sm:$0xff]
    %v222 = vld [vmem:[#allocation5 + $0x430] sm:$0xff]
    %v223 = vld [vmem:[#allocation5 + $0x438] sm:$0xff]
    %v224 = vld [vmem:[#allocation5 + $0x440] sm:$0xff]
    %v225 = vld [vmem:[#allocation5 + $0x448] sm:$0xff]
    %v226 = vld [vmem:[#allocation5 + $0x450] sm:$0xff]
    %v227 = vld [vmem:[#allocation5 + $0x458] sm:$0xff]
    %v228 = vld [vmem:[#allocation5 + $0x460] sm:$0xff]
    %v229 = vld [vmem:[#allocation5 + $0x468] sm:$0xff]
    %v230 = vld [vmem:[#allocation5 + $0x470] sm:$0xff]
    %v231 = vld [vmem:[#allocation5 + $0x478] sm:$0xff]
    %v232 = vld [vmem:[#allocation5 + $0x480] sm:$0xff]
    %v233 = vld [vmem:[#allocation5 + $0x488] sm:$0xff]
    %v234 = vld [vmem:[#allocation5 + $0x490] sm:$0xff]
    %v235 = vld [vmem:[#allocation5 + $0x498] sm:$0xff]
    %v236 = vld [vmem:[#allocation5 + $0x4a0] sm:$0xff]
    %v237 = vld [vmem:[#allocation5 + $0x4a8] sm:$0xff]
    %v238 = vld [vmem:[#allocation5 + $0x4b0] sm:$0xff]
    %v239 = vld [vmem:[#allocation5 + $0x4b8] sm:$0xff]
    %v240 = vld [vmem:[#allocation5 + $0x4c0] sm:$0xff]
    %v241 = vld [vmem:[#allocation5 + $0x4c8] sm:$0xff]
    %v242 = vld [vmem:[#allocation5 + $0x4d0] sm:$0xff]
    %v243 = vld [vmem:[#allocation5 + $0x4d8] sm:$0xff]
    %v244 = vld [vmem:[#allocation5 + $0x4e0] sm:$0xff]
    %v245 = vld [vmem:[#allocation5 + $0x4e8] sm:$0xff]
    %v246 = vld [vmem:[#allocation5 + $0x4f0] sm:$0xff]
    %v247 = vld [vmem:[#allocation5 + $0x4f8] sm:$0xff]
    %v248 = vld [vmem:[#allocation5 + $0x500] sm:$0xff]
    %v249 = vld [vmem:[#allocation5 + $0x508] sm:$0xff]
    %v250 = vld [vmem:[#allocation5 + $0x510] sm:$0xff]
    %v251 = vld [vmem:[#allocation5 + $0x518] sm:$0xff]
    %v252 = vld [vmem:[#allocation5 + $0x520] sm:$0xff]
    %v253 = vld [vmem:[#allocation5 + $0x528] sm:$0xff]
    %v254 = vld [vmem:[#allocation5 + $0x530] sm:$0xff]
    %v255 = vld [vmem:[#allocation5 + $0x538] sm:$0xff]
    %v256 = vld [vmem:[#allocation5 + $0x540] sm:$0xff]
    %v257 = vld [vmem:[#allocation5 + $0x548] sm:$0xff]
    %v258 = vld [vmem:[#allocation5 + $0x550] sm:$0xff]
    %v259 = vld [vmem:[#allocation5 + $0x558] sm:$0xff]
    %v260 = vld [vmem:[#allocation5 + $0x560] sm:$0xff]
    %v261 = vld [vmem:[#allocation5 + $0x568] sm:$0xff]
    %v262 = vld [vmem:[#allocation5 + $0x570] sm:$0xff]
    %v263 = vld [vmem:[#allocation5 + $0x578] sm:$0xff]
    %v264 = vld [vmem:[#allocation5 + $0x580] sm:$0xff]
    %v265 = vld [vmem:[#allocation5 + $0x588] sm:$0xff]
    %v266 = vld [vmem:[#allocation5 + $0x590] sm:$0xff]
    %v267 = vld [vmem:[#allocation5 + $0x598] sm:$0xff]
    %v268 = vld [vmem:[#allocation5 + $0x5a0] sm:$0xff]
    %v269 = vld [vmem:[#allocation5 + $0x5a8] sm:$0xff]
    %v270 = vld [vmem:[#allocation5 + $0x5b0] sm:$0xff]
    %v271 = vld [vmem:[#allocation5 + $0x5b8] sm:$0xff]
    %v272 = vld [vmem:[#allocation5 + $0x5c0] sm:$0xff]
    %v273 = vld [vmem:[#allocation5 + $0x5c8] sm:$0xff]
    %v274 = vld [vmem:[#allocation5 + $0x5d0] sm:$0xff]
    %v275 = vld [vmem:[#allocation5 + $0x5d8] sm:$0xff]
    %v276 = vld [vmem:[#allocation5 + $0x5e0] sm:$0xff]
    %v277 = vld [vmem:[#allocation5 + $0x5e8] sm:$0xff]
    %v278 = vld [vmem:[#allocation5 + $0x5f0] sm:$0xff]
    %v279 = vld [vmem:[#allocation5 + $0x5f8] sm:$0xff]
    %v280 = vld [vmem:[#allocation5 + $0x600] sm:$0xff]
    %v281 = vld [vmem:[#allocation5 + $0x608] sm:$0xff]
    %v282 = vld [vmem:[#allocation5 + $0x610] sm:$0xff]
    %v283 = vld [vmem:[#allocation5 + $0x618] sm:$0xff]
    %v284 = vld [vmem:[#allocation5 + $0x620] sm:$0xff]
    %v285 = vld [vmem:[#allocation5 + $0x628] sm:$0xff]
    %v286 = vld [vmem:[#allocation5 + $0x630] sm:$0xff]
    %v287 = vld [vmem:[#allocation5 + $0x638] sm:$0xff]
    %v288 = vld [vmem:[#allocation5 + $0x640] sm:$0xff]
    %v289 = vld [vmem:[#allocation5 + $0x648] sm:$0xff]
    %v290 = vld [vmem:[#allocation5 + $0x650] sm:$0xff]
    %v291 = vld [vmem:[#allocation5 + $0x658] sm:$0xff]
    %v292 = vld [vmem:[#allocation5 + $0x660] sm:$0xff]
    %v293 = vld [vmem:[#allocation5 + $0x668] sm:$0xff]
    %v294 = vld [vmem:[#allocation5 + $0x670] sm:$0xff]
    %v295 = vld [vmem:[#allocation5 + $0x678] sm:$0xff]
    %v296 = vld [vmem:[#allocation5 + $0x680] sm:$0xff]
    %v297 = vld [vmem:[#allocation5 + $0x688] sm:$0xff]
    %v298 = vld [vmem:[#allocation5 + $0x690] sm:$0xff]
    %v299 = vld [vmem:[#allocation5 + $0x698] sm:$0xff]
    %v300 = vld [vmem:[#allocation5 + $0x6a0] sm:$0xff]
    %v301 = vld [vmem:[#allocation5 + $0x6a8] sm:$0xff]
    %v302 = vld [vmem:[#allocation5 + $0x6b0] sm:$0xff]
    %v303 = vld [vmem:[#allocation5 + $0x6b8] sm:$0xff]
    %v304 = vld [vmem:[#allocation5 + $0x6c0] sm:$0xff]
    %v305 = vld [vmem:[#allocation5 + $0x6c8] sm:$0xff]
    %v306 = vld [vmem:[#allocation5 + $0x6d0] sm:$0xff]
    %v307 = vld [vmem:[#allocation5 + $0x6d8] sm:$0xff]
    %v308 = vld [vmem:[#allocation5 + $0x6e0] sm:$0xff]
    %v309 = vld [vmem:[#allocation5 + $0x6e8] sm:$0xff]
    %v310 = vld [vmem:[#allocation5 + $0x6f0] sm:$0xff]
    %v311 = vld [vmem:[#allocation5 + $0x6f8] sm:$0xff]
    %v312 = vld [vmem:[#allocation5 + $0x700] sm:$0xff]
    %v313 = vld [vmem:[#allocation5 + $0x708] sm:$0xff]
    %v314 = vld [vmem:[#allocation5 + $0x710] sm:$0xff]
    %v315 = vld [vmem:[#allocation5 + $0x718] sm:$0xff]
    %v316 = vld [vmem:[#allocation5 + $0x720] sm:$0xff]
    %v317 = vld [vmem:[#allocation5 + $0x728] sm:$0xff]
    %v318 = vld [vmem:[#allocation5 + $0x730] sm:$0xff]
    %v319 = vld [vmem:[#allocation5 + $0x738] sm:$0xff]
    %v320 = vld [vmem:[#allocation5 + $0x740] sm:$0xff]
    %v321 = vld [vmem:[#allocation5 + $0x748] sm:$0xff]
    %v322 = vld [vmem:[#allocation5 + $0x750] sm:$0xff]
    %v323 = vld [vmem:[#allocation5 + $0x758] sm:$0xff]
    %v324 = vld [vmem:[#allocation5 + $0x760] sm:$0xff]
    %v325 = vld [vmem:[#allocation5 + $0x768] sm:$0xff]
    %v326 = vld [vmem:[#allocation5 + $0x770] sm:$0xff]
    %v327 = vld [vmem:[#allocation5 + $0x778] sm:$0xff]
    %v328 = vld [vmem:[#allocation5 + $0x780] sm:$0xff]
    %v329 = vld [vmem:[#allocation5 + $0x788] sm:$0xff]
    %v330 = vld [vmem:[#allocation5 + $0x790] sm:$0xff]
    %v331 = vld [vmem:[#allocation5 + $0x798] sm:$0xff]
    %v332 = vld [vmem:[#allocation5 + $0x7a0] sm:$0xff]
    %v333 = vld [vmem:[#allocation5 + $0x7a8] sm:$0xff]
    %v334 = vld [vmem:[#allocation5 + $0x7b0] sm:$0xff]
    %v335 = vld [vmem:[#allocation5 + $0x7b8] sm:$0xff]
    %v336 = vld [vmem:[#allocation5 + $0x7c0] sm:$0xff]
    %v337 = vld [vmem:[#allocation5 + $0x7c8] sm:$0xff]
    %v338 = vld [vmem:[#allocation5 + $0x7d0] sm:$0xff]
    %v339 = vld [vmem:[#allocation5 + $0x7d8] sm:$0xff]
    %v340 = vld [vmem:[#allocation5 + $0x7e0] sm:$0xff]
    %v341 = vld [vmem:[#allocation5 + $0x7e8] sm:$0xff]
    %v342 = vld [vmem:[#allocation5 + $0x7f0] sm:$0xff]
    %v343 = vld [vmem:[#allocation5 + $0x7f8] sm:$0xff]
    %v344 = vld [vmem:[#allocation5 + $0x800] sm:$0xff]
    %v345 = vld [vmem:[#allocation5 + $0x808] sm:$0xff]
    %v346 = vld [vmem:[#allocation5 + $0x810] sm:$0xff]
    %v347 = vld [vmem:[#allocation5 + $0x818] sm:$0xff]
    %v348 = vld [vmem:[#allocation5 + $0x820] sm:$0xff]
    %v349 = vld [vmem:[#allocation5 + $0x828] sm:$0xff]
    %v350 = vld [vmem:[#allocation5 + $0x830] sm:$0xff]
    %v351 = vld [vmem:[#allocation5 + $0x838] sm:$0xff]
    %v352 = vld [vmem:[#allocation5 + $0x840] sm:$0xff]
    %v353 = vld [vmem:[#allocation5 + $0x848] sm:$0xff]
    %v354 = vld [vmem:[#allocation5 + $0x850] sm:$0xff]
    %v355 = vld [vmem:[#allocation5 + $0x858] sm:$0xff]
    %v356 = vld [vmem:[#allocation5 + $0x860] sm:$0xff]
    %v357 = vld [vmem:[#allocation5 + $0x868] sm:$0xff]
    %v358 = vld [vmem:[#allocation5 + $0x870] sm:$0xff]
    %v359 = vld [vmem:[#allocation5 + $0x878] sm:$0xff]
    %v360 = vld [vmem:[#allocation5 + $0x880] sm:$0xff]
    %v361 = vld [vmem:[#allocation5 + $0x888] sm:$0xff]
    %v362 = vld [vmem:[#allocation5 + $0x890] sm:$0xff]
    %v363 = vld [vmem:[#allocation5 + $0x898] sm:$0xff]
    %v364 = vld [vmem:[#allocation5 + $0x8a0] sm:$0xff]
    %v365 = vld [vmem:[#allocation5 + $0x8a8] sm:$0xff]
    %v366 = vld [vmem:[#allocation5 + $0x8b0] sm:$0xff]
    %v367 = vld [vmem:[#allocation5 + $0x8b8] sm:$0xff]
    %v368 = vld [vmem:[#allocation5 + $0x8c0] sm:$0xff]
    %v369 = vld [vmem:[#allocation5 + $0x8c8] sm:$0xff]
    %v370 = vld [vmem:[#allocation5 + $0x8d0] sm:$0xff]
    %v371 = vld [vmem:[#allocation5 + $0x8d8] sm:$0xff]
    %v372 = vld [vmem:[#allocation5 + $0x8e0] sm:$0xff]
    %v373 = vld [vmem:[#allocation5 + $0x8e8] sm:$0xff]
    %v374 = vld [vmem:[#allocation5 + $0x8f0] sm:$0xff]
    %v375 = vld [vmem:[#allocation5 + $0x8f8] sm:$0xff]
    %v376 = vld [vmem:[#allocation5 + $0x900] sm:$0xff]
    %v377 = vld [vmem:[#allocation5 + $0x908] sm:$0xff]
    %v378 = vld [vmem:[#allocation5 + $0x910] sm:$0xff]
    %v379 = vld [vmem:[#allocation5 + $0x918] sm:$0xff]
    %v380 = vld [vmem:[#allocation5 + $0x920] sm:$0xff]
    %v381 = vld [vmem:[#allocation5 + $0x928] sm:$0xff]
    %v382 = vld [vmem:[#allocation5 + $0x930] sm:$0xff]
    %v383 = vld [vmem:[#allocation5 + $0x938] sm:$0xff]
    %v384 = vld [vmem:[#allocation5 + $0x940] sm:$0xff]
    %v385 = vld [vmem:[#allocation5 + $0x948] sm:$0xff]
    %v386 = vld [vmem:[#allocation5 + $0x950] sm:$0xff]
    %v387 = vld [vmem:[#allocation5 + $0x958] sm:$0xff]
    %v388 = vld [vmem:[#allocation5 + $0x960] sm:$0xff]
    %v389 = vld [vmem:[#allocation5 + $0x968] sm:$0xff]
    %v390 = vld [vmem:[#allocation5 + $0x970] sm:$0xff]
    %v391 = vld [vmem:[#allocation5 + $0x978] sm:$0xff]
    %v392 = vld [vmem:[#allocation5 + $0x980] sm:$0xff]
    %v393 = vld [vmem:[#allocation5 + $0x988] sm:$0xff]
    %v394 = vld [vmem:[#allocation5 + $0x990] sm:$0xff]
    %v395 = vld [vmem:[#allocation5 + $0x998] sm:$0xff]
    %v396 = vld [vmem:[#allocation5 + $0x9a0] sm:$0xff]
    %v397 = vld [vmem:[#allocation5 + $0x9a8] sm:$0xff]
    %v398 = vld [vmem:[#allocation5 + $0x9b0] sm:$0xff]
    %v399 = vld [vmem:[#allocation5 + $0x9b8] sm:$0xff]
    %v400 = vld [vmem:[#allocation5 + $0x9c0] sm:$0xff]
    %v401 = vld [vmem:[#allocation5 + $0x9c8] sm:$0xff]
    %v402 = vld [vmem:[#allocation5 + $0x9d0] sm:$0xff]
    %v403 = vld [vmem:[#allocation5 + $0x9d8] sm:$0xff]
    %v404 = vld [vmem:[#allocation5 + $0x9e0] sm:$0xff]
    %v405 = vld [vmem:[#allocation5 + $0x9e8] sm:$0xff]
    %v406 = vld [vmem:[#allocation5 + $0x9f0] sm:$0xff]
    %v407 = vld [vmem:[#allocation5 + $0x9f8] sm:$0xff]
    %v408 = vld [vmem:[#allocation5 + $0xa00] sm:$0xff]
    %v409 = vld [vmem:[#allocation5 + $0xa08] sm:$0xff]
    %v410 = vld [vmem:[#allocation5 + $0xa10] sm:$0xff]
    %v411 = vld [vmem:[#allocation5 + $0xa18] sm:$0xff]
    %v412 = vld [vmem:[#allocation5 + $0xa20] sm:$0xff]
    %v413 = vld [vmem:[#allocation5 + $0xa28] sm:$0xff]
    %v414 = vld [vmem:[#allocation5 + $0xa30] sm:$0xff]
    %v415 = vld [vmem:[#allocation5 + $0xa38] sm:$0xff]
    %v416 = vld [vmem:[#allocation5 + $0xa40] sm:$0xff]
    %v417 = vld [vmem:[#allocation5 + $0xa48] sm:$0xff]
    %v418 = vld [vmem:[#allocation5 + $0xa50] sm:$0xff]
    %v419 = vld [vmem:[#allocation5 + $0xa58] sm:$0xff]
    %v420 = vld [vmem:[#allocation5 + $0xa60] sm:$0xff]
    %v421 = vld [vmem:[#allocation5 + $0xa68] sm:$0xff]
    %v422 = vld [vmem:[#allocation5 + $0xa70] sm:$0xff]
    %v423 = vld [vmem:[#allocation5 + $0xa78] sm:$0xff]
    %v424 = vld [vmem:[#allocation5 + $0xa80] sm:$0xff]
    %v425 = vld [vmem:[#allocation5 + $0xa88] sm:$0xff]
    %v426 = vld [vmem:[#allocation5 + $0xa90] sm:$0xff]
    %v427 = vld [vmem:[#allocation5 + $0xa98] sm:$0xff]
    %v428 = vld [vmem:[#allocation5 + $0xaa0] sm:$0xff]
    %v429 = vld [vmem:[#allocation5 + $0xaa8] sm:$0xff]
    %v430 = vld [vmem:[#allocation5 + $0xab0] sm:$0xff]
    %v431 = vld [vmem:[#allocation5 + $0xab8] sm:$0xff]
    %v432 = vld [vmem:[#allocation5 + $0xac0] sm:$0xff]
    %v433 = vld [vmem:[#allocation5 + $0xac8] sm:$0xff]
    %v434 = vld [vmem:[#allocation5 + $0xad0] sm:$0xff]
    %v435 = vld [vmem:[#allocation5 + $0xad8] sm:$0xff]
    %v436 = vld [vmem:[#allocation5 + $0xae0] sm:$0xff]
    %v437 = vld [vmem:[#allocation5 + $0xae8] sm:$0xff]
    %v438 = vld [vmem:[#allocation5 + $0xaf0] sm:$0xff]
    %v439 = vld [vmem:[#allocation5 + $0xaf8] sm:$0xff]
    %v440 = vld [vmem:[#allocation5 + $0xb00] sm:$0xff]
    %v441 = vld [vmem:[#allocation5 + $0xb08] sm:$0xff]
    %v442 = vld [vmem:[#allocation5 + $0xb10] sm:$0xff]
    %v443 = vld [vmem:[#allocation5 + $0xb18] sm:$0xff]
    %v444 = vld [vmem:[#allocation5 + $0xb20] sm:$0xff]
    %v445 = vld [vmem:[#allocation5 + $0xb28] sm:$0xff]
    %v446 = vld [vmem:[#allocation5 + $0xb30] sm:$0xff]
    %v447 = vld [vmem:[#allocation5 + $0xb38] sm:$0xff]
    %v448 = vld [vmem:[#allocation5 + $0xb40] sm:$0xff]
    %v449 = vld [vmem:[#allocation5 + $0xb48] sm:$0xff]
    %v450 = vld [vmem:[#allocation5 + $0xb50] sm:$0xff]
    %v451 = vld [vmem:[#allocation5 + $0xb58] sm:$0xff]
    %v452 = vld [vmem:[#allocation5 + $0xb60] sm:$0xff]
    %v453 = vld [vmem:[#allocation5 + $0xb68] sm:$0xff]
    %v454 = vld [vmem:[#allocation5 + $0xb70] sm:$0xff]
    %v455 = vld [vmem:[#allocation5 + $0xb78] sm:$0xff]
    %v456 = vld [vmem:[#allocation5 + $0xb80] sm:$0xff]
    %v457 = vld [vmem:[#allocation5 + $0xb88] sm:$0xff]
    %v458 = vld [vmem:[#allocation5 + $0xb90] sm:$0xff]
    %v459 = vld [vmem:[#allocation5 + $0xb98] sm:$0xff]
    %v460 = vld [vmem:[#allocation5 + $0xba0] sm:$0xff]
    %v461 = vld [vmem:[#allocation5 + $0xba8] sm:$0xff]
    %v462 = vld [vmem:[#allocation5 + $0xbb0] sm:$0xff]
    %v463 = vld [vmem:[#allocation5 + $0xbb8] sm:$0xff]
    %v464 = vld [vmem:[#allocation5 + $0xbc0] sm:$0xff]
    %v465 = vld [vmem:[#allocation5 + $0xbc8] sm:$0xff]
    %v466 = vld [vmem:[#allocation5 + $0xbd0] sm:$0xff]
    %v467 = vld [vmem:[#allocation5 + $0xbd8] sm:$0xff]
    %v468 = vld [vmem:[#allocation5 + $0xbe0] sm:$0xff]
    %v469 = vld [vmem:[#allocation5 + $0xbe8] sm:$0xff]
    %v470 = vld [vmem:[#allocation5 + $0xbf0] sm:$0xff]
    %v471 = vld [vmem:[#allocation5 + $0xbf8] sm:$0xff]
    %v472 = vld [vmem:[#allocation5 + $0xc00] sm:$0xff]
    %v473 = vld [vmem:[#allocation5 + $0xc08] sm:$0xff]
    %v474 = vld [vmem:[#allocation5 + $0xc10] sm:$0xff]
    %v475 = vld [vmem:[#allocation5 + $0xc18] sm:$0xff]
    %v476 = vld [vmem:[#allocation5 + $0xc20] sm:$0xff]
    %v477 = vld [vmem:[#allocation5 + $0xc28] sm:$0xff]
    %v478 = vld [vmem:[#allocation5 + $0xc30] sm:$0xff]
    %v479 = vld [vmem:[#allocation5 + $0xc38] sm:$0xff]
    %v480 = vld [vmem:[#allocation5 + $0xc40] sm:$0xff]
    %v481 = vld [vmem:[#allocation5 + $0xc48] sm:$0xff]
    %v482 = vld [vmem:[#allocation5 + $0xc50] sm:$0xff]
    %v483 = vld [vmem:[#allocation5 + $0xc58] sm:$0xff]
    %v484 = vld [vmem:[#allocation5 + $0xc60] sm:$0xff]
    %v485 = vld [vmem:[#allocation5 + $0xc68] sm:$0xff]
    %v486 = vld [vmem:[#allocation5 + $0xc70] sm:$0xff]
    %v487 = vld [vmem:[#allocation5 + $0xc78] sm:$0xff]
    %v488 = vld [vmem:[#allocation5 + $0xc80] sm:$0xff]
    %v489 = vld [vmem:[#allocation5 + $0xc88] sm:$0xff]
    %v490 = vld [vmem:[#allocation5 + $0xc90] sm:$0xff]
    %v491 = vld [vmem:[#allocation5 + $0xc98] sm:$0xff]
    %v492 = vld [vmem:[#allocation5 + $0xca0] sm:$0xff]
    %v493 = vld [vmem:[#allocation5 + $0xca8] sm:$0xff]
    %v494 = vld [vmem:[#allocation5 + $0xcb0] sm:$0xff]
    %v495 = vld [vmem:[#allocation5 + $0xcb8] sm:$0xff]
    %v496 = vld [vmem:[#allocation5 + $0xcc0] sm:$0xff]
    %v497 = vld [vmem:[#allocation5 + $0xcc8] sm:$0xff]
    %v498 = vld [vmem:[#allocation5 + $0xcd0] sm:$0xff]
    %v499 = vld [vmem:[#allocation5 + $0xcd8] sm:$0xff]
    %v500 = vld [vmem:[#allocation5 + $0xce0] sm:$0xff]
    %v501 = vld [vmem:[#allocation5 + $0xce8] sm:$0xff]
    %v502 = vld [vmem:[#allocation5 + $0xcf0] sm:$0xff]
    %v503 = vld [vmem:[#allocation5 + $0xcf8] sm:$0xff]
    %v504 = vld [vmem:[#allocation5 + $0xd00] sm:$0xff]
    %v505 = vld [vmem:[#allocation5 + $0xd08] sm:$0xff]
    %v506 = vld [vmem:[#allocation5 + $0xd10] sm:$0xff]
    %v507 = vld [vmem:[#allocation5 + $0xd18] sm:$0xff]
    %v508 = vld [vmem:[#allocation5 + $0xd20] sm:$0xff]
    %v509 = vld [vmem:[#allocation5 + $0xd28] sm:$0xff]
    %v510 = vld [vmem:[#allocation5 + $0xd30] sm:$0xff]
    %v511 = vld [vmem:[#allocation5 + $0xd38] sm:$0xff]
    %v512 = vld [vmem:[#allocation5 + $0xd40] sm:$0xff]
    %v513 = vld [vmem:[#allocation5 + $0xd48] sm:$0xff]
    %v514 = vld [vmem:[#allocation5 + $0xd50] sm:$0xff]
    %v515 = vld [vmem:[#allocation5 + $0xd58] sm:$0xff]
    %v516 = vld [vmem:[#allocation5 + $0xd60] sm:$0xff]
    %v517 = vld [vmem:[#allocation5 + $0xd68] sm:$0xff]
    %v518 = vld [vmem:[#allocation5 + $0xd70] sm:$0xff]
    %v519 = vld [vmem:[#allocation5 + $0xd78] sm:$0xff]
    %v520 = vld [vmem:[#allocation5 + $0xd80] sm:$0xff]
    %v521 = vld [vmem:[#allocation5 + $0xd88] sm:$0xff]
    %v522 = vld [vmem:[#allocation5 + $0xd90] sm:$0xff]
    %v523 = vld [vmem:[#allocation5 + $0xd98] sm:$0xff]
    %v524 = vld [vmem:[#allocation5 + $0xda0] sm:$0xff]
    %v525 = vld [vmem:[#allocation5 + $0xda8] sm:$0xff]
    %v526 = vld [vmem:[#allocation5 + $0xdb0] sm:$0xff]
    %v527 = vld [vmem:[#allocation5 + $0xdb8] sm:$0xff]
    %v528 = vld [vmem:[#allocation5 + $0xdc0] sm:$0xff]
    %v529 = vld [vmem:[#allocation5 + $0xdc8] sm:$0xff]
    %v530 = vld [vmem:[#allocation5 + $0xdd0] sm:$0xff]
    %v531 = vld [vmem:[#allocation5 + $0xdd8] sm:$0xff]
    %v532 = vld [vmem:[#allocation5 + $0xde0] sm:$0xff]
    %v533 = vld [vmem:[#allocation5 + $0xde8] sm:$0xff]
    %v534 = vld [vmem:[#allocation5 + $0xdf0] sm:$0xff]
    %v535 = vld [vmem:[#allocation5 + $0xdf8] sm:$0xff]
    %v536 = vld [vmem:[#allocation5 + $0xe00] sm:$0xff]
    %v537 = vld [vmem:[#allocation5 + $0xe08] sm:$0xff]
    %v538 = vld [vmem:[#allocation5 + $0xe10] sm:$0xff]
    %v539 = vld [vmem:[#allocation5 + $0xe18] sm:$0xff]
    %v540 = vld [vmem:[#allocation5 + $0xe20] sm:$0xff]
    %v541 = vld [vmem:[#allocation5 + $0xe28] sm:$0xff]
    %v542 = vld [vmem:[#allocation5 + $0xe30] sm:$0xff]
    %v543 = vld [vmem:[#allocation5 + $0xe38] sm:$0xff]
    %v544 = vld [vmem:[#allocation5 + $0xe40] sm:$0xff]
    %v545 = vld [vmem:[#allocation5 + $0xe48] sm:$0xff]
    %v546 = vld [vmem:[#allocation5 + $0xe50] sm:$0xff]
    %v547 = vld [vmem:[#allocation5 + $0xe58] sm:$0xff]
    %v548 = vld [vmem:[#allocation5 + $0xe60] sm:$0xff]
    %v549 = vld [vmem:[#allocation5 + $0xe68] sm:$0xff]
    %v550 = vld [vmem:[#allocation5 + $0xe70] sm:$0xff]
    %v551 = vld [vmem:[#allocation5 + $0xe78] sm:$0xff]
    %v552 = vld [vmem:[#allocation5 + $0xe80] sm:$0xff]
    %v553 = vld [vmem:[#allocation5 + $0xe88] sm:$0xff]
    %v554 = vld [vmem:[#allocation5 + $0xe90] sm:$0xff]
    %v555 = vld [vmem:[#allocation5 + $0xe98] sm:$0xff]
    %v556 = vld [vmem:[#allocation5 + $0xea0] sm:$0xff]
    %v557 = vld [vmem:[#allocation5 + $0xea8] sm:$0xff]
    %v558 = vld [vmem:[#allocation5 + $0xeb0] sm:$0xff]
    %v559 = vld [vmem:[#allocation5 + $0xeb8] sm:$0xff]
    %v560 = vld [vmem:[#allocation5 + $0xec0] sm:$0xff]
    %v561 = vld [vmem:[#allocation5 + $0xec8] sm:$0xff]
    %v562 = vld [vmem:[#allocation5 + $0xed0] sm:$0xff]
    %v563 = vld [vmem:[#allocation5 + $0xed8] sm:$0xff]
    %v564 = vld [vmem:[#allocation5 + $0xee0] sm:$0xff]
    %v565 = vld [vmem:[#allocation5 + $0xee8] sm:$0xff]
    %v566 = vld [vmem:[#allocation5 + $0xef0] sm:$0xff]
    %v567 = vld [vmem:[#allocation5 + $0xef8] sm:$0xff]
    %v568 = vld [vmem:[#allocation5 + $0xf00] sm:$0xff]
    %v569 = vld [vmem:[#allocation5 + $0xf08] sm:$0xff]
    %v570 = vld [vmem:[#allocation5 + $0xf10] sm:$0xff]
    %v571 = vld [vmem:[#allocation5 + $0xf18] sm:$0xff]
    %v572 = vld [vmem:[#allocation5 + $0xf20] sm:$0xff]
    %v573 = vld [vmem:[#allocation5 + $0xf28] sm:$0xff]
    %v574 = vld [vmem:[#allocation5 + $0xf30] sm:$0xff]
    %v575 = vld [vmem:[#allocation5 + $0xf38] sm:$0xff]
    %v576 = vld [vmem:[#allocation5 + $0xf40] sm:$0xff]
    %v577 = vld [vmem:[#allocation5 + $0xf48] sm:$0xff]
    %v578 = vld [vmem:[#allocation5 + $0xf50] sm:$0xff]
    %v579 = vld [vmem:[#allocation5 + $0xf58] sm:$0xff]
    %v580 = vld [vmem:[#allocation5 + $0xf60] sm:$0xff]
    %v581 = vld [vmem:[#allocation5 + $0xf68] sm:$0xff]
    %v582 = vld [vmem:[#allocation5 + $0xf70] sm:$0xff]
    %v583 = vld [vmem:[#allocation5 + $0xf78] sm:$0xff]
    %v584 = vld [vmem:[#allocation5 + $0xf80] sm:$0xff]
    %v585 = vld [vmem:[#allocation5 + $0xf88] sm:$0xff]
    %v586 = vld [vmem:[#allocation5 + $0xf90] sm:$0xff]
    %v587 = vld [vmem:[#allocation5 + $0xf98] sm:$0xff]
    %v588 = vld [vmem:[#allocation5 + $0xfa0] sm:$0xff]
    %v589 = vld [vmem:[#allocation5 + $0xfa8] sm:$0xff]
    %v590 = vld [vmem:[#allocation5 + $0xfb0] sm:$0xff]
    %v591 = vld [vmem:[#allocation5 + $0xfb8] sm:$0xff]
    %v592 = vld [vmem:[#allocation5 + $0xfc0] sm:$0xff]
    %v593 = vld [vmem:[#allocation5 + $0xfc8] sm:$0xff]
    %v594 = vld [vmem:[#allocation5 + $0xfd0] sm:$0xff]
    %v595 = vld [vmem:[#allocation5 + $0xfd8] sm:$0xff]
    %v596 = vld [vmem:[#allocation5 + $0xfe0] sm:$0xff]
    %v597 = vld [vmem:[#allocation5 + $0xfe8] sm:$0xff]
    %v598 = vld [vmem:[#allocation5 + $0xff0] sm:$0xff]
    %v599 = vld [vmem:[#allocation5 + $0xff8] sm:$0xff]
    %v600 = vld [vmem:[#allocation5 + $0x1000] sm:$0xff]
    %v601 = vld [vmem:[#allocation5 + $0x1008] sm:$0xff]
    %v602 = vld [vmem:[#allocation5 + $0x1010] sm:$0xff]
    %v603 = vld [vmem:[#allocation5 + $0x1018] sm:$0xff]
    %v604 = vld [vmem:[#allocation5 + $0x1020] sm:$0xff]
    %v605 = vld [vmem:[#allocation5 + $0x1028] sm:$0xff]
    %v606 = vld [vmem:[#allocation5 + $0x1030] sm:$0xff]
    %v607 = vld [vmem:[#allocation5 + $0x1038] sm:$0xff]
    %v608 = vld [vmem:[#allocation5 + $0x1040] sm:$0xff]
    %v609 = vld [vmem:[#allocation5 + $0x1048] sm:$0xff]
    %v610 = vld [vmem:[#allocation5 + $0x1050] sm:$0xff]
    %v611 = vld [vmem:[#allocation5 + $0x1058] sm:$0xff]
    %v612 = vld [vmem:[#allocation5 + $0x1060] sm:$0xff]
    %v613 = vld [vmem:[#allocation5 + $0x1068] sm:$0xff]
    %v614 = vld [vmem:[#allocation5 + $0x1070] sm:$0xff]
    %v615 = vld [vmem:[#allocation5 + $0x1078] sm:$0xff]
    %v616 = vld [vmem:[#allocation5 + $0x1080] sm:$0xff]
    %v617 = vld [vmem:[#allocation5 + $0x1088] sm:$0xff]
    %v618 = vld [vmem:[#allocation5 + $0x1090] sm:$0xff]
    %v619 = vld [vmem:[#allocation5 + $0x1098] sm:$0xff]
    %v620 = vld [vmem:[#allocation5 + $0x10a0] sm:$0xff]
    %v621 = vld [vmem:[#allocation5 + $0x10a8] sm:$0xff]
    %v622 = vld [vmem:[#allocation5 + $0x10b0] sm:$0xff]
    %v623 = vld [vmem:[#allocation5 + $0x10b8] sm:$0xff]
    %v624 = vld [vmem:[#allocation5 + $0x10c0] sm:$0xff]
    %v625 = vld [vmem:[#allocation5 + $0x10c8] sm:$0xff]
    %v626 = vld [vmem:[#allocation5 + $0x10d0] sm:$0xff]
    %v627 = vld [vmem:[#allocation5 + $0x10d8] sm:$0xff]
    %v628 = vld [vmem:[#allocation5 + $0x10e0] sm:$0xff]
    %v629 = vld [vmem:[#allocation5 + $0x10e8] sm:$0xff]
    %v630 = vld [vmem:[#allocation5 + $0x10f0] sm:$0xff]
    %v631 = vld [vmem:[#allocation5 + $0x10f8] sm:$0xff]
    %v632 = vld [vmem:[#allocation5 + $0x1100] sm:$0xff]
    %v633 = vld [vmem:[#allocation5 + $0x1108] sm:$0xff]
    %v634 = vld [vmem:[#allocation5 + $0x1110] sm:$0xff]
    %v635 = vld [vmem:[#allocation5 + $0x1118] sm:$0xff]
    %v636 = vld [vmem:[#allocation5 + $0x1120] sm:$0xff]
    %v637 = vld [vmem:[#allocation5 + $0x1128] sm:$0xff]
    %v638 = vld [vmem:[#allocation5 + $0x1130] sm:$0xff]
    %v639 = vld [vmem:[#allocation5 + $0x1138] sm:$0xff]
    %v640 = vld [vmem:[#allocation5 + $0x1140] sm:$0xff]
    %v641 = vld [vmem:[#allocation5 + $0x1148] sm:$0xff]
    %v642 = vld [vmem:[#allocation5 + $0x1150] sm:$0xff]
    %v643 = vld [vmem:[#allocation5 + $0x1158] sm:$0xff]
    %v644 = vld [vmem:[#allocation5 + $0x1160] sm:$0xff]
    %v645 = vld [vmem:[#allocation5 + $0x1168] sm:$0xff]
    %v646 = vld [vmem:[#allocation5 + $0x1170] sm:$0xff]
    %v647 = vld [vmem:[#allocation5 + $0x1178] sm:$0xff]
    %v648 = vld [vmem:[#allocation5 + $0x1180] sm:$0xff]
    %v649 = vld [vmem:[#allocation5 + $0x1188] sm:$0xff]
    %v650 = vld [vmem:[#allocation5 + $0x1190] sm:$0xff]
    %v651 = vld [vmem:[#allocation5 + $0x1198] sm:$0xff]
    %v652 = vld [vmem:[#allocation5 + $0x11a0] sm:$0xff]
    %v653 = vld [vmem:[#allocation5 + $0x11a8] sm:$0xff]
    %v654 = vld [vmem:[#allocation5 + $0x11b0] sm:$0xff]
    %v655 = vld [vmem:[#allocation5 + $0x11b8] sm:$0xff]
    %v656 = vld [vmem:[#allocation5 + $0x11c0] sm:$0xff]
    %v657 = vld [vmem:[#allocation5 + $0x11c8] sm:$0xff]
    %v658 = vld [vmem:[#allocation5 + $0x11d0] sm:$0xff]
    %v659 = vld [vmem:[#allocation5 + $0x11d8] sm:$0xff]
    %v660 = vld [vmem:[#allocation5 + $0x11e0] sm:$0xff]
    %v661 = vld [vmem:[#allocation5 + $0x11e8] sm:$0xff]
    %v662 = vld [vmem:[#allocation5 + $0x11f0] sm:$0xff]
    %v663 = vld [vmem:[#allocation5 + $0x11f8] sm:$0xff]
    %v664 = vld [vmem:[#allocation5 + $0x1200] sm:$0xff]
    %v665 = vld [vmem:[#allocation5 + $0x1208] sm:$0xff]
    %v666 = vld [vmem:[#allocation5 + $0x1210] sm:$0xff]
    %v667 = vld [vmem:[#allocation5 + $0x1218] sm:$0xff]
    %v668 = vld [vmem:[#allocation5 + $0x1220] sm:$0xff]
    %v669 = vld [vmem:[#allocation5 + $0x1228] sm:$0xff]
    %v670 = vld [vmem:[#allocation5 + $0x1230] sm:$0xff]
    %v671 = vld [vmem:[#allocation5 + $0x1238] sm:$0xff]
    %v672 = vld [vmem:[#allocation5 + $0x1240] sm:$0xff]
    %v673 = vld [vmem:[#allocation5 + $0x1248] sm:$0xff]
    %v674 = vld [vmem:[#allocation5 + $0x1250] sm:$0xff]
    %v675 = vld [vmem:[#allocation5 + $0x1258] sm:$0xff]
    %v676 = vld [vmem:[#allocation5 + $0x1260] sm:$0xff]
    %v677 = vld [vmem:[#allocation5 + $0x1268] sm:$0xff]
    %v678 = vld [vmem:[#allocation5 + $0x1270] sm:$0xff]
    %v679 = vld [vmem:[#allocation5 + $0x1278] sm:$0xff]
    %v680 = vld [vmem:[#allocation5 + $0x1280] sm:$0xff]
    %v681 = vld [vmem:[#allocation5 + $0x1288] sm:$0xff]
    %v682 = vld [vmem:[#allocation5 + $0x1290] sm:$0xff]
    %v683 = vld [vmem:[#allocation5 + $0x1298] sm:$0xff]
    %v684 = vld [vmem:[#allocation5 + $0x12a0] sm:$0xff]
    %v685 = vld [vmem:[#allocation5 + $0x12a8] sm:$0xff]
    %v686 = vld [vmem:[#allocation5 + $0x12b0] sm:$0xff]
    %v687 = vld [vmem:[#allocation5 + $0x12b8] sm:$0xff]
    %v688 = vld [vmem:[#allocation5 + $0x12c0] sm:$0xff]
    %v689 = vld [vmem:[#allocation5 + $0x12c8] sm:$0xff]
    %v690 = vld [vmem:[#allocation5 + $0x12d0] sm:$0xff]
    %v691 = vld [vmem:[#allocation5 + $0x12d8] sm:$0xff]
    %v692 = vld [vmem:[#allocation5 + $0x12e0] sm:$0xff]
    %v693 = vld [vmem:[#allocation5 + $0x12e8] sm:$0xff]
    %v694 = vld [vmem:[#allocation5 + $0x12f0] sm:$0xff]
    %v695 = vld [vmem:[#allocation5 + $0x12f8] sm:$0xff]
    %v696 = vld [vmem:[#allocation5 + $0x1300] sm:$0xff]
    %v697 = vld [vmem:[#allocation5 + $0x1308] sm:$0xff]
    %v698 = vld [vmem:[#allocation5 + $0x1310] sm:$0xff]
    %v699 = vld [vmem:[#allocation5 + $0x1318] sm:$0xff]
    %v700 = vld [vmem:[#allocation5 + $0x1320] sm:$0xff]
    %v701 = vld [vmem:[#allocation5 + $0x1328] sm:$0xff]
    %v702 = vld [vmem:[#allocation5 + $0x1330] sm:$0xff]
    %v703 = vld [vmem:[#allocation5 + $0x1338] sm:$0xff]
    %v704 = vld [vmem:[#allocation5 + $0x1340] sm:$0xff]
    %v705 = vld [vmem:[#allocation5 + $0x1348] sm:$0xff]
    %v706 = vld [vmem:[#allocation5 + $0x1350] sm:$0xff]
    %v707 = vld [vmem:[#allocation5 + $0x1358] sm:$0xff]
    %v708 = vld [vmem:[#allocation5 + $0x1360] sm:$0xff]
    %v709 = vld [vmem:[#allocation5 + $0x1368] sm:$0xff]
    %v710 = vld [vmem:[#allocation5 + $0x1370] sm:$0xff]
    %v711 = vld [vmem:[#allocation5 + $0x1378] sm:$0xff]
    %v712 = vld [vmem:[#allocation5 + $0x1380] sm:$0xff]
    %v713 = vld [vmem:[#allocation5 + $0x1388] sm:$0xff]
    %v714 = vld [vmem:[#allocation5 + $0x1390] sm:$0xff]
    %v715 = vld [vmem:[#allocation5 + $0x1398] sm:$0xff]
    %v716 = vld [vmem:[#allocation5 + $0x13a0] sm:$0xff]
    %v717 = vld [vmem:[#allocation5 + $0x13a8] sm:$0xff]
    %v718 = vld [vmem:[#allocation5 + $0x13b0] sm:$0xff]
    %v719 = vld [vmem:[#allocation5 + $0x13b8] sm:$0xff]
    %v720 = vld [vmem:[#allocation5 + $0x13c0] sm:$0xff]
    %v721 = vld [vmem:[#allocation5 + $0x13c8] sm:$0xff]
    %v722 = vld [vmem:[#allocation5 + $0x13d0] sm:$0xff]
    %v723 = vld [vmem:[#allocation5 + $0x13d8] sm:$0xff]
    %v724 = vld [vmem:[#allocation5 + $0x13e0] sm:$0xff]
    %v725 = vld [vmem:[#allocation5 + $0x13e8] sm:$0xff]
    %v726 = vld [vmem:[#allocation5 + $0x13f0] sm:$0xff]
    %v727 = vld [vmem:[#allocation5 + $0x13f8] sm:$0xff]
    %v728 = vld [vmem:[#allocation5 + $0x1400] sm:$0xff]
    %v729 = vld [vmem:[#allocation5 + $0x1408] sm:$0xff]
    %v730 = vld [vmem:[#allocation5 + $0x1410] sm:$0xff]
    %v731 = vld [vmem:[#allocation5 + $0x1418] sm:$0xff]
    %v732 = vld [vmem:[#allocation5 + $0x1420] sm:$0xff]
    %v733 = vld [vmem:[#allocation5 + $0x1428] sm:$0xff]
    %v734 = vld [vmem:[#allocation5 + $0x1430] sm:$0xff]
    %v735 = vld [vmem:[#allocation5 + $0x1438] sm:$0xff]
    %v736 = vld [vmem:[#allocation5 + $0x1440] sm:$0xff]
    %v737 = vld [vmem:[#allocation5 + $0x1448] sm:$0xff]
    %v738 = vld [vmem:[#allocation5 + $0x1450] sm:$0xff]
    %v739 = vld [vmem:[#allocation5 + $0x1458] sm:$0xff]
    %v740 = vld [vmem:[#allocation5 + $0x1460] sm:$0xff]
    %v741 = vld [vmem:[#allocation5 + $0x1468] sm:$0xff]
    %v742 = vld [vmem:[#allocation5 + $0x1470] sm:$0xff]
    %v743 = vld [vmem:[#allocation5 + $0x1478] sm:$0xff]
    %v744 = vld [vmem:[#allocation5 + $0x1480] sm:$0xff]
    %v745 = vld [vmem:[#allocation5 + $0x1488] sm:$0xff]
    %v746 = vld [vmem:[#allocation5 + $0x1490] sm:$0xff]
    %v747 = vld [vmem:[#allocation5 + $0x1498] sm:$0xff]
    %v748 = vld [vmem:[#allocation5 + $0x14a0] sm:$0xff]
    %v749 = vld [vmem:[#allocation5 + $0x14a8] sm:$0xff]
    %v750 = vld [vmem:[#allocation5 + $0x14b0] sm:$0xff]
    %v751 = vld [vmem:[#allocation5 + $0x14b8] sm:$0xff]
    %v752 = vld [vmem:[#allocation5 + $0x14c0] sm:$0xff]
    %v753 = vld [vmem:[#allocation5 + $0x14c8] sm:$0xff]
    %v754 = vld [vmem:[#allocation5 + $0x14d0] sm:$0xff]
    %v755 = vld [vmem:[#allocation5 + $0x14d8] sm:$0xff]
    %v756 = vld [vmem:[#allocation5 + $0x14e0] sm:$0xff]
    %v757 = vld [vmem:[#allocation5 + $0x14e8] sm:$0xff]
    %v758 = vld [vmem:[#allocation5 + $0x14f0] sm:$0xff]
    %v759 = vld [vmem:[#allocation5 + $0x14f8] sm:$0xff]
    %v760 = vld [vmem:[#allocation5 + $0x1500] sm:$0xff]
    %v761 = vld [vmem:[#allocation5 + $0x1508] sm:$0xff]
    %v762 = vld [vmem:[#allocation5 + $0x1510] sm:$0xff]
    %v763 = vld [vmem:[#allocation5 + $0x1518] sm:$0xff]
    %v764 = vld [vmem:[#allocation5 + $0x1520] sm:$0xff]
    %v765 = vld [vmem:[#allocation5 + $0x1528] sm:$0xff]
    %v766 = vld [vmem:[#allocation5 + $0x1530] sm:$0xff]
    %v767 = vld [vmem:[#allocation5 + $0x1538] sm:$0xff]
    %v768 = vld [vmem:[#allocation5 + $0x1540] sm:$0xff]
    %v769 = vld [vmem:[#allocation5 + $0x1548] sm:$0xff]
    %v770 = vld [vmem:[#allocation5 + $0x1550] sm:$0xff]
    %v771 = vld [vmem:[#allocation5 + $0x1558] sm:$0xff]
    %v772 = vld [vmem:[#allocation5 + $0x1560] sm:$0xff]
    %v773 = vld [vmem:[#allocation5 + $0x1568] sm:$0xff]
    %v774 = vld [vmem:[#allocation5 + $0x1570] sm:$0xff]
    %v775 = vld [vmem:[#allocation5 + $0x1578] sm:$0xff]
    %v776 = vld [vmem:[#allocation5 + $0x1580] sm:$0xff]
    %v777 = vld [vmem:[#allocation5 + $0x1588] sm:$0xff]
    %v778 = vld [vmem:[#allocation5 + $0x1590] sm:$0xff]
    %v779 = vld [vmem:[#allocation5 + $0x1598] sm:$0xff]
    %v780 = vld [vmem:[#allocation5 + $0x15a0] sm:$0xff]
    %v781 = vld [vmem:[#allocation5 + $0x15a8] sm:$0xff]
    %v782 = vld [vmem:[#allocation5 + $0x15b0] sm:$0xff]
    %v783 = vld [vmem:[#allocation5 + $0x15b8] sm:$0xff]
    %v784 = vld [vmem:[#allocation5 + $0x15c0] sm:$0xff]
    %v785 = vld [vmem:[#allocation5 + $0x15c8] sm:$0xff]
    %v786 = vld [vmem:[#allocation5 + $0x15d0] sm:$0xff]
    %v787 = vld [vmem:[#allocation5 + $0x15d8] sm:$0xff]
    %v788 = vld [vmem:[#allocation5 + $0x15e0] sm:$0xff]
    %v789 = vld [vmem:[#allocation5 + $0x15e8] sm:$0xff]
    %v790 = vld [vmem:[#allocation5 + $0x15f0] sm:$0xff]
    %v791 = vld [vmem:[#allocation5 + $0x15f8] sm:$0xff]
    %v792 = vld [vmem:[#allocation5 + $0x1600] sm:$0xff]
    %v793 = vld [vmem:[#allocation5 + $0x1608] sm:$0xff]
    %v794 = vld [vmem:[#allocation5 + $0x1610] sm:$0xff]
    %v795 = vld [vmem:[#allocation5 + $0x1618] sm:$0xff]
    %v796 = vld [vmem:[#allocation5 + $0x1620] sm:$0xff]
    %v797 = vld [vmem:[#allocation5 + $0x1628] sm:$0xff]
    %v798 = vld [vmem:[#allocation5 + $0x1630] sm:$0xff]
    %v799 = vld [vmem:[#allocation5 + $0x1638] sm:$0xff]
    %v800 = vld [vmem:[#allocation5 + $0x1640] sm:$0xff]
    %v801 = vld [vmem:[#allocation5 + $0x1648] sm:$0xff]
    %v802 = vld [vmem:[#allocation5 + $0x1650] sm:$0xff]
    %v803 = vld [vmem:[#allocation5 + $0x1658] sm:$0xff]
    %v804 = vld [vmem:[#allocation5 + $0x1660] sm:$0xff]
    %v805 = vld [vmem:[#allocation5 + $0x1668] sm:$0xff]
    %v806 = vld [vmem:[#allocation5 + $0x1670] sm:$0xff]
    %v807 = vld [vmem:[#allocation5 + $0x1678] sm:$0xff]
    %v808 = vld [vmem:[#allocation5 + $0x1680] sm:$0xff]
    %v809 = vld [vmem:[#allocation5 + $0x1688] sm:$0xff]
    %v810 = vld [vmem:[#allocation5 + $0x1690] sm:$0xff]
    %v811 = vld [vmem:[#allocation5 + $0x1698] sm:$0xff]
    %v812 = vld [vmem:[#allocation5 + $0x16a0] sm:$0xff]
    %v813 = vld [vmem:[#allocation5 + $0x16a8] sm:$0xff]
    %v814 = vld [vmem:[#allocation5 + $0x16b0] sm:$0xff]
    %v815 = vld [vmem:[#allocation5 + $0x16b8] sm:$0xff]
    %v816 = vld [vmem:[#allocation5 + $0x16c0] sm:$0xff]
    %v817 = vld [vmem:[#allocation5 + $0x16c8] sm:$0xff]
    %v818 = vld [vmem:[#allocation5 + $0x16d0] sm:$0xff]
    %v819 = vld [vmem:[#allocation5 + $0x16d8] sm:$0xff]
    %v820 = vld [vmem:[#allocation5 + $0x16e0] sm:$0xff]
    %v821 = vld [vmem:[#allocation5 + $0x16e8] sm:$0xff]
    %v822 = vld [vmem:[#allocation5 + $0x16f0] sm:$0xff]
    %v823 = vld [vmem:[#allocation5 + $0x16f8] sm:$0xff]
    %v824 = vld [vmem:[#allocation5 + $0x1700] sm:$0xff]
    %v825 = vld [vmem:[#allocation5 + $0x1708] sm:$0xff]
    %v826 = vld [vmem:[#allocation5 + $0x1710] sm:$0xff]
    %v827 = vld [vmem:[#allocation5 + $0x1718] sm:$0xff]
    %v828 = vld [vmem:[#allocation5 + $0x1720] sm:$0xff]
    %v829 = vld [vmem:[#allocation5 + $0x1728] sm:$0xff]
    %v830 = vld [vmem:[#allocation5 + $0x1730] sm:$0xff]
    %v831 = vld [vmem:[#allocation5 + $0x1738] sm:$0xff]
    %v832 = vld [vmem:[#allocation5 + $0x1740] sm:$0xff]
    %v833 = vld [vmem:[#allocation5 + $0x1748] sm:$0xff]
    %v834 = vld [vmem:[#allocation5 + $0x1750] sm:$0xff]
    %v835 = vld [vmem:[#allocation5 + $0x1758] sm:$0xff]
    %v836 = vld [vmem:[#allocation5 + $0x1760] sm:$0xff]
    %v837 = vld [vmem:[#allocation5 + $0x1768] sm:$0xff]
    %v838 = vld [vmem:[#allocation5 + $0x1770] sm:$0xff]
    %v839 = vld [vmem:[#allocation5 + $0x1778] sm:$0xff]
    %v840 = vld [vmem:[#allocation5 + $0x1780] sm:$0xff]
    %v841 = vld [vmem:[#allocation5 + $0x1788] sm:$0xff]
    %v842 = vld [vmem:[#allocation5 + $0x1790] sm:$0xff]
    %v843 = vld [vmem:[#allocation5 + $0x1798] sm:$0xff]
    %v844 = vld [vmem:[#allocation5 + $0x17a0] sm:$0xff]
    %v845 = vld [vmem:[#allocation5 + $0x17a8] sm:$0xff]
    %v846 = vld [vmem:[#allocation5 + $0x17b0] sm:$0xff]
    %v847 = vld [vmem:[#allocation5 + $0x17b8] sm:$0xff]
    %v848 = vld [vmem:[#allocation5 + $0x17c0] sm:$0xff]
    %v849 = vld [vmem:[#allocation5 + $0x17c8] sm:$0xff]
    %v850 = vld [vmem:[#allocation5 + $0x17d0] sm:$0xff]
    %v851 = vld [vmem:[#allocation5 + $0x17d8] sm:$0xff]
    %v852 = vld [vmem:[#allocation5 + $0x17e0] sm:$0xff]
    %v853 = vld [vmem:[#allocation5 + $0x17e8] sm:$0xff]
    %v854 = vld [vmem:[#allocation5 + $0x17f0] sm:$0xff]
    %v855 = vld [vmem:[#allocation5 + $0x17f8] sm:$0xff]
    %v856 = vld [vmem:[#allocation5 + $0x1800] sm:$0xff]
    %v857 = vld [vmem:[#allocation5 + $0x1808] sm:$0xff]
    %v858 = vld [vmem:[#allocation5 + $0x1810] sm:$0xff]
    %v859 = vld [vmem:[#allocation5 + $0x1818] sm:$0xff]
    %v860 = vld [vmem:[#allocation5 + $0x1820] sm:$0xff]
    %v861 = vld [vmem:[#allocation5 + $0x1828] sm:$0xff]
    %v862 = vld [vmem:[#allocation5 + $0x1830] sm:$0xff]
    %v863 = vld [vmem:[#allocation5 + $0x1838] sm:$0xff]
    %v864 = vld [vmem:[#allocation5 + $0x1840] sm:$0xff]
    %v865 = vld [vmem:[#allocation5 + $0x1848] sm:$0xff]
    %v866 = vld [vmem:[#allocation5 + $0x1850] sm:$0xff]
    %v867 = vld [vmem:[#allocation5 + $0x1858] sm:$0xff]
    %v868 = vld [vmem:[#allocation5 + $0x1860] sm:$0xff]
    %v869 = vld [vmem:[#allocation5 + $0x1868] sm:$0xff]
    %v870 = vld [vmem:[#allocation5 + $0x1870] sm:$0xff]
    %v871 = vld [vmem:[#allocation5 + $0x1878] sm:$0xff]
    %v872 = vld [vmem:[#allocation7] sm:$0xff]
    %v873 = vld [vmem:[#allocation7 + $0x8] sm:$0xff]
    %v876 = vlaneseq
    %v877 = vshrl.u32 %v876, 7
    %v878 = vsub.s32 0, %v877
    %v879 = vrot.slane %v872, %v878
    %v880 = vlaneseq
    %v881 = vshrl.u32 %v880, 7
    %v882 = vsub.s32 1, %v881
    %v883 = vrot.slane %v872, %v882
    %v884 = vlaneseq
    %v885 = vshrl.u32 %v884, 7
    %v886 = vsub.s32 2, %v885
    %v887 = vrot.slane %v872, %v886
    %v888 = vlaneseq
    %v889 = vshrl.u32 %v888, 7
    %v890 = vsub.s32 3, %v889
    %v891 = vrot.slane %v872, %v890
    %v892 = vlaneseq
    %v893 = vshrl.u32 %v892, 7
    %v894 = vsub.s32 4, %v893
    %v895 = vrot.slane %v872, %v894
    %v896 = vlaneseq
    %v897 = vshrl.u32 %v896, 7
    %v898 = vsub.s32 5, %v897
    %v899 = vrot.slane %v872, %v898
    %v900 = vlaneseq
    %v901 = vshrl.u32 %v900, 7
    %v902 = vsub.s32 6, %v901
    %v903 = vrot.slane %v872, %v902
    %v904 = vlaneseq
    %v905 = vshrl.u32 %v904, 7
    %v906 = vsub.s32 7, %v905
    %v907 = vrot.slane %v872, %v906
    %v908 = vlaneseq
    %v909 = vshrl.u32 %v908, 7
    %v910 = vsub.s32 0, %v909
    %v911 = vrot.slane %v873, %v910
    %v912 = vlaneseq
    %v913 = vshrl.u32 %v912, 7
    %v914 = vsub.s32 1, %v913
    %v915 = vrot.slane %v873, %v914
    %v916 = vlaneseq
    %v917 = vshrl.u32 %v916, 7
    %v918 = vsub.s32 2, %v917
    %v919 = vrot.slane %v873, %v918
    %v920 = vlaneseq
    %v921 = vshrl.u32 %v920, 7
    %v922 = vsub.s32 3, %v921
    %v923 = vrot.slane %v873, %v922
    %v924 = vlaneseq
    %v925 = vshrl.u32 %v924, 7
    %v926 = vsub.s32 4, %v925
    %v927 = vrot.slane %v873, %v926
    %v928 = vlaneseq
    %v929 = vshrl.u32 %v928, 7
    %v930 = vsub.s32 5, %v929
    %v931 = vrot.slane %v873, %v930
    %v932 = vlaneseq
    %v933 = vshrl.u32 %v932, 7
    %v934 = vsub.s32 6, %v933
    %v935 = vrot.slane %v873, %v934
    %v936 = vlaneseq
    %v937 = vshrl.u32 %v936, 7
    %v938 = vsub.s32 7, %v937
    %v939 = vrot.slane %v873, %v938
    %v960 = vunpack.c.l.b16 %v84
    %v961 = vunpack.c.h.b16 %v84
    %v962 = vunpack.c.l.b16 %v85
    %v963 = vunpack.c.h.b16 %v85
    %v964 = vunpack.c.l.b16 %v86
    %v965 = vunpack.c.h.b16 %v86
    %v966 = vunpack.c.l.b16 %v87
    %v967 = vpack.c.b16 %v960, %v960
    %v968 = vpack.c.b16 %v961, %v961
    %v969 = vpack.c.b16 %v962, %v962
    %v970 = vpack.c.b16 %v963, %v963
    %v971 = vpack.c.b16 %v964, %v964
    %v972 = vpack.c.b16 %v965, %v965
    %v973 = vpack.c.b16 %v966, %v966
    %v1764 = vunpack.c.l.b16 %v88
    %v1765 = vunpack.c.h.b16 %v88
    %v1766 = vunpack.c.l.b16 %v89
    %v1767 = vunpack.c.h.b16 %v89
    %v1768 = vunpack.c.l.b16 %v90
    %v1769 = vunpack.c.h.b16 %v90
    %v1770 = vunpack.c.l.b16 %v91
    %v1771 = vunpack.c.h.b16 %v91
    %v1772 = vunpack.c.l.b16 %v92
    %v1773 = vunpack.c.h.b16 %v92
    %v1774 = vunpack.c.l.b16 %v93
    %v1775 = vunpack.c.h.b16 %v93
    %v1776 = vunpack.c.l.b16 %v94
    %v1777 = vunpack.c.h.b16 %v94
    %v1778 = vunpack.c.l.b16 %v95
    %v1779 = vunpack.c.h.b16 %v95
    %v1780 = vunpack.c.l.b16 %v96
    %v1781 = vunpack.c.h.b16 %v96
    %v1782 = vunpack.c.l.b16 %v97
    %v1783 = vunpack.c.h.b16 %v97
    %v1784 = vunpack.c.l.b16 %v98
    %v1785 = vunpack.c.h.b16 %v98
    %v1786 = vunpack.c.l.b16 %v99
    %v1787 = vunpack.c.h.b16 %v99
    %v1788 = vunpack.c.l.b16 %v100
    %v1789 = vunpack.c.h.b16 %v100
    %v1790 = vunpack.c.l.b16 %v101
    %v1791 = vunpack.c.h.b16 %v101
    %v1792 = vunpack.c.l.b16 %v102
    %v1793 = vunpack.c.h.b16 %v102
    %v1794 = vunpack.c.l.b16 %v103
    %v1795 = vunpack.c.h.b16 %v103
    %v1796 = vunpack.c.l.b16 %v104
    %v1797 = vunpack.c.h.b16 %v104
    %v1798 = vunpack.c.l.b16 %v105
    %v1799 = vunpack.c.h.b16 %v105
    %v1800 = vunpack.c.l.b16 %v106
    %v1801 = vunpack.c.h.b16 %v106
    %v1802 = vunpack.c.l.b16 %v107
    %v1803 = vunpack.c.h.b16 %v107
    %v1804 = vunpack.c.l.b16 %v108
    %v1805 = vunpack.c.h.b16 %v108
    %v1806 = vunpack.c.l.b16 %v109
    %v1807 = vunpack.c.h.b16 %v109
    %v1808 = vunpack.c.l.b16 %v110
    %v1809 = vunpack.c.h.b16 %v110
    %v1810 = vunpack.c.l.b16 %v111
    %v1811 = vunpack.c.h.b16 %v111
    %v1812 = vunpack.c.l.b16 %v112
    %v1813 = vunpack.c.h.b16 %v112
    %v1814 = vunpack.c.l.b16 %v113
    %v1815 = vunpack.c.h.b16 %v113
    %v1816 = vunpack.c.l.b16 %v114
    %v1817 = vunpack.c.h.b16 %v114
    %v1818 = vunpack.c.l.b16 %v115
    %v1819 = vunpack.c.h.b16 %v115
    %v1820 = vunpack.c.l.b16 %v116
    %v1821 = vunpack.c.h.b16 %v116
    %v1822 = vunpack.c.l.b16 %v117
    %v1823 = vunpack.c.h.b16 %v117
    %v1824 = vunpack.c.l.b16 %v118
    %v1825 = vunpack.c.h.b16 %v118
    %v1826 = vunpack.c.l.b16 %v119
    %v1827 = vunpack.c.h.b16 %v119
    %v1828 = vunpack.c.l.b16 %v120
    %v1829 = vunpack.c.h.b16 %v120
    %v1830 = vunpack.c.l.b16 %v121
    %v1831 = vunpack.c.h.b16 %v121
    %v1832 = vunpack.c.l.b16 %v122
    %v1833 = vunpack.c.h.b16 %v122
    %v1834 = vunpack.c.l.b16 %v123
    %v1835 = vunpack.c.h.b16 %v123
    %v1836 = vunpack.c.l.b16 %v124
    %v1837 = vunpack.c.h.b16 %v124
    %v1838 = vunpack.c.l.b16 %v125
    %v1839 = vunpack.c.h.b16 %v125
    %v1840 = vunpack.c.l.b16 %v126
    %v1841 = vunpack.c.h.b16 %v126
    %v1842 = vunpack.c.l.b16 %v127
    %v1843 = vunpack.c.h.b16 %v127
    %v1844 = vunpack.c.l.b16 %v128
    %v1845 = vunpack.c.h.b16 %v128
    %v1846 = vunpack.c.l.b16 %v129
    %v1847 = vunpack.c.h.b16 %v129
    %v1848 = vunpack.c.l.b16 %v130
    %v1849 = vunpack.c.h.b16 %v130
    %v1850 = vunpack.c.l.b16 %v131
    %v1851 = vunpack.c.h.b16 %v131
    %v1852 = vunpack.c.l.b16 %v132
    %v1853 = vunpack.c.h.b16 %v132
    %v1854 = vunpack.c.l.b16 %v133
    %v1855 = vunpack.c.h.b16 %v133
    %v1856 = vunpack.c.l.b16 %v134
    %v1857 = vunpack.c.h.b16 %v134
    %v1858 = vunpack.c.l.b16 %v135
    %v1859 = vunpack.c.h.b16 %v135
    %v1860 = vunpack.c.l.b16 %v136
    %v1861 = vunpack.c.h.b16 %v136
    %v1862 = vunpack.c.l.b16 %v137
    %v1863 = vunpack.c.h.b16 %v137
    %v1864 = vunpack.c.l.b16 %v138
    %v1865 = vunpack.c.h.b16 %v138
    %v1866 = vunpack.c.l.b16 %v139
    %v1867 = vunpack.c.h.b16 %v139
    %v1868 = vunpack.c.l.b16 %v140
    %v1869 = vunpack.c.h.b16 %v140
    %v1870 = vunpack.c.l.b16 %v141
    %v1871 = vunpack.c.h.b16 %v141
    %v1872 = vunpack.c.l.b16 %v142
    %v1873 = vunpack.c.h.b16 %v142
    %v1874 = vunpack.c.l.b16 %v143
    %v1875 = vunpack.c.h.b16 %v143
    %v1876 = vunpack.c.l.b16 %v144
    %v1877 = vunpack.c.h.b16 %v144
    %v1878 = vunpack.c.l.b16 %v145
    %v1879 = vunpack.c.h.b16 %v145
    %v1880 = vunpack.c.l.b16 %v146
    %v1881 = vunpack.c.h.b16 %v146
    %v1882 = vunpack.c.l.b16 %v147
    %v1883 = vunpack.c.h.b16 %v147
    %v1884 = vunpack.c.l.b16 %v148
    %v1885 = vunpack.c.h.b16 %v148
    %v1886 = vunpack.c.l.b16 %v149
    %v1887 = vunpack.c.h.b16 %v149
    %v1888 = vunpack.c.l.b16 %v150
    %v1889 = vunpack.c.h.b16 %v150
    %v1890 = vunpack.c.l.b16 %v151
    %v1891 = vunpack.c.h.b16 %v151
    %v1892 = vunpack.c.l.b16 %v152
    %v1893 = vunpack.c.h.b16 %v152
    %v1894 = vunpack.c.l.b16 %v153
    %v1895 = vunpack.c.h.b16 %v153
    %v1896 = vunpack.c.l.b16 %v154
    %v1897 = vunpack.c.h.b16 %v154
    %v1898 = vunpack.c.l.b16 %v155
    %v1899 = vunpack.c.h.b16 %v155
    %v1900 = vunpack.c.l.b16 %v156
    %v1901 = vunpack.c.h.b16 %v156
    %v1902 = vunpack.c.l.b16 %v157
    %v1903 = vunpack.c.h.b16 %v157
    %v1904 = vunpack.c.l.b16 %v158
    %v1905 = vunpack.c.h.b16 %v158
    %v1906 = vunpack.c.l.b16 %v159
    %v1907 = vunpack.c.h.b16 %v159
    %v1908 = vunpack.c.l.b16 %v160
    %v1909 = vunpack.c.h.b16 %v160
    %v1910 = vunpack.c.l.b16 %v161
    %v1911 = vunpack.c.h.b16 %v161
    %v1912 = vunpack.c.l.b16 %v162
    %v1913 = vunpack.c.h.b16 %v162
    %v1914 = vunpack.c.l.b16 %v163
    %v1915 = vunpack.c.h.b16 %v163
    %v1916 = vunpack.c.l.b16 %v164
    %v1917 = vunpack.c.h.b16 %v164
    %v1918 = vunpack.c.l.b16 %v165
    %v1919 = vunpack.c.h.b16 %v165
    %v1920 = vunpack.c.l.b16 %v166
    %v1921 = vunpack.c.h.b16 %v166
    %v1922 = vunpack.c.l.b16 %v167
    %v1923 = vunpack.c.h.b16 %v167
    %v1924 = vunpack.c.l.b16 %v168
    %v1925 = vunpack.c.h.b16 %v168
    %v1926 = vunpack.c.l.b16 %v169
    %v1927 = vunpack.c.h.b16 %v169
    %v1928 = vunpack.c.l.b16 %v170
    %v1929 = vunpack.c.h.b16 %v170
    %v1930 = vunpack.c.l.b16 %v171
    %v1931 = vunpack.c.h.b16 %v171
    %v1932 = vunpack.c.l.b16 %v172
    %v1933 = vunpack.c.h.b16 %v172
    %v1934 = vunpack.c.l.b16 %v173
    %v1935 = vunpack.c.h.b16 %v173
    %v1936 = vunpack.c.l.b16 %v174
    %v1937 = vunpack.c.h.b16 %v174
    %v1938 = vunpack.c.l.b16 %v175
    %v1939 = vunpack.c.h.b16 %v175
    %v1940 = vunpack.c.l.b16 %v176
    %v1941 = vunpack.c.h.b16 %v176
    %v1942 = vunpack.c.l.b16 %v177
    %v1943 = vunpack.c.h.b16 %v177
    %v1944 = vunpack.c.l.b16 %v178
    %v1945 = vunpack.c.h.b16 %v178
    %v1946 = vunpack.c.l.b16 %v179
    %v1947 = vunpack.c.h.b16 %v179
    %v1948 = vunpack.c.l.b16 %v180
    %v1949 = vunpack.c.h.b16 %v180
    %v1950 = vunpack.c.l.b16 %v181
    %v1951 = vunpack.c.h.b16 %v181
    %v1952 = vunpack.c.l.b16 %v182
    %v1953 = vunpack.c.h.b16 %v182
    %v1954 = vunpack.c.l.b16 %v183
    %v1955 = vunpack.c.h.b16 %v183
    %v1956 = vunpack.c.l.b16 %v184
    %v1957 = vunpack.c.h.b16 %v184
    %v1958 = vunpack.c.l.b16 %v185
    %v1959 = vunpack.c.h.b16 %v185
    %v1960 = vunpack.c.l.b16 %v186
    %v1961 = vunpack.c.h.b16 %v186
    %v1962 = vunpack.c.l.b16 %v187
    %v1963 = vunpack.c.h.b16 %v187
    %v1964 = vunpack.c.l.b16 %v188
    %v1965 = vunpack.c.h.b16 %v188
    %v1966 = vunpack.c.l.b16 %v189
    %v1967 = vunpack.c.h.b16 %v189
    %v1968 = vunpack.c.l.b16 %v190
    %v1969 = vunpack.c.h.b16 %v190
    %v1970 = vunpack.c.l.b16 %v191
    %v1971 = vunpack.c.h.b16 %v191
    %v1972 = vunpack.c.l.b16 %v192
    %v1973 = vunpack.c.h.b16 %v192
    %v1974 = vunpack.c.l.b16 %v193
    %v1975 = vunpack.c.h.b16 %v193
    %v1976 = vunpack.c.l.b16 %v194
    %v1977 = vunpack.c.h.b16 %v194
    %v1978 = vunpack.c.l.b16 %v195
    %v1979 = vunpack.c.h.b16 %v195
    %v1980 = vunpack.c.l.b16 %v196
    %v1981 = vunpack.c.h.b16 %v196
    %v1982 = vunpack.c.l.b16 %v197
    %v1983 = vunpack.c.h.b16 %v197
    %v1984 = vunpack.c.l.b16 %v198
    %v1985 = vunpack.c.h.b16 %v198
    %v1986 = vunpack.c.l.b16 %v199
    %v1987 = vunpack.c.h.b16 %v199
    %v1988 = vunpack.c.l.b16 %v200
    %v1989 = vunpack.c.h.b16 %v200
    %v1990 = vunpack.c.l.b16 %v201
    %v1991 = vunpack.c.h.b16 %v201
    %v1992 = vunpack.c.l.b16 %v202
    %v1993 = vunpack.c.h.b16 %v202
    %v1994 = vunpack.c.l.b16 %v203
    %v1995 = vunpack.c.h.b16 %v203
    %v1996 = vunpack.c.l.b16 %v204
    %v1997 = vunpack.c.h.b16 %v204
    %v1998 = vunpack.c.l.b16 %v205
    %v1999 = vunpack.c.h.b16 %v205
    %v2000 = vunpack.c.l.b16 %v206
    %v2001 = vunpack.c.h.b16 %v206
    %v2002 = vunpack.c.l.b16 %v207
    %v2003 = vunpack.c.h.b16 %v207
    %v2004 = vunpack.c.l.b16 %v208
    %v2005 = vunpack.c.h.b16 %v208
    %v2006 = vunpack.c.l.b16 %v209
    %v2007 = vunpack.c.h.b16 %v209
    %v2008 = vunpack.c.l.b16 %v210
    %v2009 = vunpack.c.h.b16 %v210
    %v2010 = vunpack.c.l.b16 %v211
    %v2011 = vunpack.c.h.b16 %v211
    %v2012 = vunpack.c.l.b16 %v212
    %v2013 = vunpack.c.h.b16 %v212
    %v2014 = vunpack.c.l.b16 %v213
    %v2015 = vunpack.c.h.b16 %v213
    %v2016 = vunpack.c.l.b16 %v214
    %v2017 = vunpack.c.h.b16 %v214
    %v2018 = vunpack.c.l.b16 %v215
    %v2019 = vunpack.c.h.b16 %v215
    %v2020 = vunpack.c.l.b16 %v216
    %v2021 = vunpack.c.h.b16 %v216
    %v2022 = vunpack.c.l.b16 %v217
    %v2023 = vunpack.c.h.b16 %v217
    %v2024 = vunpack.c.l.b16 %v218
    %v2025 = vunpack.c.h.b16 %v218
    %v2026 = vunpack.c.l.b16 %v219
    %v2027 = vunpack.c.h.b16 %v219
    %v2028 = vunpack.c.l.b16 %v220
    %v2029 = vunpack.c.h.b16 %v220
    %v2030 = vunpack.c.l.b16 %v221
    %v2031 = vunpack.c.h.b16 %v221
    %v2032 = vunpack.c.l.b16 %v222
    %v2033 = vunpack.c.h.b16 %v222
    %v2034 = vunpack.c.l.b16 %v223
    %v2035 = vunpack.c.h.b16 %v223
    %v2036 = vunpack.c.l.b16 %v224
    %v2037 = vunpack.c.h.b16 %v224
    %v2038 = vunpack.c.l.b16 %v225
    %v2039 = vunpack.c.h.b16 %v225
    %v2040 = vunpack.c.l.b16 %v226
    %v2041 = vunpack.c.h.b16 %v226
    %v2042 = vunpack.c.l.b16 %v227
    %v2043 = vunpack.c.h.b16 %v227
    %v2044 = vunpack.c.l.b16 %v228
    %v2045 = vunpack.c.h.b16 %v228
    %v2046 = vunpack.c.l.b16 %v229
    %v2047 = vunpack.c.h.b16 %v229
    %v2048 = vunpack.c.l.b16 %v230
    %v2049 = vunpack.c.h.b16 %v230
    %v2050 = vunpack.c.l.b16 %v231
    %v2051 = vunpack.c.h.b16 %v231
    %v2052 = vunpack.c.l.b16 %v232
    %v2053 = vunpack.c.h.b16 %v232
    %v2054 = vunpack.c.l.b16 %v233
    %v2055 = vunpack.c.h.b16 %v233
    %v2056 = vunpack.c.l.b16 %v234
    %v2057 = vunpack.c.h.b16 %v234
    %v2058 = vunpack.c.l.b16 %v235
    %v2059 = vunpack.c.h.b16 %v235
    %v2060 = vunpack.c.l.b16 %v236
    %v2061 = vunpack.c.h.b16 %v236
    %v2062 = vunpack.c.l.b16 %v237
    %v2063 = vunpack.c.h.b16 %v237
    %v2064 = vunpack.c.l.b16 %v238
    %v2065 = vunpack.c.h.b16 %v238
    %v2066 = vunpack.c.l.b16 %v239
    %v2067 = vunpack.c.h.b16 %v239
    %v2068 = vunpack.c.l.b16 %v240
    %v2069 = vunpack.c.h.b16 %v240
    %v2070 = vunpack.c.l.b16 %v241
    %v2071 = vunpack.c.h.b16 %v241
    %v2072 = vunpack.c.l.b16 %v242
    %v2073 = vunpack.c.h.b16 %v242
    %v2074 = vunpack.c.l.b16 %v243
    %v2075 = vunpack.c.h.b16 %v243
    %v2076 = vunpack.c.l.b16 %v244
    %v2077 = vunpack.c.h.b16 %v244
    %v2078 = vunpack.c.l.b16 %v245
    %v2079 = vunpack.c.h.b16 %v245
    %v2080 = vunpack.c.l.b16 %v246
    %v2081 = vunpack.c.h.b16 %v246
    %v2082 = vunpack.c.l.b16 %v247
    %v2083 = vunpack.c.h.b16 %v247
    %v2084 = vunpack.c.l.b16 %v248
    %v2085 = vunpack.c.h.b16 %v248
    %v2086 = vunpack.c.l.b16 %v249
    %v2087 = vunpack.c.h.b16 %v249
    %v2088 = vunpack.c.l.b16 %v250
    %v2089 = vunpack.c.h.b16 %v250
    %v2090 = vunpack.c.l.b16 %v251
    %v2091 = vunpack.c.h.b16 %v251
    %v2092 = vunpack.c.l.b16 %v252
    %v2093 = vunpack.c.h.b16 %v252
    %v2094 = vunpack.c.l.b16 %v253
    %v2095 = vunpack.c.h.b16 %v253
    %v2096 = vunpack.c.l.b16 %v254
    %v2097 = vunpack.c.h.b16 %v254
    %v2098 = vunpack.c.l.b16 %v255
    %v2099 = vunpack.c.h.b16 %v255
    %v2100 = vunpack.c.l.b16 %v256
    %v2101 = vunpack.c.h.b16 %v256
    %v2102 = vunpack.c.l.b16 %v257
    %v2103 = vunpack.c.h.b16 %v257
    %v2104 = vunpack.c.l.b16 %v258
    %v2105 = vunpack.c.h.b16 %v258
    %v2106 = vunpack.c.l.b16 %v259
    %v2107 = vunpack.c.h.b16 %v259
    %v2108 = vunpack.c.l.b16 %v260
    %v2109 = vunpack.c.h.b16 %v260
    %v2110 = vunpack.c.l.b16 %v261
    %v2111 = vunpack.c.h.b16 %v261
    %v2112 = vunpack.c.l.b16 %v262
    %v2113 = vunpack.c.h.b16 %v262
    %v2114 = vunpack.c.l.b16 %v263
    %v2115 = vunpack.c.h.b16 %v263
    %v2116 = vunpack.c.l.b16 %v264
    %v2117 = vunpack.c.h.b16 %v264
    %v2118 = vunpack.c.l.b16 %v265
    %v2119 = vunpack.c.h.b16 %v265
    %v2120 = vunpack.c.l.b16 %v266
    %v2121 = vunpack.c.h.b16 %v266
    %v2122 = vunpack.c.l.b16 %v267
    %v2123 = vunpack.c.h.b16 %v267
    %v2124 = vunpack.c.l.b16 %v268
    %v2125 = vunpack.c.h.b16 %v268
    %v2126 = vunpack.c.l.b16 %v269
    %v2127 = vunpack.c.h.b16 %v269
    %v2128 = vunpack.c.l.b16 %v270
    %v2129 = vunpack.c.h.b16 %v270
    %v2130 = vunpack.c.l.b16 %v271
    %v2131 = vunpack.c.h.b16 %v271
    %v2132 = vunpack.c.l.b16 %v272
    %v2133 = vunpack.c.h.b16 %v272
    %v2134 = vunpack.c.l.b16 %v273
    %v2135 = vunpack.c.h.b16 %v273
    %v2136 = vunpack.c.l.b16 %v274
    %v2137 = vunpack.c.h.b16 %v274
    %v2138 = vunpack.c.l.b16 %v275
    %v2139 = vunpack.c.h.b16 %v275
    %v2140 = vunpack.c.l.b16 %v276
    %v2141 = vunpack.c.h.b16 %v276
    %v2142 = vunpack.c.l.b16 %v277
    %v2143 = vunpack.c.h.b16 %v277
    %v2144 = vunpack.c.l.b16 %v278
    %v2145 = vunpack.c.h.b16 %v278
    %v2146 = vunpack.c.l.b16 %v279
    %v2147 = vunpack.c.h.b16 %v279
    %v2148 = vunpack.c.l.b16 %v280
    %v2149 = vunpack.c.h.b16 %v280
    %v2150 = vunpack.c.l.b16 %v281
    %v2151 = vunpack.c.h.b16 %v281
    %v2152 = vunpack.c.l.b16 %v282
    %v2153 = vunpack.c.h.b16 %v282
    %v2154 = vunpack.c.l.b16 %v283
    %v2155 = vunpack.c.h.b16 %v283
    %v2156 = vunpack.c.l.b16 %v284
    %v2157 = vunpack.c.h.b16 %v284
    %v2158 = vunpack.c.l.b16 %v285
    %v2159 = vunpack.c.h.b16 %v285
    %v2160 = vunpack.c.l.b16 %v286
    %v2161 = vunpack.c.h.b16 %v286
    %v2162 = vunpack.c.l.b16 %v287
    %v2163 = vunpack.c.h.b16 %v287
    %v2164 = vunpack.c.l.b16 %v288
    %v2165 = vunpack.c.h.b16 %v288
    %v2166 = vunpack.c.l.b16 %v289
    %v2167 = vunpack.c.h.b16 %v289
    %v2168 = vunpack.c.l.b16 %v290
    %v2169 = vunpack.c.h.b16 %v290
    %v2170 = vunpack.c.l.b16 %v291
    %v2171 = vunpack.c.h.b16 %v291
    %v2172 = vunpack.c.l.b16 %v292
    %v2173 = vunpack.c.h.b16 %v292
    %v2174 = vunpack.c.l.b16 %v293
    %v2175 = vunpack.c.h.b16 %v293
    %v2176 = vunpack.c.l.b16 %v294
    %v2177 = vunpack.c.h.b16 %v294
    %v2178 = vunpack.c.l.b16 %v295
    %v2179 = vunpack.c.h.b16 %v295
    %v2180 = vunpack.c.l.b16 %v296
    %v2181 = vunpack.c.h.b16 %v296
    %v2182 = vunpack.c.l.b16 %v297
    %v2183 = vunpack.c.h.b16 %v297
    %v2184 = vunpack.c.l.b16 %v298
    %v2185 = vunpack.c.h.b16 %v298
    %v2186 = vunpack.c.l.b16 %v299
    %v2187 = vunpack.c.h.b16 %v299
    %v2188 = vunpack.c.l.b16 %v300
    %v2189 = vunpack.c.h.b16 %v300
    %v2190 = vunpack.c.l.b16 %v301
    %v2191 = vunpack.c.h.b16 %v301
    %v2192 = vunpack.c.l.b16 %v302
    %v2193 = vunpack.c.h.b16 %v302
    %v2194 = vunpack.c.l.b16 %v303
    %v2195 = vunpack.c.h.b16 %v303
    %v2196 = vunpack.c.l.b16 %v304
    %v2197 = vunpack.c.h.b16 %v304
    %v2198 = vunpack.c.l.b16 %v305
    %v2199 = vunpack.c.h.b16 %v305
    %v2200 = vunpack.c.l.b16 %v306
    %v2201 = vunpack.c.h.b16 %v306
    %v2202 = vunpack.c.l.b16 %v307
    %v2203 = vunpack.c.h.b16 %v307
    %v2204 = vunpack.c.l.b16 %v308
    %v2205 = vunpack.c.h.b16 %v308
    %v2206 = vunpack.c.l.b16 %v309
    %v2207 = vunpack.c.h.b16 %v309
    %v2208 = vunpack.c.l.b16 %v310
    %v2209 = vunpack.c.h.b16 %v310
    %v2210 = vunpack.c.l.b16 %v311
    %v2211 = vunpack.c.h.b16 %v311
    %v2212 = vunpack.c.l.b16 %v312
    %v2213 = vunpack.c.h.b16 %v312
    %v2214 = vunpack.c.l.b16 %v313
    %v2215 = vunpack.c.h.b16 %v313
    %v2216 = vunpack.c.l.b16 %v314
    %v2217 = vunpack.c.h.b16 %v314
    %v2218 = vunpack.c.l.b16 %v315
    %v2219 = vunpack.c.h.b16 %v315
    %v2220 = vunpack.c.l.b16 %v316
    %v2221 = vunpack.c.h.b16 %v316
    %v2222 = vunpack.c.l.b16 %v317
    %v2223 = vunpack.c.h.b16 %v317
    %v2224 = vunpack.c.l.b16 %v318
    %v2225 = vunpack.c.h.b16 %v318
    %v2226 = vunpack.c.l.b16 %v319
    %v2227 = vunpack.c.h.b16 %v319
    %v2228 = vunpack.c.l.b16 %v320
    %v2229 = vunpack.c.h.b16 %v320
    %v2230 = vunpack.c.l.b16 %v321
    %v2231 = vunpack.c.h.b16 %v321
    %v2232 = vunpack.c.l.b16 %v322
    %v2233 = vunpack.c.h.b16 %v322
    %v2234 = vunpack.c.l.b16 %v323
    %v2235 = vunpack.c.h.b16 %v323
    %v2236 = vunpack.c.l.b16 %v324
    %v2237 = vunpack.c.h.b16 %v324
    %v2238 = vunpack.c.l.b16 %v325
    %v2239 = vunpack.c.h.b16 %v325
    %v2240 = vunpack.c.l.b16 %v326
    %v2241 = vunpack.c.h.b16 %v326
    %v2242 = vunpack.c.l.b16 %v327
    %v2243 = vunpack.c.h.b16 %v327
    %v2244 = vunpack.c.l.b16 %v328
    %v2245 = vunpack.c.h.b16 %v328
    %v2246 = vunpack.c.l.b16 %v329
    %v2247 = vunpack.c.h.b16 %v329
    %v2248 = vunpack.c.l.b16 %v330
    %v2249 = vunpack.c.h.b16 %v330
    %v2250 = vunpack.c.l.b16 %v331
    %v2251 = vunpack.c.h.b16 %v331
    %v2252 = vunpack.c.l.b16 %v332
    %v2253 = vunpack.c.h.b16 %v332
    %v2254 = vunpack.c.l.b16 %v333
    %v2255 = vunpack.c.h.b16 %v333
    %v2256 = vunpack.c.l.b16 %v334
    %v2257 = vunpack.c.h.b16 %v334
    %v2258 = vunpack.c.l.b16 %v335
    %v2259 = vunpack.c.h.b16 %v335
    %v2260 = vunpack.c.l.b16 %v336
    %v2261 = vunpack.c.h.b16 %v336
    %v2262 = vunpack.c.l.b16 %v337
    %v2263 = vunpack.c.h.b16 %v337
    %v2264 = vunpack.c.l.b16 %v338
    %v2265 = vunpack.c.h.b16 %v338
    %v2266 = vunpack.c.l.b16 %v339
    %v2267 = vunpack.c.h.b16 %v339
    %v2268 = vunpack.c.l.b16 %v340
    %v2269 = vunpack.c.h.b16 %v340
    %v2270 = vunpack.c.l.b16 %v341
    %v2271 = vunpack.c.h.b16 %v341
    %v2272 = vunpack.c.l.b16 %v342
    %v2273 = vunpack.c.h.b16 %v342
    %v2274 = vunpack.c.l.b16 %v343
    %v2275 = vunpack.c.h.b16 %v343
    %v2276 = vunpack.c.l.b16 %v344
    %v2277 = vunpack.c.h.b16 %v344
    %v2278 = vunpack.c.l.b16 %v345
    %v2279 = vunpack.c.h.b16 %v345
    %v2280 = vunpack.c.l.b16 %v346
    %v2281 = vunpack.c.h.b16 %v346
    %v2282 = vunpack.c.l.b16 %v347
    %v2283 = vunpack.c.h.b16 %v347
    %v2284 = vunpack.c.l.b16 %v348
    %v2285 = vunpack.c.h.b16 %v348
    %v2286 = vunpack.c.l.b16 %v349
    %v2287 = vunpack.c.h.b16 %v349
    %v2288 = vunpack.c.l.b16 %v350
    %v2289 = vunpack.c.h.b16 %v350
    %v2290 = vunpack.c.l.b16 %v351
    %v2291 = vunpack.c.h.b16 %v351
    %v2292 = vunpack.c.l.b16 %v352
    %v2293 = vunpack.c.h.b16 %v352
    %v2294 = vunpack.c.l.b16 %v353
    %v2295 = vunpack.c.h.b16 %v353
    %v2296 = vunpack.c.l.b16 %v354
    %v2297 = vunpack.c.h.b16 %v354
    %v2298 = vunpack.c.l.b16 %v355
    %v2299 = vunpack.c.h.b16 %v355
    %v2300 = vunpack.c.l.b16 %v356
    %v2301 = vunpack.c.h.b16 %v356
    %v2302 = vunpack.c.l.b16 %v357
    %v2303 = vunpack.c.h.b16 %v357
    %v2304 = vunpack.c.l.b16 %v358
    %v2305 = vunpack.c.h.b16 %v358
    %v2306 = vunpack.c.l.b16 %v359
    %v2307 = vunpack.c.h.b16 %v359
    %v2308 = vunpack.c.l.b16 %v360
    %v2309 = vunpack.c.h.b16 %v360
    %v2310 = vunpack.c.l.b16 %v361
    %v2311 = vunpack.c.h.b16 %v361
    %v2312 = vunpack.c.l.b16 %v362
    %v2313 = vunpack.c.h.b16 %v362
    %v2314 = vunpack.c.l.b16 %v363
    %v2315 = vunpack.c.h.b16 %v363
    %v2316 = vunpack.c.l.b16 %v364
    %v2317 = vunpack.c.h.b16 %v364
    %v2318 = vunpack.c.l.b16 %v365
    %v2319 = vunpack.c.h.b16 %v365
    %v2320 = vunpack.c.l.b16 %v366
    %v2321 = vunpack.c.h.b16 %v366
    %v2322 = vunpack.c.l.b16 %v367
    %v2323 = vunpack.c.h.b16 %v367
    %v2324 = vunpack.c.l.b16 %v368
    %v2325 = vunpack.c.h.b16 %v368
    %v2326 = vunpack.c.l.b16 %v369
    %v2327 = vunpack.c.h.b16 %v369
    %v2328 = vunpack.c.l.b16 %v370
    %v2329 = vunpack.c.h.b16 %v370
    %v2330 = vunpack.c.l.b16 %v371
    %v2331 = vunpack.c.h.b16 %v371
    %v2332 = vunpack.c.l.b16 %v372
    %v2333 = vunpack.c.h.b16 %v372
    %v2334 = vunpack.c.l.b16 %v373
    %v2335 = vunpack.c.h.b16 %v373
    %v2336 = vunpack.c.l.b16 %v374
    %v2337 = vunpack.c.h.b16 %v374
    %v2338 = vunpack.c.l.b16 %v375
    %v2339 = vunpack.c.h.b16 %v375
    %v2340 = vunpack.c.l.b16 %v376
    %v2341 = vunpack.c.h.b16 %v376
    %v2342 = vunpack.c.l.b16 %v377
    %v2343 = vunpack.c.h.b16 %v377
    %v2344 = vunpack.c.l.b16 %v378
    %v2345 = vunpack.c.h.b16 %v378
    %v2346 = vunpack.c.l.b16 %v379
    %v2347 = vunpack.c.h.b16 %v379
    %v2348 = vunpack.c.l.b16 %v380
    %v2349 = vunpack.c.h.b16 %v380
    %v2350 = vunpack.c.l.b16 %v381
    %v2351 = vunpack.c.h.b16 %v381
    %v2352 = vunpack.c.l.b16 %v382
    %v2353 = vunpack.c.h.b16 %v382
    %v2354 = vunpack.c.l.b16 %v383
    %v2355 = vunpack.c.h.b16 %v383
    %v2356 = vunpack.c.l.b16 %v384
    %v2357 = vunpack.c.h.b16 %v384
    %v2358 = vunpack.c.l.b16 %v385
    %v2359 = vunpack.c.h.b16 %v385
    %v2360 = vunpack.c.l.b16 %v386
    %v2361 = vunpack.c.h.b16 %v386
    %v2362 = vunpack.c.l.b16 %v387
    %v2363 = vunpack.c.h.b16 %v387
    %v2364 = vunpack.c.l.b16 %v388
    %v2365 = vunpack.c.h.b16 %v388
    %v2366 = vunpack.c.l.b16 %v389
    %v2367 = vunpack.c.h.b16 %v389
    %v2368 = vunpack.c.l.b16 %v390
    %v2369 = vunpack.c.h.b16 %v390
    %v2370 = vunpack.c.l.b16 %v391
    %v2371 = vunpack.c.h.b16 %v391
    %v2372 = vunpack.c.l.b16 %v392
    %v2373 = vunpack.c.h.b16 %v392
    %v2374 = vunpack.c.l.b16 %v393
    %v2375 = vunpack.c.h.b16 %v393
    %v2376 = vunpack.c.l.b16 %v394
    %v2377 = vunpack.c.h.b16 %v394
    %v2378 = vunpack.c.l.b16 %v395
    %v2379 = vunpack.c.h.b16 %v395
    %v2380 = vunpack.c.l.b16 %v396
    %v2381 = vunpack.c.h.b16 %v396
    %v2382 = vunpack.c.l.b16 %v397
    %v2383 = vunpack.c.h.b16 %v397
    %v2384 = vunpack.c.l.b16 %v398
    %v2385 = vunpack.c.h.b16 %v398
    %v2386 = vunpack.c.l.b16 %v399
    %v2387 = vunpack.c.h.b16 %v399
    %v2388 = vunpack.c.l.b16 %v400
    %v2389 = vunpack.c.h.b16 %v400
    %v2390 = vunpack.c.l.b16 %v401
    %v2391 = vunpack.c.h.b16 %v401
    %v2392 = vunpack.c.l.b16 %v402
    %v2393 = vunpack.c.h.b16 %v402
    %v2394 = vunpack.c.l.b16 %v403
    %v2395 = vunpack.c.h.b16 %v403
    %v2396 = vunpack.c.l.b16 %v404
    %v2397 = vunpack.c.h.b16 %v404
    %v2398 = vunpack.c.l.b16 %v405
    %v2399 = vunpack.c.h.b16 %v405
    %v2400 = vunpack.c.l.b16 %v406
    %v2401 = vunpack.c.h.b16 %v406
    %v2402 = vunpack.c.l.b16 %v407
    %v2403 = vunpack.c.h.b16 %v407
    %v2404 = vunpack.c.l.b16 %v408
    %v2405 = vunpack.c.h.b16 %v408
    %v2406 = vunpack.c.l.b16 %v409
    %v2407 = vunpack.c.h.b16 %v409
    %v2408 = vunpack.c.l.b16 %v410
    %v2409 = vunpack.c.h.b16 %v410
    %v2410 = vunpack.c.l.b16 %v411
    %v2411 = vunpack.c.h.b16 %v411
    %v2412 = vunpack.c.l.b16 %v412
    %v2413 = vunpack.c.h.b16 %v412
    %v2414 = vunpack.c.l.b16 %v413
    %v2415 = vunpack.c.h.b16 %v413
    %v2416 = vunpack.c.l.b16 %v414
    %v2417 = vunpack.c.h.b16 %v414
    %v2418 = vunpack.c.l.b16 %v415
    %v2419 = vunpack.c.h.b16 %v415
    %v2420 = vunpack.c.l.b16 %v416
    %v2421 = vunpack.c.h.b16 %v416
    %v2422 = vunpack.c.l.b16 %v417
    %v2423 = vunpack.c.h.b16 %v417
    %v2424 = vunpack.c.l.b16 %v418
    %v2425 = vunpack.c.h.b16 %v418
    %v2426 = vunpack.c.l.b16 %v419
    %v2427 = vunpack.c.h.b16 %v419
    %v2428 = vunpack.c.l.b16 %v420
    %v2429 = vunpack.c.h.b16 %v420
    %v2430 = vunpack.c.l.b16 %v421
    %v2431 = vunpack.c.h.b16 %v421
    %v2432 = vunpack.c.l.b16 %v422
    %v2433 = vunpack.c.h.b16 %v422
    %v2434 = vunpack.c.l.b16 %v423
    %v2435 = vunpack.c.h.b16 %v423
    %v2436 = vunpack.c.l.b16 %v424
    %v2437 = vunpack.c.h.b16 %v424
    %v2438 = vunpack.c.l.b16 %v425
    %v2439 = vunpack.c.h.b16 %v425
    %v2440 = vunpack.c.l.b16 %v426
    %v2441 = vunpack.c.h.b16 %v426
    %v2442 = vunpack.c.l.b16 %v427
    %v2443 = vunpack.c.h.b16 %v427
    %v2444 = vunpack.c.l.b16 %v428
    %v2445 = vunpack.c.h.b16 %v428
    %v2446 = vunpack.c.l.b16 %v429
    %v2447 = vunpack.c.h.b16 %v429
    %v2448 = vunpack.c.l.b16 %v430
    %v2449 = vunpack.c.h.b16 %v430
    %v2450 = vunpack.c.l.b16 %v431
    %v2451 = vunpack.c.h.b16 %v431
    %v2452 = vunpack.c.l.b16 %v432
    %v2453 = vunpack.c.h.b16 %v432
    %v2454 = vunpack.c.l.b16 %v433
    %v2455 = vunpack.c.h.b16 %v433
    %v2456 = vunpack.c.l.b16 %v434
    %v2457 = vunpack.c.h.b16 %v434
    %v2458 = vunpack.c.l.b16 %v435
    %v2459 = vunpack.c.h.b16 %v435
    %v2460 = vunpack.c.l.b16 %v436
    %v2461 = vunpack.c.h.b16 %v436
    %v2462 = vunpack.c.l.b16 %v437
    %v2463 = vunpack.c.h.b16 %v437
    %v2464 = vunpack.c.l.b16 %v438
    %v2465 = vunpack.c.h.b16 %v438
    %v2466 = vunpack.c.l.b16 %v439
    %v2467 = vunpack.c.h.b16 %v439
    %v2468 = vunpack.c.l.b16 %v440
    %v2469 = vunpack.c.h.b16 %v440
    %v2470 = vunpack.c.l.b16 %v441
    %v2471 = vunpack.c.h.b16 %v441
    %v2472 = vunpack.c.l.b16 %v442
    %v2473 = vunpack.c.h.b16 %v442
    %v2474 = vunpack.c.l.b16 %v443
    %v2475 = vunpack.c.h.b16 %v443
    %v2476 = vunpack.c.l.b16 %v444
    %v2477 = vunpack.c.h.b16 %v444
    %v2478 = vunpack.c.l.b16 %v445
    %v2479 = vunpack.c.h.b16 %v445
    %v2480 = vunpack.c.l.b16 %v446
    %v2481 = vunpack.c.h.b16 %v446
    %v2482 = vunpack.c.l.b16 %v447
    %v2483 = vunpack.c.h.b16 %v447
    %v2484 = vunpack.c.l.b16 %v448
    %v2485 = vunpack.c.h.b16 %v448
    %v2486 = vunpack.c.l.b16 %v449
    %v2487 = vunpack.c.h.b16 %v449
    %v2488 = vunpack.c.l.b16 %v450
    %v2489 = vunpack.c.h.b16 %v450
    %v2490 = vunpack.c.l.b16 %v451
    %v2491 = vunpack.c.h.b16 %v451
    %v2492 = vunpack.c.l.b16 %v452
    %v2493 = vunpack.c.h.b16 %v452
    %v2494 = vunpack.c.l.b16 %v453
    %v2495 = vunpack.c.h.b16 %v453
    %v2496 = vunpack.c.l.b16 %v454
    %v2497 = vunpack.c.h.b16 %v454
    %v2498 = vunpack.c.l.b16 %v455
    %v2499 = vunpack.c.h.b16 %v455
    %v2500 = vunpack.c.l.b16 %v456
    %v2501 = vunpack.c.h.b16 %v456
    %v2502 = vunpack.c.l.b16 %v457
    %v2503 = vunpack.c.h.b16 %v457
    %v2504 = vunpack.c.l.b16 %v458
    %v2505 = vunpack.c.h.b16 %v458
    %v2506 = vunpack.c.l.b16 %v459
    %v2507 = vunpack.c.h.b16 %v459
    %v2508 = vunpack.c.l.b16 %v460
    %v2509 = vunpack.c.h.b16 %v460
    %v2510 = vunpack.c.l.b16 %v461
    %v2511 = vunpack.c.h.b16 %v461
    %v2512 = vunpack.c.l.b16 %v462
    %v2513 = vunpack.c.h.b16 %v462
    %v2514 = vunpack.c.l.b16 %v463
    %v2515 = vunpack.c.h.b16 %v463
    %v2516 = vunpack.c.l.b16 %v464
    %v2517 = vunpack.c.h.b16 %v464
    %v2518 = vunpack.c.l.b16 %v465
    %v2519 = vunpack.c.h.b16 %v465
    %v2520 = vunpack.c.l.b16 %v466
    %v2521 = vunpack.c.h.b16 %v466
    %v2522 = vunpack.c.l.b16 %v467
    %v2523 = vunpack.c.h.b16 %v467
    %v2524 = vunpack.c.l.b16 %v468
    %v2525 = vunpack.c.h.b16 %v468
    %v2526 = vunpack.c.l.b16 %v469
    %v2527 = vunpack.c.h.b16 %v469
    %v2528 = vunpack.c.l.b16 %v470
    %v2529 = vunpack.c.h.b16 %v470
    %v2530 = vunpack.c.l.b16 %v471
    %v2531 = vunpack.c.h.b16 %v471
    %v2532 = vunpack.c.l.b16 %v472
    %v2533 = vunpack.c.h.b16 %v472
    %v2534 = vunpack.c.l.b16 %v473
    %v2535 = vunpack.c.h.b16 %v473
    %v2536 = vunpack.c.l.b16 %v474
    %v2537 = vunpack.c.h.b16 %v474
    %v2538 = vunpack.c.l.b16 %v475
    %v2539 = vunpack.c.h.b16 %v475
    %v2540 = vunpack.c.l.b16 %v476
    %v2541 = vunpack.c.h.b16 %v476
    %v2542 = vunpack.c.l.b16 %v477
    %v2543 = vunpack.c.h.b16 %v477
    %v2544 = vunpack.c.l.b16 %v478
    %v2545 = vunpack.c.h.b16 %v478
    %v2546 = vunpack.c.l.b16 %v479
    %v2547 = vunpack.c.h.b16 %v479
    %v2548 = vunpack.c.l.b16 %v480
    %v2549 = vunpack.c.h.b16 %v480
    %v2550 = vunpack.c.l.b16 %v481
    %v2551 = vunpack.c.h.b16 %v481
    %v2552 = vunpack.c.l.b16 %v482
    %v2553 = vunpack.c.h.b16 %v482
    %v2554 = vunpack.c.l.b16 %v483
    %v2555 = vunpack.c.h.b16 %v483
    %v2556 = vunpack.c.l.b16 %v484
    %v2557 = vunpack.c.h.b16 %v484
    %v2558 = vunpack.c.l.b16 %v485
    %v2559 = vunpack.c.h.b16 %v485
    %v2560 = vunpack.c.l.b16 %v486
    %v2561 = vunpack.c.h.b16 %v486
    %v2562 = vunpack.c.l.b16 %v487
    %v2563 = vunpack.c.h.b16 %v487
    %v2564 = vunpack.c.l.b16 %v488
    %v2565 = vunpack.c.h.b16 %v488
    %v2566 = vunpack.c.l.b16 %v489
    %v2567 = vunpack.c.h.b16 %v489
    %v2568 = vunpack.c.l.b16 %v490
    %v2569 = vunpack.c.h.b16 %v490
    %v2570 = vunpack.c.l.b16 %v491
    %v2571 = vunpack.c.h.b16 %v491
    %v2572 = vunpack.c.l.b16 %v492
    %v2573 = vunpack.c.h.b16 %v492
    %v2574 = vunpack.c.l.b16 %v493
    %v2575 = vunpack.c.h.b16 %v493
    %v2576 = vunpack.c.l.b16 %v494
    %v2577 = vunpack.c.h.b16 %v494
    %v2578 = vunpack.c.l.b16 %v495
    %v2579 = vunpack.c.h.b16 %v495
    %v2580 = vunpack.c.l.b16 %v496
    %v2581 = vunpack.c.h.b16 %v496
    %v2582 = vunpack.c.l.b16 %v497
    %v2583 = vunpack.c.h.b16 %v497
    %v2584 = vunpack.c.l.b16 %v498
    %v2585 = vunpack.c.h.b16 %v498
    %v2586 = vunpack.c.l.b16 %v499
    %v2587 = vunpack.c.h.b16 %v499
    %v2588 = vunpack.c.l.b16 %v500
    %v2589 = vunpack.c.h.b16 %v500
    %v2590 = vunpack.c.l.b16 %v501
    %v2591 = vunpack.c.h.b16 %v501
    %v2592 = vunpack.c.l.b16 %v502
    %v2593 = vunpack.c.h.b16 %v502
    %v2594 = vunpack.c.l.b16 %v503
    %v2595 = vunpack.c.h.b16 %v503
    %v2596 = vunpack.c.l.b16 %v504
    %v2597 = vunpack.c.h.b16 %v504
    %v2598 = vunpack.c.l.b16 %v505
    %v2599 = vunpack.c.h.b16 %v505
    %v2600 = vunpack.c.l.b16 %v506
    %v2601 = vunpack.c.h.b16 %v506
    %v2602 = vunpack.c.l.b16 %v507
    %v2603 = vunpack.c.h.b16 %v507
    %v2604 = vunpack.c.l.b16 %v508
    %v2605 = vunpack.c.h.b16 %v508
    %v2606 = vunpack.c.l.b16 %v509
    %v2607 = vunpack.c.h.b16 %v509
    %v2608 = vunpack.c.l.b16 %v510
    %v2609 = vunpack.c.h.b16 %v510
    %v2610 = vunpack.c.l.b16 %v511
    %v2611 = vunpack.c.h.b16 %v511
    %v2612 = vunpack.c.l.b16 %v512
    %v2613 = vunpack.c.h.b16 %v512
    %v2614 = vunpack.c.l.b16 %v513
    %v2615 = vunpack.c.h.b16 %v513
    %v2616 = vunpack.c.l.b16 %v514
    %v2617 = vunpack.c.h.b16 %v514
    %v2618 = vunpack.c.l.b16 %v515
    %v2619 = vunpack.c.h.b16 %v515
    %v2620 = vunpack.c.l.b16 %v516
    %v2621 = vunpack.c.h.b16 %v516
    %v2622 = vunpack.c.l.b16 %v517
    %v2623 = vunpack.c.h.b16 %v517
    %v2624 = vunpack.c.l.b16 %v518
    %v2625 = vunpack.c.h.b16 %v518
    %v2626 = vunpack.c.l.b16 %v519
    %v2627 = vunpack.c.h.b16 %v519
    %v2628 = vunpack.c.l.b16 %v520
    %v2629 = vunpack.c.h.b16 %v520
    %v2630 = vunpack.c.l.b16 %v521
    %v2631 = vunpack.c.h.b16 %v521
    %v2632 = vunpack.c.l.b16 %v522
    %v2633 = vunpack.c.h.b16 %v522
    %v2634 = vunpack.c.l.b16 %v523
    %v2635 = vunpack.c.h.b16 %v523
    %v2636 = vunpack.c.l.b16 %v524
    %v2637 = vunpack.c.h.b16 %v524
    %v2638 = vunpack.c.l.b16 %v525
    %v2639 = vunpack.c.h.b16 %v525
    %v2640 = vunpack.c.l.b16 %v526
    %v2641 = vunpack.c.h.b16 %v526
    %v2642 = vunpack.c.l.b16 %v527
    %v2643 = vunpack.c.h.b16 %v527
    %v2644 = vunpack.c.l.b16 %v528
    %v2645 = vunpack.c.h.b16 %v528
    %v2646 = vunpack.c.l.b16 %v529
    %v2647 = vunpack.c.h.b16 %v529
    %v2648 = vunpack.c.l.b16 %v530
    %v2649 = vunpack.c.h.b16 %v530
    %v2650 = vunpack.c.l.b16 %v531
    %v2651 = vunpack.c.h.b16 %v531
    %v2652 = vunpack.c.l.b16 %v532
    %v2653 = vunpack.c.h.b16 %v532
    %v2654 = vunpack.c.l.b16 %v533
    %v2655 = vunpack.c.h.b16 %v533
    %v2656 = vunpack.c.l.b16 %v534
    %v2657 = vunpack.c.h.b16 %v534
    %v2658 = vunpack.c.l.b16 %v535
    %v2659 = vunpack.c.h.b16 %v535
    %v2660 = vunpack.c.l.b16 %v536
    %v2661 = vunpack.c.h.b16 %v536
    %v2662 = vunpack.c.l.b16 %v537
    %v2663 = vunpack.c.h.b16 %v537
    %v2664 = vunpack.c.l.b16 %v538
    %v2665 = vunpack.c.h.b16 %v538
    %v2666 = vunpack.c.l.b16 %v539
    %v2667 = vunpack.c.h.b16 %v539
    %v2668 = vunpack.c.l.b16 %v540
    %v2669 = vunpack.c.h.b16 %v540
    %v2670 = vunpack.c.l.b16 %v541
    %v2671 = vunpack.c.h.b16 %v541
    %v2672 = vunpack.c.l.b16 %v542
    %v2673 = vunpack.c.h.b16 %v542
    %v2674 = vunpack.c.l.b16 %v543
    %v2675 = vunpack.c.h.b16 %v543
    %v2676 = vunpack.c.l.b16 %v544
    %v2677 = vunpack.c.h.b16 %v544
    %v2678 = vunpack.c.l.b16 %v545
    %v2679 = vunpack.c.h.b16 %v545
    %v2680 = vunpack.c.l.b16 %v546
    %v2681 = vunpack.c.h.b16 %v546
    %v2682 = vunpack.c.l.b16 %v547
    %v2683 = vunpack.c.h.b16 %v547
    %v2684 = vunpack.c.l.b16 %v548
    %v2685 = vunpack.c.h.b16 %v548
    %v2686 = vunpack.c.l.b16 %v549
    %v2687 = vunpack.c.h.b16 %v549
    %v2688 = vunpack.c.l.b16 %v550
    %v2689 = vunpack.c.h.b16 %v550
    %v2690 = vunpack.c.l.b16 %v551
    %v2691 = vunpack.c.h.b16 %v551
    %v2692 = vunpack.c.l.b16 %v552
    %v2693 = vunpack.c.h.b16 %v552
    %v2694 = vunpack.c.l.b16 %v553
    %v2695 = vunpack.c.h.b16 %v553
    %v2696 = vunpack.c.l.b16 %v554
    %v2697 = vunpack.c.h.b16 %v554
    %v2698 = vunpack.c.l.b16 %v555
    %v2699 = vunpack.c.h.b16 %v555
    %v2700 = vunpack.c.l.b16 %v556
    %v2701 = vunpack.c.h.b16 %v556
    %v2702 = vunpack.c.l.b16 %v557
    %v2703 = vunpack.c.h.b16 %v557
    %v2704 = vunpack.c.l.b16 %v558
    %v2705 = vunpack.c.h.b16 %v558
    %v2706 = vunpack.c.l.b16 %v559
    %v2707 = vunpack.c.h.b16 %v559
    %v2708 = vunpack.c.l.b16 %v560
    %v2709 = vunpack.c.h.b16 %v560
    %v2710 = vunpack.c.l.b16 %v561
    %v2711 = vunpack.c.h.b16 %v561
    %v2712 = vunpack.c.l.b16 %v562
    %v2713 = vunpack.c.h.b16 %v562
    %v2714 = vunpack.c.l.b16 %v563
    %v2715 = vunpack.c.h.b16 %v563
    %v2716 = vunpack.c.l.b16 %v564
    %v2717 = vunpack.c.h.b16 %v564
    %v2718 = vunpack.c.l.b16 %v565
    %v2719 = vunpack.c.h.b16 %v565
    %v2720 = vunpack.c.l.b16 %v566
    %v2721 = vunpack.c.h.b16 %v566
    %v2722 = vunpack.c.l.b16 %v567
    %v2723 = vunpack.c.h.b16 %v567
    %v2724 = vunpack.c.l.b16 %v568
    %v2725 = vunpack.c.h.b16 %v568
    %v2726 = vunpack.c.l.b16 %v569
    %v2727 = vunpack.c.h.b16 %v569
    %v2728 = vunpack.c.l.b16 %v570
    %v2729 = vunpack.c.h.b16 %v570
    %v2730 = vunpack.c.l.b16 %v571
    %v2731 = vunpack.c.h.b16 %v571
    %v2732 = vunpack.c.l.b16 %v572
    %v2733 = vunpack.c.h.b16 %v572
    %v2734 = vunpack.c.l.b16 %v573
    %v2735 = vunpack.c.h.b16 %v573
    %v2736 = vunpack.c.l.b16 %v574
    %v2737 = vunpack.c.h.b16 %v574
    %v2738 = vunpack.c.l.b16 %v575
    %v2739 = vunpack.c.h.b16 %v575
    %v2740 = vunpack.c.l.b16 %v576
    %v2741 = vunpack.c.h.b16 %v576
    %v2742 = vunpack.c.l.b16 %v577
    %v2743 = vunpack.c.h.b16 %v577
    %v2744 = vunpack.c.l.b16 %v578
    %v2745 = vunpack.c.h.b16 %v578
    %v2746 = vunpack.c.l.b16 %v579
    %v2747 = vunpack.c.h.b16 %v579
    %v2748 = vunpack.c.l.b16 %v580
    %v2749 = vunpack.c.h.b16 %v580
    %v2750 = vunpack.c.l.b16 %v581
    %v2751 = vunpack.c.h.b16 %v581
    %v2752 = vunpack.c.l.b16 %v582
    %v2753 = vunpack.c.h.b16 %v582
    %v2754 = vunpack.c.l.b16 %v583
    %v2755 = vunpack.c.h.b16 %v583
    %v2756 = vunpack.c.l.b16 %v584
    %v2757 = vunpack.c.h.b16 %v584
    %v2758 = vunpack.c.l.b16 %v585
    %v2759 = vunpack.c.h.b16 %v585
    %v2760 = vunpack.c.l.b16 %v586
    %v2761 = vunpack.c.h.b16 %v586
    %v2762 = vunpack.c.l.b16 %v587
    %v2763 = vunpack.c.h.b16 %v587
    %v2764 = vunpack.c.l.b16 %v588
    %v2765 = vunpack.c.h.b16 %v588
    %v2766 = vunpack.c.l.b16 %v589
    %v2767 = vunpack.c.h.b16 %v589
    %v2768 = vunpack.c.l.b16 %v590
    %v2769 = vunpack.c.h.b16 %v590
    %v2770 = vunpack.c.l.b16 %v591
    %v2771 = vunpack.c.h.b16 %v591
    %v2772 = vunpack.c.l.b16 %v592
    %v2773 = vunpack.c.h.b16 %v592
    %v2774 = vunpack.c.l.b16 %v593
    %v2775 = vunpack.c.h.b16 %v593
    %v2776 = vunpack.c.l.b16 %v594
    %v2777 = vunpack.c.h.b16 %v594
    %v2778 = vunpack.c.l.b16 %v595
    %v2779 = vunpack.c.h.b16 %v595
    %v2780 = vunpack.c.l.b16 %v596
    %v2781 = vunpack.c.h.b16 %v596
    %v2782 = vunpack.c.l.b16 %v597
    %v2783 = vunpack.c.h.b16 %v597
    %v2784 = vunpack.c.l.b16 %v598
    %v2785 = vunpack.c.h.b16 %v598
    %v2786 = vunpack.c.l.b16 %v599
    %v2787 = vunpack.c.h.b16 %v599
    %v2788 = vunpack.c.l.b16 %v600
    %v2789 = vunpack.c.h.b16 %v600
    %v2790 = vunpack.c.l.b16 %v601
    %v2791 = vunpack.c.h.b16 %v601
    %v2792 = vunpack.c.l.b16 %v602
    %v2793 = vunpack.c.h.b16 %v602
    %v2794 = vunpack.c.l.b16 %v603
    %v2795 = vunpack.c.h.b16 %v603
    %v2796 = vunpack.c.l.b16 %v604
    %v2797 = vunpack.c.h.b16 %v604
    %v2798 = vunpack.c.l.b16 %v605
    %v2799 = vunpack.c.h.b16 %v605
    %v2800 = vunpack.c.l.b16 %v606
    %v2801 = vunpack.c.h.b16 %v606
    %v2802 = vunpack.c.l.b16 %v607
    %v2803 = vunpack.c.h.b16 %v607
    %v2804 = vunpack.c.l.b16 %v608
    %v2805 = vunpack.c.h.b16 %v608
    %v2806 = vunpack.c.l.b16 %v609
    %v2807 = vunpack.c.h.b16 %v609
    %v2808 = vunpack.c.l.b16 %v610
    %v2809 = vunpack.c.h.b16 %v610
    %v2810 = vunpack.c.l.b16 %v611
    %v2811 = vunpack.c.h.b16 %v611
    %v2812 = vunpack.c.l.b16 %v612
    %v2813 = vunpack.c.h.b16 %v612
    %v2814 = vunpack.c.l.b16 %v613
    %v2815 = vunpack.c.h.b16 %v613
    %v2816 = vunpack.c.l.b16 %v614
    %v2817 = vunpack.c.h.b16 %v614
    %v2818 = vunpack.c.l.b16 %v615
    %v2819 = vunpack.c.h.b16 %v615
    %v2820 = vunpack.c.l.b16 %v616
    %v2821 = vunpack.c.h.b16 %v616
    %v2822 = vunpack.c.l.b16 %v617
    %v2823 = vunpack.c.h.b16 %v617
    %v2824 = vunpack.c.l.b16 %v618
    %v2825 = vunpack.c.h.b16 %v618
    %v2826 = vunpack.c.l.b16 %v619
    %v2827 = vunpack.c.h.b16 %v619
    %v2828 = vunpack.c.l.b16 %v620
    %v2829 = vunpack.c.h.b16 %v620
    %v2830 = vunpack.c.l.b16 %v621
    %v2831 = vunpack.c.h.b16 %v621
    %v2832 = vunpack.c.l.b16 %v622
    %v2833 = vunpack.c.h.b16 %v622
    %v2834 = vunpack.c.l.b16 %v623
    %v2835 = vunpack.c.h.b16 %v623
    %v2836 = vunpack.c.l.b16 %v624
    %v2837 = vunpack.c.h.b16 %v624
    %v2838 = vunpack.c.l.b16 %v625
    %v2839 = vunpack.c.h.b16 %v625
    %v2840 = vunpack.c.l.b16 %v626
    %v2841 = vunpack.c.h.b16 %v626
    %v2842 = vunpack.c.l.b16 %v627
    %v2843 = vunpack.c.h.b16 %v627
    %v2844 = vunpack.c.l.b16 %v628
    %v2845 = vunpack.c.h.b16 %v628
    %v2846 = vunpack.c.l.b16 %v629
    %v2847 = vunpack.c.h.b16 %v629
    %v2848 = vunpack.c.l.b16 %v630
    %v2849 = vunpack.c.h.b16 %v630
    %v2850 = vunpack.c.l.b16 %v631
    %v2851 = vunpack.c.h.b16 %v631
    %v2852 = vunpack.c.l.b16 %v632
    %v2853 = vunpack.c.h.b16 %v632
    %v2854 = vunpack.c.l.b16 %v633
    %v2855 = vunpack.c.h.b16 %v633
    %v2856 = vunpack.c.l.b16 %v634
    %v2857 = vunpack.c.h.b16 %v634
    %v2858 = vunpack.c.l.b16 %v635
    %v2859 = vunpack.c.h.b16 %v635
    %v2860 = vunpack.c.l.b16 %v636
    %v2861 = vunpack.c.h.b16 %v636
    %v2862 = vunpack.c.l.b16 %v637
    %v2863 = vunpack.c.h.b16 %v637
    %v2864 = vunpack.c.l.b16 %v638
    %v2865 = vunpack.c.h.b16 %v638
    %v2866 = vunpack.c.l.b16 %v639
    %v2867 = vunpack.c.h.b16 %v639
    %v2868 = vunpack.c.l.b16 %v640
    %v2869 = vunpack.c.h.b16 %v640
    %v2870 = vunpack.c.l.b16 %v641
    %v2871 = vunpack.c.h.b16 %v641
    %v2872 = vunpack.c.l.b16 %v642
    %v2873 = vunpack.c.h.b16 %v642
    %v2874 = vunpack.c.l.b16 %v643
    %v2875 = vunpack.c.h.b16 %v643
    %v2876 = vunpack.c.l.b16 %v644
    %v2877 = vunpack.c.h.b16 %v644
    %v2878 = vunpack.c.l.b16 %v645
    %v2879 = vunpack.c.h.b16 %v645
    %v2880 = vunpack.c.l.b16 %v646
    %v2881 = vunpack.c.h.b16 %v646
    %v2882 = vunpack.c.l.b16 %v647
    %v2883 = vunpack.c.h.b16 %v647
    %v2884 = vunpack.c.l.b16 %v648
    %v2885 = vunpack.c.h.b16 %v648
    %v2886 = vunpack.c.l.b16 %v649
    %v2887 = vunpack.c.h.b16 %v649
    %v2888 = vunpack.c.l.b16 %v650
    %v2889 = vunpack.c.h.b16 %v650
    %v2890 = vunpack.c.l.b16 %v651
    %v2891 = vunpack.c.h.b16 %v651
    %v2892 = vunpack.c.l.b16 %v652
    %v2893 = vunpack.c.h.b16 %v652
    %v2894 = vunpack.c.l.b16 %v653
    %v2895 = vunpack.c.h.b16 %v653
    %v2896 = vunpack.c.l.b16 %v654
    %v2897 = vunpack.c.h.b16 %v654
    %v2898 = vunpack.c.l.b16 %v655
    %v2899 = vunpack.c.h.b16 %v655
    %v2900 = vunpack.c.l.b16 %v656
    %v2901 = vunpack.c.h.b16 %v656
    %v2902 = vunpack.c.l.b16 %v657
    %v2903 = vunpack.c.h.b16 %v657
    %v2904 = vunpack.c.l.b16 %v658
    %v2905 = vunpack.c.h.b16 %v658
    %v2906 = vunpack.c.l.b16 %v659
    %v2907 = vunpack.c.h.b16 %v659
    %v2908 = vunpack.c.l.b16 %v660
    %v2909 = vunpack.c.h.b16 %v660
    %v2910 = vunpack.c.l.b16 %v661
    %v2911 = vunpack.c.h.b16 %v661
    %v2912 = vunpack.c.l.b16 %v662
    %v2913 = vunpack.c.h.b16 %v662
    %v2914 = vunpack.c.l.b16 %v663
    %v2915 = vunpack.c.h.b16 %v663
    %v2916 = vunpack.c.l.b16 %v664
    %v2917 = vunpack.c.h.b16 %v664
    %v2918 = vunpack.c.l.b16 %v665
    %v2919 = vunpack.c.h.b16 %v665
    %v2920 = vunpack.c.l.b16 %v666
    %v2921 = vunpack.c.h.b16 %v666
    %v2922 = vunpack.c.l.b16 %v667
    %v2923 = vunpack.c.h.b16 %v667
    %v2924 = vunpack.c.l.b16 %v668
    %v2925 = vunpack.c.h.b16 %v668
    %v2926 = vunpack.c.l.b16 %v669
    %v2927 = vunpack.c.h.b16 %v669
    %v2928 = vunpack.c.l.b16 %v670
    %v2929 = vunpack.c.h.b16 %v670
    %v2930 = vunpack.c.l.b16 %v671
    %v2931 = vunpack.c.h.b16 %v671
    %v2932 = vunpack.c.l.b16 %v672
    %v2933 = vunpack.c.h.b16 %v672
    %v2934 = vunpack.c.l.b16 %v673
    %v2935 = vunpack.c.h.b16 %v673
    %v2936 = vunpack.c.l.b16 %v674
    %v2937 = vunpack.c.h.b16 %v674
    %v2938 = vunpack.c.l.b16 %v675
    %v2939 = vunpack.c.h.b16 %v675
    %v2940 = vunpack.c.l.b16 %v676
    %v2941 = vunpack.c.h.b16 %v676
    %v2942 = vunpack.c.l.b16 %v677
    %v2943 = vunpack.c.h.b16 %v677
    %v2944 = vunpack.c.l.b16 %v678
    %v2945 = vunpack.c.h.b16 %v678
    %v2946 = vunpack.c.l.b16 %v679
    %v2947 = vunpack.c.h.b16 %v679
    %v2948 = vunpack.c.l.b16 %v680
    %v2949 = vunpack.c.h.b16 %v680
    %v2950 = vunpack.c.l.b16 %v681
    %v2951 = vunpack.c.h.b16 %v681
    %v2952 = vunpack.c.l.b16 %v682
    %v2953 = vunpack.c.h.b16 %v682
    %v2954 = vunpack.c.l.b16 %v683
    %v2955 = vunpack.c.h.b16 %v683
    %v2956 = vunpack.c.l.b16 %v684
    %v2957 = vunpack.c.h.b16 %v684
    %v2958 = vunpack.c.l.b16 %v685
    %v2959 = vunpack.c.h.b16 %v685
    %v2960 = vunpack.c.l.b16 %v686
    %v2961 = vunpack.c.h.b16 %v686
    %v2962 = vunpack.c.l.b16 %v687
    %v2963 = vunpack.c.h.b16 %v687
    %v2964 = vunpack.c.l.b16 %v688
    %v2965 = vunpack.c.h.b16 %v688
    %v2966 = vunpack.c.l.b16 %v689
    %v2967 = vunpack.c.h.b16 %v689
    %v2968 = vunpack.c.l.b16 %v690
    %v2969 = vunpack.c.h.b16 %v690
    %v2970 = vunpack.c.l.b16 %v691
    %v2971 = vunpack.c.h.b16 %v691
    %v2972 = vunpack.c.l.b16 %v692
    %v2973 = vunpack.c.h.b16 %v692
    %v2974 = vunpack.c.l.b16 %v693
    %v2975 = vunpack.c.h.b16 %v693
    %v2976 = vunpack.c.l.b16 %v694
    %v2977 = vunpack.c.h.b16 %v694
    %v2978 = vunpack.c.l.b16 %v695
    %v2979 = vunpack.c.h.b16 %v695
    %v2980 = vunpack.c.l.b16 %v696
    %v2981 = vunpack.c.h.b16 %v696
    %v2982 = vunpack.c.l.b16 %v697
    %v2983 = vunpack.c.h.b16 %v697
    %v2984 = vunpack.c.l.b16 %v698
    %v2985 = vunpack.c.h.b16 %v698
    %v2986 = vunpack.c.l.b16 %v699
    %v2987 = vunpack.c.h.b16 %v699
    %v2988 = vunpack.c.l.b16 %v700
    %v2989 = vunpack.c.h.b16 %v700
    %v2990 = vunpack.c.l.b16 %v701
    %v2991 = vunpack.c.h.b16 %v701
    %v2992 = vunpack.c.l.b16 %v702
    %v2993 = vunpack.c.h.b16 %v702
    %v2994 = vunpack.c.l.b16 %v703
    %v2995 = vunpack.c.h.b16 %v703
    %v2996 = vunpack.c.l.b16 %v704
    %v2997 = vunpack.c.h.b16 %v704
    %v2998 = vunpack.c.l.b16 %v705
    %v2999 = vunpack.c.h.b16 %v705
    %v3000 = vunpack.c.l.b16 %v706
    %v3001 = vunpack.c.h.b16 %v706
    %v3002 = vunpack.c.l.b16 %v707
    %v3003 = vunpack.c.h.b16 %v707
    %v3004 = vunpack.c.l.b16 %v708
    %v3005 = vunpack.c.h.b16 %v708
    %v3006 = vunpack.c.l.b16 %v709
    %v3007 = vunpack.c.h.b16 %v709
    %v3008 = vunpack.c.l.b16 %v710
    %v3009 = vunpack.c.h.b16 %v710
    %v3010 = vunpack.c.l.b16 %v711
    %v3011 = vunpack.c.h.b16 %v711
    %v3012 = vunpack.c.l.b16 %v712
    %v3013 = vunpack.c.h.b16 %v712
    %v3014 = vunpack.c.l.b16 %v713
    %v3015 = vunpack.c.h.b16 %v713
    %v3016 = vunpack.c.l.b16 %v714
    %v3017 = vunpack.c.h.b16 %v714
    %v3018 = vunpack.c.l.b16 %v715
    %v3019 = vunpack.c.h.b16 %v715
    %v3020 = vunpack.c.l.b16 %v716
    %v3021 = vunpack.c.h.b16 %v716
    %v3022 = vunpack.c.l.b16 %v717
    %v3023 = vunpack.c.h.b16 %v717
    %v3024 = vunpack.c.l.b16 %v718
    %v3025 = vunpack.c.h.b16 %v718
    %v3026 = vunpack.c.l.b16 %v719
    %v3027 = vunpack.c.h.b16 %v719
    %v3028 = vunpack.c.l.b16 %v720
    %v3029 = vunpack.c.h.b16 %v720
    %v3030 = vunpack.c.l.b16 %v721
    %v3031 = vunpack.c.h.b16 %v721
    %v3032 = vunpack.c.l.b16 %v722
    %v3033 = vunpack.c.h.b16 %v722
    %v3034 = vunpack.c.l.b16 %v723
    %v3035 = vunpack.c.h.b16 %v723
    %v3036 = vunpack.c.l.b16 %v724
    %v3037 = vunpack.c.h.b16 %v724
    %v3038 = vunpack.c.l.b16 %v725
    %v3039 = vunpack.c.h.b16 %v725
    %v3040 = vunpack.c.l.b16 %v726
    %v3041 = vunpack.c.h.b16 %v726
    %v3042 = vunpack.c.l.b16 %v727
    %v3043 = vunpack.c.h.b16 %v727
    %v3044 = vunpack.c.l.b16 %v728
    %v3045 = vunpack.c.h.b16 %v728
    %v3046 = vunpack.c.l.b16 %v729
    %v3047 = vunpack.c.h.b16 %v729
    %v3048 = vunpack.c.l.b16 %v730
    %v3049 = vunpack.c.h.b16 %v730
    %v3050 = vunpack.c.l.b16 %v731
    %v3051 = vunpack.c.h.b16 %v731
    %v3052 = vunpack.c.l.b16 %v732
    %v3053 = vunpack.c.h.b16 %v732
    %v3054 = vunpack.c.l.b16 %v733
    %v3055 = vunpack.c.h.b16 %v733
    %v3056 = vunpack.c.l.b16 %v734
    %v3057 = vunpack.c.h.b16 %v734
    %v3058 = vunpack.c.l.b16 %v735
    %v3059 = vunpack.c.h.b16 %v735
    %v3060 = vunpack.c.l.b16 %v736
    %v3061 = vunpack.c.h.b16 %v736
    %v3062 = vunpack.c.l.b16 %v737
    %v3063 = vunpack.c.h.b16 %v737
    %v3064 = vunpack.c.l.b16 %v738
    %v3065 = vunpack.c.h.b16 %v738
    %v3066 = vunpack.c.l.b16 %v739
    %v3067 = vunpack.c.h.b16 %v739
    %v3068 = vunpack.c.l.b16 %v740
    %v3069 = vunpack.c.h.b16 %v740
    %v3070 = vunpack.c.l.b16 %v741
    %v3071 = vunpack.c.h.b16 %v741
    %v3072 = vunpack.c.l.b16 %v742
    %v3073 = vunpack.c.h.b16 %v742
    %v3074 = vunpack.c.l.b16 %v743
    %v3075 = vunpack.c.h.b16 %v743
    %v3076 = vunpack.c.l.b16 %v744
    %v3077 = vunpack.c.h.b16 %v744
    %v3078 = vunpack.c.l.b16 %v745
    %v3079 = vunpack.c.h.b16 %v745
    %v3080 = vunpack.c.l.b16 %v746
    %v3081 = vunpack.c.h.b16 %v746
    %v3082 = vunpack.c.l.b16 %v747
    %v3083 = vunpack.c.h.b16 %v747
    %v3084 = vunpack.c.l.b16 %v748
    %v3085 = vunpack.c.h.b16 %v748
    %v3086 = vunpack.c.l.b16 %v749
    %v3087 = vunpack.c.h.b16 %v749
    %v3088 = vunpack.c.l.b16 %v750
    %v3089 = vunpack.c.h.b16 %v750
    %v3090 = vunpack.c.l.b16 %v751
    %v3091 = vunpack.c.h.b16 %v751
    %v3092 = vunpack.c.l.b16 %v752
    %v3093 = vunpack.c.h.b16 %v752
    %v3094 = vunpack.c.l.b16 %v753
    %v3095 = vunpack.c.h.b16 %v753
    %v3096 = vunpack.c.l.b16 %v754
    %v3097 = vunpack.c.h.b16 %v754
    %v3098 = vunpack.c.l.b16 %v755
    %v3099 = vunpack.c.h.b16 %v755
    %v3100 = vunpack.c.l.b16 %v756
    %v3101 = vunpack.c.h.b16 %v756
    %v3102 = vunpack.c.l.b16 %v757
    %v3103 = vunpack.c.h.b16 %v757
    %v3104 = vunpack.c.l.b16 %v758
    %v3105 = vunpack.c.h.b16 %v758
    %v3106 = vunpack.c.l.b16 %v759
    %v3107 = vunpack.c.h.b16 %v759
    %v3108 = vunpack.c.l.b16 %v760
    %v3109 = vunpack.c.h.b16 %v760
    %v3110 = vunpack.c.l.b16 %v761
    %v3111 = vunpack.c.h.b16 %v761
    %v3112 = vunpack.c.l.b16 %v762
    %v3113 = vunpack.c.h.b16 %v762
    %v3114 = vunpack.c.l.b16 %v763
    %v3115 = vunpack.c.h.b16 %v763
    %v3116 = vunpack.c.l.b16 %v764
    %v3117 = vunpack.c.h.b16 %v764
    %v3118 = vunpack.c.l.b16 %v765
    %v3119 = vunpack.c.h.b16 %v765
    %v3120 = vunpack.c.l.b16 %v766
    %v3121 = vunpack.c.h.b16 %v766
    %v3122 = vunpack.c.l.b16 %v767
    %v3123 = vunpack.c.h.b16 %v767
    %v3124 = vunpack.c.l.b16 %v768
    %v3125 = vunpack.c.h.b16 %v768
    %v3126 = vunpack.c.l.b16 %v769
    %v3127 = vunpack.c.h.b16 %v769
    %v3128 = vunpack.c.l.b16 %v770
    %v3129 = vunpack.c.h.b16 %v770
    %v3130 = vunpack.c.l.b16 %v771
    %v3131 = vunpack.c.h.b16 %v771
    %v3132 = vunpack.c.l.b16 %v772
    %v3133 = vunpack.c.h.b16 %v772
    %v3134 = vunpack.c.l.b16 %v773
    %v3135 = vunpack.c.h.b16 %v773
    %v3136 = vunpack.c.l.b16 %v774
    %v3137 = vunpack.c.h.b16 %v774
    %v3138 = vunpack.c.l.b16 %v775
    %v3139 = vunpack.c.h.b16 %v775
    %v3140 = vunpack.c.l.b16 %v776
    %v3141 = vunpack.c.h.b16 %v776
    %v3142 = vunpack.c.l.b16 %v777
    %v3143 = vunpack.c.h.b16 %v777
    %v3144 = vunpack.c.l.b16 %v778
    %v3145 = vunpack.c.h.b16 %v778
    %v3146 = vunpack.c.l.b16 %v779
    %v3147 = vunpack.c.h.b16 %v779
    %v3148 = vunpack.c.l.b16 %v780
    %v3149 = vunpack.c.h.b16 %v780
    %v3150 = vunpack.c.l.b16 %v781
    %v3151 = vunpack.c.h.b16 %v781
    %v3152 = vunpack.c.l.b16 %v782
    %v3153 = vunpack.c.h.b16 %v782
    %v3154 = vunpack.c.l.b16 %v783
    %v3155 = vunpack.c.h.b16 %v783
    %v3156 = vunpack.c.l.b16 %v784
    %v3157 = vunpack.c.h.b16 %v784
    %v3158 = vunpack.c.l.b16 %v785
    %v3159 = vunpack.c.h.b16 %v785
    %v3160 = vunpack.c.l.b16 %v786
    %v3161 = vunpack.c.h.b16 %v786
    %v3162 = vunpack.c.l.b16 %v787
    %v3163 = vunpack.c.h.b16 %v787
    %v3164 = vunpack.c.l.b16 %v788
    %v3165 = vunpack.c.h.b16 %v788
    %v3166 = vunpack.c.l.b16 %v789
    %v3167 = vunpack.c.h.b16 %v789
    %v3168 = vunpack.c.l.b16 %v790
    %v3169 = vunpack.c.h.b16 %v790
    %v3170 = vunpack.c.l.b16 %v791
    %v3171 = vunpack.c.h.b16 %v791
    %v3172 = vunpack.c.l.b16 %v792
    %v3173 = vunpack.c.h.b16 %v792
    %v3174 = vunpack.c.l.b16 %v793
    %v3175 = vunpack.c.h.b16 %v793
    %v3176 = vunpack.c.l.b16 %v794
    %v3177 = vunpack.c.h.b16 %v794
    %v3178 = vunpack.c.l.b16 %v795
    %v3179 = vunpack.c.h.b16 %v795
    %v3180 = vunpack.c.l.b16 %v796
    %v3181 = vunpack.c.h.b16 %v796
    %v3182 = vunpack.c.l.b16 %v797
    %v3183 = vunpack.c.h.b16 %v797
    %v3184 = vunpack.c.l.b16 %v798
    %v3185 = vunpack.c.h.b16 %v798
    %v3186 = vunpack.c.l.b16 %v799
    %v3187 = vunpack.c.h.b16 %v799
    %v3188 = vunpack.c.l.b16 %v800
    %v3189 = vunpack.c.h.b16 %v800
    %v3190 = vunpack.c.l.b16 %v801
    %v3191 = vunpack.c.h.b16 %v801
    %v3192 = vunpack.c.l.b16 %v802
    %v3193 = vunpack.c.h.b16 %v802
    %v3194 = vunpack.c.l.b16 %v803
    %v3195 = vunpack.c.h.b16 %v803
    %v3196 = vunpack.c.l.b16 %v804
    %v3197 = vunpack.c.h.b16 %v804
    %v3198 = vunpack.c.l.b16 %v805
    %v3199 = vunpack.c.h.b16 %v805
    %v3200 = vunpack.c.l.b16 %v806
    %v3201 = vunpack.c.h.b16 %v806
    %v3202 = vunpack.c.l.b16 %v807
    %v3203 = vunpack.c.h.b16 %v807
    %v3204 = vunpack.c.l.b16 %v808
    %v3205 = vunpack.c.h.b16 %v808
    %v3206 = vunpack.c.l.b16 %v809
    %v3207 = vunpack.c.h.b16 %v809
    %v3208 = vunpack.c.l.b16 %v810
    %v3209 = vunpack.c.h.b16 %v810
    %v3210 = vunpack.c.l.b16 %v811
    %v3211 = vunpack.c.h.b16 %v811
    %v3212 = vunpack.c.l.b16 %v812
    %v3213 = vunpack.c.h.b16 %v812
    %v3214 = vunpack.c.l.b16 %v813
    %v3215 = vunpack.c.h.b16 %v813
    %v3216 = vunpack.c.l.b16 %v814
    %v3217 = vunpack.c.h.b16 %v814
    %v3218 = vunpack.c.l.b16 %v815
    %v3219 = vunpack.c.h.b16 %v815
    %v3220 = vunpack.c.l.b16 %v816
    %v3221 = vunpack.c.h.b16 %v816
    %v3222 = vunpack.c.l.b16 %v817
    %v3223 = vunpack.c.h.b16 %v817
    %v3224 = vunpack.c.l.b16 %v818
    %v3225 = vunpack.c.h.b16 %v818
    %v3226 = vunpack.c.l.b16 %v819
    %v3227 = vunpack.c.h.b16 %v819
    %v3228 = vunpack.c.l.b16 %v820
    %v3229 = vunpack.c.h.b16 %v820
    %v3230 = vunpack.c.l.b16 %v821
    %v3231 = vunpack.c.h.b16 %v821
    %v3232 = vunpack.c.l.b16 %v822
    %v3233 = vunpack.c.h.b16 %v822
    %v3234 = vunpack.c.l.b16 %v823
    %v3235 = vunpack.c.h.b16 %v823
    %v3236 = vunpack.c.l.b16 %v824
    %v3237 = vunpack.c.h.b16 %v824
    %v3238 = vunpack.c.l.b16 %v825
    %v3239 = vunpack.c.h.b16 %v825
    %v3240 = vunpack.c.l.b16 %v826
    %v3241 = vunpack.c.h.b16 %v826
    %v3242 = vunpack.c.l.b16 %v827
    %v3243 = vunpack.c.h.b16 %v827
    %v3244 = vunpack.c.l.b16 %v828
    %v3245 = vunpack.c.h.b16 %v828
    %v3246 = vunpack.c.l.b16 %v829
    %v3247 = vunpack.c.h.b16 %v829
    %v3248 = vunpack.c.l.b16 %v830
    %v3249 = vunpack.c.h.b16 %v830
    %v3250 = vunpack.c.l.b16 %v831
    %v3251 = vunpack.c.h.b16 %v831
    %v3252 = vunpack.c.l.b16 %v832
    %v3253 = vunpack.c.h.b16 %v832
    %v3254 = vunpack.c.l.b16 %v833
    %v3255 = vunpack.c.h.b16 %v833
    %v3256 = vunpack.c.l.b16 %v834
    %v3257 = vunpack.c.h.b16 %v834
    %v3258 = vunpack.c.l.b16 %v835
    %v3259 = vunpack.c.h.b16 %v835
    %v3260 = vunpack.c.l.b16 %v836
    %v3261 = vunpack.c.h.b16 %v836
    %v3262 = vunpack.c.l.b16 %v837
    %v3263 = vunpack.c.h.b16 %v837
    %v3264 = vunpack.c.l.b16 %v838
    %v3265 = vunpack.c.h.b16 %v838
    %v3266 = vunpack.c.l.b16 %v839
    %v3267 = vunpack.c.h.b16 %v839
    %v3268 = vunpack.c.l.b16 %v840
    %v3269 = vunpack.c.h.b16 %v840
    %v3270 = vunpack.c.l.b16 %v841
    %v3271 = vunpack.c.h.b16 %v841
    %v3272 = vunpack.c.l.b16 %v842
    %v3273 = vunpack.c.h.b16 %v842
    %v3274 = vunpack.c.l.b16 %v843
    %v3275 = vunpack.c.h.b16 %v843
    %v3276 = vunpack.c.l.b16 %v844
    %v3277 = vunpack.c.h.b16 %v844
    %v3278 = vunpack.c.l.b16 %v845
    %v3279 = vunpack.c.h.b16 %v845
    %v3280 = vunpack.c.l.b16 %v846
    %v3281 = vunpack.c.h.b16 %v846
    %v3282 = vunpack.c.l.b16 %v847
    %v3283 = vunpack.c.h.b16 %v847
    %v3284 = vunpack.c.l.b16 %v848
    %v3285 = vunpack.c.h.b16 %v848
    %v3286 = vunpack.c.l.b16 %v849
    %v3287 = vunpack.c.h.b16 %v849
    %v3288 = vunpack.c.l.b16 %v850
    %v3289 = vunpack.c.h.b16 %v850
    %v3290 = vunpack.c.l.b16 %v851
    %v3291 = vunpack.c.h.b16 %v851
    %v3292 = vunpack.c.l.b16 %v852
    %v3293 = vunpack.c.h.b16 %v852
    %v3294 = vunpack.c.l.b16 %v853
    %v3295 = vunpack.c.h.b16 %v853
    %v3296 = vunpack.c.l.b16 %v854
    %v3297 = vunpack.c.h.b16 %v854
    %v3298 = vunpack.c.l.b16 %v855
    %v3299 = vunpack.c.h.b16 %v855
    %v3300 = vunpack.c.l.b16 %v856
    %v3301 = vunpack.c.h.b16 %v856
    %v3302 = vunpack.c.l.b16 %v857
    %v3303 = vunpack.c.h.b16 %v857
    %v3304 = vunpack.c.l.b16 %v858
    %v3305 = vunpack.c.h.b16 %v858
    %v3306 = vunpack.c.l.b16 %v859
    %v3307 = vunpack.c.h.b16 %v859
    %v3308 = vunpack.c.l.b16 %v860
    %v3309 = vunpack.c.h.b16 %v860
    %v3310 = vunpack.c.l.b16 %v861
    %v3311 = vunpack.c.h.b16 %v861
    %v3312 = vunpack.c.l.b16 %v862
    %v3313 = vunpack.c.h.b16 %v862
    %v3314 = vunpack.c.l.b16 %v863
    %v3315 = vunpack.c.h.b16 %v863
    %v3316 = vunpack.c.l.b16 %v864
    %v3317 = vunpack.c.h.b16 %v864
    %v3318 = vunpack.c.l.b16 %v865
    %v3319 = vunpack.c.h.b16 %v865
    %v3320 = vunpack.c.l.b16 %v866
    %v3321 = vunpack.c.h.b16 %v866
    %v3322 = vunpack.c.l.b16 %v867
    %v3323 = vunpack.c.h.b16 %v867
    %v3324 = vunpack.c.l.b16 %v868
    %v3325 = vunpack.c.h.b16 %v868
    %v3326 = vunpack.c.l.b16 %v869
    %v3327 = vunpack.c.h.b16 %v869
    %v3328 = vunpack.c.l.b16 %v870
    %v3329 = vunpack.c.h.b16 %v870
    %v3330 = vunpack.c.l.b16 %v871
    %v3331 = vunpack.c.h.b16 %v871
    %v3332 = vpack.c.b16 %v1780, %v1764
    %v3333 = vpack.c.b16 %v1781, %v1765
    %v3334 = vpack.c.b16 %v1782, %v1766
    %v3335 = vpack.c.b16 %v1783, %v1767
    %v3336 = vpack.c.b16 %v1784, %v1768
    %v3337 = vpack.c.b16 %v1785, %v1769
    %v3338 = vpack.c.b16 %v1786, %v1770
    %v3339 = vpack.c.b16 %v1787, %v1771
    %v3340 = vpack.c.b16 %v1788, %v1772
    %v3341 = vpack.c.b16 %v1789, %v1773
    %v3342 = vpack.c.b16 %v1790, %v1774
    %v3343 = vpack.c.b16 %v1791, %v1775
    %v3344 = vpack.c.b16 %v1792, %v1776
    %v3345 = vpack.c.b16 %v1793, %v1777
    %v3346 = vpack.c.b16 %v1794, %v1778
    %v3347 = vpack.c.b16 %v1795, %v1779
    %v3348 = vpack.c.b16 %v1812, %v1796
    %v3349 = vpack.c.b16 %v1813, %v1797
    %v3350 = vpack.c.b16 %v1814, %v1798
    %v3351 = vpack.c.b16 %v1815, %v1799
    %v3352 = vpack.c.b16 %v1816, %v1800
    %v3353 = vpack.c.b16 %v1817, %v1801
    %v3354 = vpack.c.b16 %v1818, %v1802
    %v3355 = vpack.c.b16 %v1819, %v1803
    %v3356 = vpack.c.b16 %v1820, %v1804
    %v3357 = vpack.c.b16 %v1821, %v1805
    %v3358 = vpack.c.b16 %v1822, %v1806
    %v3359 = vpack.c.b16 %v1823, %v1807
    %v3360 = vpack.c.b16 %v1824, %v1808
    %v3361 = vpack.c.b16 %v1825, %v1809
    %v3362 = vpack.c.b16 %v1826, %v1810
    %v3363 = vpack.c.b16 %v1827, %v1811
    %v3364 = vpack.c.b16 %v1844, %v1828
    %v3365 = vpack.c.b16 %v1845, %v1829
    %v3366 = vpack.c.b16 %v1846, %v1830
    %v3367 = vpack.c.b16 %v1847, %v1831
    %v3368 = vpack.c.b16 %v1848, %v1832
    %v3369 = vpack.c.b16 %v1849, %v1833
    %v3370 = vpack.c.b16 %v1850, %v1834
    %v3371 = vpack.c.b16 %v1851, %v1835
    %v3372 = vpack.c.b16 %v1852, %v1836
    %v3373 = vpack.c.b16 %v1853, %v1837
    %v3374 = vpack.c.b16 %v1854, %v1838
    %v3375 = vpack.c.b16 %v1855, %v1839
    %v3376 = vpack.c.b16 %v1856, %v1840
    %v3377 = vpack.c.b16 %v1857, %v1841
    %v3378 = vpack.c.b16 %v1858, %v1842
    %v3379 = vpack.c.b16 %v1859, %v1843
    %v3380 = vpack.c.b16 %v1876, %v1860
    %v3381 = vpack.c.b16 %v1877, %v1861
    %v3382 = vpack.c.b16 %v1878, %v1862
    %v3383 = vpack.c.b16 %v1879, %v1863
    %v3384 = vpack.c.b16 %v1880, %v1864
    %v3385 = vpack.c.b16 %v1881, %v1865
    %v3386 = vpack.c.b16 %v1882, %v1866
    %v3387 = vpack.c.b16 %v1883, %v1867
    %v3388 = vpack.c.b16 %v1884, %v1868
    %v3389 = vpack.c.b16 %v1885, %v1869
    %v3390 = vpack.c.b16 %v1886, %v1870
    %v3391 = vpack.c.b16 %v1887, %v1871
    %v3392 = vpack.c.b16 %v1888, %v1872
    %v3393 = vpack.c.b16 %v1889, %v1873
    %v3394 = vpack.c.b16 %v1890, %v1874
    %v3395 = vpack.c.b16 %v1891, %v1875
    %v3396 = vpack.c.b16 %v1908, %v1892
    %v3397 = vpack.c.b16 %v1909, %v1893
    %v3398 = vpack.c.b16 %v1910, %v1894
    %v3399 = vpack.c.b16 %v1911, %v1895
    %v3400 = vpack.c.b16 %v1912, %v1896
    %v3401 = vpack.c.b16 %v1913, %v1897
    %v3402 = vpack.c.b16 %v1914, %v1898
    %v3403 = vpack.c.b16 %v1915, %v1899
    %v3404 = vpack.c.b16 %v1916, %v1900
    %v3405 = vpack.c.b16 %v1917, %v1901
    %v3406 = vpack.c.b16 %v1918, %v1902
    %v3407 = vpack.c.b16 %v1919, %v1903
    %v3408 = vpack.c.b16 %v1920, %v1904
    %v3409 = vpack.c.b16 %v1921, %v1905
    %v3410 = vpack.c.b16 %v1922, %v1906
    %v3411 = vpack.c.b16 %v1923, %v1907
    %v3412 = vpack.c.b16 %v1940, %v1924
    %v3413 = vpack.c.b16 %v1941, %v1925
    %v3414 = vpack.c.b16 %v1942, %v1926
    %v3415 = vpack.c.b16 %v1943, %v1927
    %v3416 = vpack.c.b16 %v1944, %v1928
    %v3417 = vpack.c.b16 %v1945, %v1929
    %v3418 = vpack.c.b16 %v1946, %v1930
    %v3419 = vpack.c.b16 %v1947, %v1931
    %v3420 = vpack.c.b16 %v1948, %v1932
    %v3421 = vpack.c.b16 %v1949, %v1933
    %v3422 = vpack.c.b16 %v1950, %v1934
    %v3423 = vpack.c.b16 %v1951, %v1935
    %v3424 = vpack.c.b16 %v1952, %v1936
    %v3425 = vpack.c.b16 %v1953, %v1937
    %v3426 = vpack.c.b16 %v1954, %v1938
    %v3427 = vpack.c.b16 %v1955, %v1939
    %v3428 = vpack.c.b16 %v1972, %v1956
    %v3429 = vpack.c.b16 %v1973, %v1957
    %v3430 = vpack.c.b16 %v1974, %v1958
    %v3431 = vpack.c.b16 %v1975, %v1959
    %v3432 = vpack.c.b16 %v1976, %v1960
    %v3433 = vpack.c.b16 %v1977, %v1961
    %v3434 = vpack.c.b16 %v1978, %v1962
    %v3435 = vpack.c.b16 %v1979, %v1963
    %v3436 = vpack.c.b16 %v1980, %v1964
    %v3437 = vpack.c.b16 %v1981, %v1965
    %v3438 = vpack.c.b16 %v1982, %v1966
    %v3439 = vpack.c.b16 %v1983, %v1967
    %v3440 = vpack.c.b16 %v1984, %v1968
    %v3441 = vpack.c.b16 %v1985, %v1969
    %v3442 = vpack.c.b16 %v1986, %v1970
    %v3443 = vpack.c.b16 %v1987, %v1971
    %v3444 = vpack.c.b16 %v2004, %v1988
    %v3445 = vpack.c.b16 %v2005, %v1989
    %v3446 = vpack.c.b16 %v2006, %v1990
    %v3447 = vpack.c.b16 %v2007, %v1991
    %v3448 = vpack.c.b16 %v2008, %v1992
    %v3449 = vpack.c.b16 %v2009, %v1993
    %v3450 = vpack.c.b16 %v2010, %v1994
    %v3451 = vpack.c.b16 %v2011, %v1995
    %v3452 = vpack.c.b16 %v2012, %v1996
    %v3453 = vpack.c.b16 %v2013, %v1997
    %v3454 = vpack.c.b16 %v2014, %v1998
    %v3455 = vpack.c.b16 %v2015, %v1999
    %v3456 = vpack.c.b16 %v2016, %v2000
    %v3457 = vpack.c.b16 %v2017, %v2001
    %v3458 = vpack.c.b16 %v2018, %v2002
    %v3459 = vpack.c.b16 %v2019, %v2003
    %v3460 = vpack.c.b16 %v2036, %v2020
    %v3461 = vpack.c.b16 %v2037, %v2021
    %v3462 = vpack.c.b16 %v2038, %v2022
    %v3463 = vpack.c.b16 %v2039, %v2023
    %v3464 = vpack.c.b16 %v2040, %v2024
    %v3465 = vpack.c.b16 %v2041, %v2025
    %v3466 = vpack.c.b16 %v2042, %v2026
    %v3467 = vpack.c.b16 %v2043, %v2027
    %v3468 = vpack.c.b16 %v2044, %v2028
    %v3469 = vpack.c.b16 %v2045, %v2029
    %v3470 = vpack.c.b16 %v2046, %v2030
    %v3471 = vpack.c.b16 %v2047, %v2031
    %v3472 = vpack.c.b16 %v2048, %v2032
    %v3473 = vpack.c.b16 %v2049, %v2033
    %v3474 = vpack.c.b16 %v2050, %v2034
    %v3475 = vpack.c.b16 %v2051, %v2035
    %v3476 = vpack.c.b16 %v2068, %v2052
    %v3477 = vpack.c.b16 %v2069, %v2053
    %v3478 = vpack.c.b16 %v2070, %v2054
    %v3479 = vpack.c.b16 %v2071, %v2055
    %v3480 = vpack.c.b16 %v2072, %v2056
    %v3481 = vpack.c.b16 %v2073, %v2057
    %v3482 = vpack.c.b16 %v2074, %v2058
    %v3483 = vpack.c.b16 %v2075, %v2059
    %v3484 = vpack.c.b16 %v2076, %v2060
    %v3485 = vpack.c.b16 %v2077, %v2061
    %v3486 = vpack.c.b16 %v2078, %v2062
    %v3487 = vpack.c.b16 %v2079, %v2063
    %v3488 = vpack.c.b16 %v2080, %v2064
    %v3489 = vpack.c.b16 %v2081, %v2065
    %v3490 = vpack.c.b16 %v2082, %v2066
    %v3491 = vpack.c.b16 %v2083, %v2067
    %v3492 = vpack.c.b16 %v2100, %v2084
    %v3493 = vpack.c.b16 %v2101, %v2085
    %v3494 = vpack.c.b16 %v2102, %v2086
    %v3495 = vpack.c.b16 %v2103, %v2087
    %v3496 = vpack.c.b16 %v2104, %v2088
    %v3497 = vpack.c.b16 %v2105, %v2089
    %v3498 = vpack.c.b16 %v2106, %v2090
    %v3499 = vpack.c.b16 %v2107, %v2091
    %v3500 = vpack.c.b16 %v2108, %v2092
    %v3501 = vpack.c.b16 %v2109, %v2093
    %v3502 = vpack.c.b16 %v2110, %v2094
    %v3503 = vpack.c.b16 %v2111, %v2095
    %v3504 = vpack.c.b16 %v2112, %v2096
    %v3505 = vpack.c.b16 %v2113, %v2097
    %v3506 = vpack.c.b16 %v2114, %v2098
    %v3507 = vpack.c.b16 %v2115, %v2099
    %v3508 = vpack.c.b16 %v2132, %v2116
    %v3509 = vpack.c.b16 %v2133, %v2117
    %v3510 = vpack.c.b16 %v2134, %v2118
    %v3511 = vpack.c.b16 %v2135, %v2119
    %v3512 = vpack.c.b16 %v2136, %v2120
    %v3513 = vpack.c.b16 %v2137, %v2121
    %v3514 = vpack.c.b16 %v2138, %v2122
    %v3515 = vpack.c.b16 %v2139, %v2123
    %v3516 = vpack.c.b16 %v2140, %v2124
    %v3517 = vpack.c.b16 %v2141, %v2125
    %v3518 = vpack.c.b16 %v2142, %v2126
    %v3519 = vpack.c.b16 %v2143, %v2127
    %v3520 = vpack.c.b16 %v2144, %v2128
    %v3521 = vpack.c.b16 %v2145, %v2129
    %v3522 = vpack.c.b16 %v2146, %v2130
    %v3523 = vpack.c.b16 %v2147, %v2131
    %v3524 = vpack.c.b16 %v2164, %v2148
    %v3525 = vpack.c.b16 %v2165, %v2149
    %v3526 = vpack.c.b16 %v2166, %v2150
    %v3527 = vpack.c.b16 %v2167, %v2151
    %v3528 = vpack.c.b16 %v2168, %v2152
    %v3529 = vpack.c.b16 %v2169, %v2153
    %v3530 = vpack.c.b16 %v2170, %v2154
    %v3531 = vpack.c.b16 %v2171, %v2155
    %v3532 = vpack.c.b16 %v2172, %v2156
    %v3533 = vpack.c.b16 %v2173, %v2157
    %v3534 = vpack.c.b16 %v2174, %v2158
    %v3535 = vpack.c.b16 %v2175, %v2159
    %v3536 = vpack.c.b16 %v2176, %v2160
    %v3537 = vpack.c.b16 %v2177, %v2161
    %v3538 = vpack.c.b16 %v2178, %v2162
    %v3539 = vpack.c.b16 %v2179, %v2163
    %v3540 = vpack.c.b16 %v2196, %v2180
    %v3541 = vpack.c.b16 %v2197, %v2181
    %v3542 = vpack.c.b16 %v2198, %v2182
    %v3543 = vpack.c.b16 %v2199, %v2183
    %v3544 = vpack.c.b16 %v2200, %v2184
    %v3545 = vpack.c.b16 %v2201, %v2185
    %v3546 = vpack.c.b16 %v2202, %v2186
    %v3547 = vpack.c.b16 %v2203, %v2187
    %v3548 = vpack.c.b16 %v2204, %v2188
    %v3549 = vpack.c.b16 %v2205, %v2189
    %v3550 = vpack.c.b16 %v2206, %v2190
    %v3551 = vpack.c.b16 %v2207, %v2191
    %v3552 = vpack.c.b16 %v2208, %v2192
    %v3553 = vpack.c.b16 %v2209, %v2193
    %v3554 = vpack.c.b16 %v2210, %v2194
    %v3555 = vpack.c.b16 %v2211, %v2195
    %v3556 = vpack.c.b16 %v2228, %v2212
    %v3557 = vpack.c.b16 %v2229, %v2213
    %v3558 = vpack.c.b16 %v2230, %v2214
    %v3559 = vpack.c.b16 %v2231, %v2215
    %v3560 = vpack.c.b16 %v2232, %v2216
    %v3561 = vpack.c.b16 %v2233, %v2217
    %v3562 = vpack.c.b16 %v2234, %v2218
    %v3563 = vpack.c.b16 %v2235, %v2219
    %v3564 = vpack.c.b16 %v2236, %v2220
    %v3565 = vpack.c.b16 %v2237, %v2221
    %v3566 = vpack.c.b16 %v2238, %v2222
    %v3567 = vpack.c.b16 %v2239, %v2223
    %v3568 = vpack.c.b16 %v2240, %v2224
    %v3569 = vpack.c.b16 %v2241, %v2225
    %v3570 = vpack.c.b16 %v2242, %v2226
    %v3571 = vpack.c.b16 %v2243, %v2227
    %v3572 = vpack.c.b16 %v2260, %v2244
    %v3573 = vpack.c.b16 %v2261, %v2245
    %v3574 = vpack.c.b16 %v2262, %v2246
    %v3575 = vpack.c.b16 %v2263, %v2247
    %v3576 = vpack.c.b16 %v2264, %v2248
    %v3577 = vpack.c.b16 %v2265, %v2249
    %v3578 = vpack.c.b16 %v2266, %v2250
    %v3579 = vpack.c.b16 %v2267, %v2251
    %v3580 = vpack.c.b16 %v2268, %v2252
    %v3581 = vpack.c.b16 %v2269, %v2253
    %v3582 = vpack.c.b16 %v2270, %v2254
    %v3583 = vpack.c.b16 %v2271, %v2255
    %v3584 = vpack.c.b16 %v2272, %v2256
    %v3585 = vpack.c.b16 %v2273, %v2257
    %v3586 = vpack.c.b16 %v2274, %v2258
    %v3587 = vpack.c.b16 %v2275, %v2259
    %v3588 = vpack.c.b16 %v2292, %v2276
    %v3589 = vpack.c.b16 %v2293, %v2277
    %v3590 = vpack.c.b16 %v2294, %v2278
    %v3591 = vpack.c.b16 %v2295, %v2279
    %v3592 = vpack.c.b16 %v2296, %v2280
    %v3593 = vpack.c.b16 %v2297, %v2281
    %v3594 = vpack.c.b16 %v2298, %v2282
    %v3595 = vpack.c.b16 %v2299, %v2283
    %v3596 = vpack.c.b16 %v2300, %v2284
    %v3597 = vpack.c.b16 %v2301, %v2285
    %v3598 = vpack.c.b16 %v2302, %v2286
    %v3599 = vpack.c.b16 %v2303, %v2287
    %v3600 = vpack.c.b16 %v2304, %v2288
    %v3601 = vpack.c.b16 %v2305, %v2289
    %v3602 = vpack.c.b16 %v2306, %v2290
    %v3603 = vpack.c.b16 %v2307, %v2291
    %v3604 = vpack.c.b16 %v2324, %v2308
    %v3605 = vpack.c.b16 %v2325, %v2309
    %v3606 = vpack.c.b16 %v2326, %v2310
    %v3607 = vpack.c.b16 %v2327, %v2311
    %v3608 = vpack.c.b16 %v2328, %v2312
    %v3609 = vpack.c.b16 %v2329, %v2313
    %v3610 = vpack.c.b16 %v2330, %v2314
    %v3611 = vpack.c.b16 %v2331, %v2315
    %v3612 = vpack.c.b16 %v2332, %v2316
    %v3613 = vpack.c.b16 %v2333, %v2317
    %v3614 = vpack.c.b16 %v2334, %v2318
    %v3615 = vpack.c.b16 %v2335, %v2319
    %v3616 = vpack.c.b16 %v2336, %v2320
    %v3617 = vpack.c.b16 %v2337, %v2321
    %v3618 = vpack.c.b16 %v2338, %v2322
    %v3619 = vpack.c.b16 %v2339, %v2323
    %v3620 = vpack.c.b16 %v2356, %v2340
    %v3621 = vpack.c.b16 %v2357, %v2341
    %v3622 = vpack.c.b16 %v2358, %v2342
    %v3623 = vpack.c.b16 %v2359, %v2343
    %v3624 = vpack.c.b16 %v2360, %v2344
    %v3625 = vpack.c.b16 %v2361, %v2345
    %v3626 = vpack.c.b16 %v2362, %v2346
    %v3627 = vpack.c.b16 %v2363, %v2347
    %v3628 = vpack.c.b16 %v2364, %v2348
    %v3629 = vpack.c.b16 %v2365, %v2349
    %v3630 = vpack.c.b16 %v2366, %v2350
    %v3631 = vpack.c.b16 %v2367, %v2351
    %v3632 = vpack.c.b16 %v2368, %v2352
    %v3633 = vpack.c.b16 %v2369, %v2353
    %v3634 = vpack.c.b16 %v2370, %v2354
    %v3635 = vpack.c.b16 %v2371, %v2355
    %v3636 = vpack.c.b16 %v2388, %v2372
    %v3637 = vpack.c.b16 %v2389, %v2373
    %v3638 = vpack.c.b16 %v2390, %v2374
    %v3639 = vpack.c.b16 %v2391, %v2375
    %v3640 = vpack.c.b16 %v2392, %v2376
    %v3641 = vpack.c.b16 %v2393, %v2377
    %v3642 = vpack.c.b16 %v2394, %v2378
    %v3643 = vpack.c.b16 %v2395, %v2379
    %v3644 = vpack.c.b16 %v2396, %v2380
    %v3645 = vpack.c.b16 %v2397, %v2381
    %v3646 = vpack.c.b16 %v2398, %v2382
    %v3647 = vpack.c.b16 %v2399, %v2383
    %v3648 = vpack.c.b16 %v2400, %v2384
    %v3649 = vpack.c.b16 %v2401, %v2385
    %v3650 = vpack.c.b16 %v2402, %v2386
    %v3651 = vpack.c.b16 %v2403, %v2387
    %v3652 = vpack.c.b16 %v2420, %v2404
    %v3653 = vpack.c.b16 %v2421, %v2405
    %v3654 = vpack.c.b16 %v2422, %v2406
    %v3655 = vpack.c.b16 %v2423, %v2407
    %v3656 = vpack.c.b16 %v2424, %v2408
    %v3657 = vpack.c.b16 %v2425, %v2409
    %v3658 = vpack.c.b16 %v2426, %v2410
    %v3659 = vpack.c.b16 %v2427, %v2411
    %v3660 = vpack.c.b16 %v2428, %v2412
    %v3661 = vpack.c.b16 %v2429, %v2413
    %v3662 = vpack.c.b16 %v2430, %v2414
    %v3663 = vpack.c.b16 %v2431, %v2415
    %v3664 = vpack.c.b16 %v2432, %v2416
    %v3665 = vpack.c.b16 %v2433, %v2417
    %v3666 = vpack.c.b16 %v2434, %v2418
    %v3667 = vpack.c.b16 %v2435, %v2419
    %v3668 = vpack.c.b16 %v2452, %v2436
    %v3669 = vpack.c.b16 %v2453, %v2437
    %v3670 = vpack.c.b16 %v2454, %v2438
    %v3671 = vpack.c.b16 %v2455, %v2439
    %v3672 = vpack.c.b16 %v2456, %v2440
    %v3673 = vpack.c.b16 %v2457, %v2441
    %v3674 = vpack.c.b16 %v2458, %v2442
    %v3675 = vpack.c.b16 %v2459, %v2443
    %v3676 = vpack.c.b16 %v2460, %v2444
    %v3677 = vpack.c.b16 %v2461, %v2445
    %v3678 = vpack.c.b16 %v2462, %v2446
    %v3679 = vpack.c.b16 %v2463, %v2447
    %v3680 = vpack.c.b16 %v2464, %v2448
    %v3681 = vpack.c.b16 %v2465, %v2449
    %v3682 = vpack.c.b16 %v2466, %v2450
    %v3683 = vpack.c.b16 %v2467, %v2451
    %v3684 = vpack.c.b16 %v2484, %v2468
    %v3685 = vpack.c.b16 %v2485, %v2469
    %v3686 = vpack.c.b16 %v2486, %v2470
    %v3687 = vpack.c.b16 %v2487, %v2471
    %v3688 = vpack.c.b16 %v2488, %v2472
    %v3689 = vpack.c.b16 %v2489, %v2473
    %v3690 = vpack.c.b16 %v2490, %v2474
    %v3691 = vpack.c.b16 %v2491, %v2475
    %v3692 = vpack.c.b16 %v2492, %v2476
    %v3693 = vpack.c.b16 %v2493, %v2477
    %v3694 = vpack.c.b16 %v2494, %v2478
    %v3695 = vpack.c.b16 %v2495, %v2479
    %v3696 = vpack.c.b16 %v2496, %v2480
    %v3697 = vpack.c.b16 %v2497, %v2481
    %v3698 = vpack.c.b16 %v2498, %v2482
    %v3699 = vpack.c.b16 %v2499, %v2483
    %v3700 = vpack.c.b16 %v2516, %v2500
    %v3701 = vpack.c.b16 %v2517, %v2501
    %v3702 = vpack.c.b16 %v2518, %v2502
    %v3703 = vpack.c.b16 %v2519, %v2503
    %v3704 = vpack.c.b16 %v2520, %v2504
    %v3705 = vpack.c.b16 %v2521, %v2505
    %v3706 = vpack.c.b16 %v2522, %v2506
    %v3707 = vpack.c.b16 %v2523, %v2507
    %v3708 = vpack.c.b16 %v2524, %v2508
    %v3709 = vpack.c.b16 %v2525, %v2509
    %v3710 = vpack.c.b16 %v2526, %v2510
    %v3711 = vpack.c.b16 %v2527, %v2511
    %v3712 = vpack.c.b16 %v2528, %v2512
    %v3713 = vpack.c.b16 %v2529, %v2513
    %v3714 = vpack.c.b16 %v2530, %v2514
    %v3715 = vpack.c.b16 %v2531, %v2515
    %v3716 = vpack.c.b16 %v2548, %v2532
    %v3717 = vpack.c.b16 %v2549, %v2533
    %v3718 = vpack.c.b16 %v2550, %v2534
    %v3719 = vpack.c.b16 %v2551, %v2535
    %v3720 = vpack.c.b16 %v2552, %v2536
    %v3721 = vpack.c.b16 %v2553, %v2537
    %v3722 = vpack.c.b16 %v2554, %v2538
    %v3723 = vpack.c.b16 %v2555, %v2539
    %v3724 = vpack.c.b16 %v2556, %v2540
    %v3725 = vpack.c.b16 %v2557, %v2541
    %v3726 = vpack.c.b16 %v2558, %v2542
    %v3727 = vpack.c.b16 %v2559, %v2543
    %v3728 = vpack.c.b16 %v2560, %v2544
    %v3729 = vpack.c.b16 %v2561, %v2545
    %v3730 = vpack.c.b16 %v2562, %v2546
    %v3731 = vpack.c.b16 %v2563, %v2547
    %v3732 = vpack.c.b16 %v2580, %v2564
    %v3733 = vpack.c.b16 %v2581, %v2565
    %v3734 = vpack.c.b16 %v2582, %v2566
    %v3735 = vpack.c.b16 %v2583, %v2567
    %v3736 = vpack.c.b16 %v2584, %v2568
    %v3737 = vpack.c.b16 %v2585, %v2569
    %v3738 = vpack.c.b16 %v2586, %v2570
    %v3739 = vpack.c.b16 %v2587, %v2571
    %v3740 = vpack.c.b16 %v2588, %v2572
    %v3741 = vpack.c.b16 %v2589, %v2573
    %v3742 = vpack.c.b16 %v2590, %v2574
    %v3743 = vpack.c.b16 %v2591, %v2575
    %v3744 = vpack.c.b16 %v2592, %v2576
    %v3745 = vpack.c.b16 %v2593, %v2577
    %v3746 = vpack.c.b16 %v2594, %v2578
    %v3747 = vpack.c.b16 %v2595, %v2579
    %v3748 = vpack.c.b16 %v2612, %v2596
    %v3749 = vpack.c.b16 %v2613, %v2597
    %v3750 = vpack.c.b16 %v2614, %v2598
    %v3751 = vpack.c.b16 %v2615, %v2599
    %v3752 = vpack.c.b16 %v2616, %v2600
    %v3753 = vpack.c.b16 %v2617, %v2601
    %v3754 = vpack.c.b16 %v2618, %v2602
    %v3755 = vpack.c.b16 %v2619, %v2603
    %v3756 = vpack.c.b16 %v2620, %v2604
    %v3757 = vpack.c.b16 %v2621, %v2605
    %v3758 = vpack.c.b16 %v2622, %v2606
    %v3759 = vpack.c.b16 %v2623, %v2607
    %v3760 = vpack.c.b16 %v2624, %v2608
    %v3761 = vpack.c.b16 %v2625, %v2609
    %v3762 = vpack.c.b16 %v2626, %v2610
    %v3763 = vpack.c.b16 %v2627, %v2611
    %v3764 = vpack.c.b16 %v2644, %v2628
    %v3765 = vpack.c.b16 %v2645, %v2629
    %v3766 = vpack.c.b16 %v2646, %v2630
    %v3767 = vpack.c.b16 %v2647, %v2631
    %v3768 = vpack.c.b16 %v2648, %v2632
    %v3769 = vpack.c.b16 %v2649, %v2633
    %v3770 = vpack.c.b16 %v2650, %v2634
    %v3771 = vpack.c.b16 %v2651, %v2635
    %v3772 = vpack.c.b16 %v2652, %v2636
    %v3773 = vpack.c.b16 %v2653, %v2637
    %v3774 = vpack.c.b16 %v2654, %v2638
    %v3775 = vpack.c.b16 %v2655, %v2639
    %v3776 = vpack.c.b16 %v2656, %v2640
    %v3777 = vpack.c.b16 %v2657, %v2641
    %v3778 = vpack.c.b16 %v2658, %v2642
    %v3779 = vpack.c.b16 %v2659, %v2643
    %v3780 = vpack.c.b16 %v2676, %v2660
    %v3781 = vpack.c.b16 %v2677, %v2661
    %v3782 = vpack.c.b16 %v2678, %v2662
    %v3783 = vpack.c.b16 %v2679, %v2663
    %v3784 = vpack.c.b16 %v2680, %v2664
    %v3785 = vpack.c.b16 %v2681, %v2665
    %v3786 = vpack.c.b16 %v2682, %v2666
    %v3787 = vpack.c.b16 %v2683, %v2667
    %v3788 = vpack.c.b16 %v2684, %v2668
    %v3789 = vpack.c.b16 %v2685, %v2669
    %v3790 = vpack.c.b16 %v2686, %v2670
    %v3791 = vpack.c.b16 %v2687, %v2671
    %v3792 = vpack.c.b16 %v2688, %v2672
    %v3793 = vpack.c.b16 %v2689, %v2673
    %v3794 = vpack.c.b16 %v2690, %v2674
    %v3795 = vpack.c.b16 %v2691, %v2675
    %v3796 = vpack.c.b16 %v2708, %v2692
    %v3797 = vpack.c.b16 %v2709, %v2693
    %v3798 = vpack.c.b16 %v2710, %v2694
    %v3799 = vpack.c.b16 %v2711, %v2695
    %v3800 = vpack.c.b16 %v2712, %v2696
    %v3801 = vpack.c.b16 %v2713, %v2697
    %v3802 = vpack.c.b16 %v2714, %v2698
    %v3803 = vpack.c.b16 %v2715, %v2699
    %v3804 = vpack.c.b16 %v2716, %v2700
    %v3805 = vpack.c.b16 %v2717, %v2701
    %v3806 = vpack.c.b16 %v2718, %v2702
    %v3807 = vpack.c.b16 %v2719, %v2703
    %v3808 = vpack.c.b16 %v2720, %v2704
    %v3809 = vpack.c.b16 %v2721, %v2705
    %v3810 = vpack.c.b16 %v2722, %v2706
    %v3811 = vpack.c.b16 %v2723, %v2707
    %v3812 = vpack.c.b16 %v2740, %v2724
    %v3813 = vpack.c.b16 %v2741, %v2725
    %v3814 = vpack.c.b16 %v2742, %v2726
    %v3815 = vpack.c.b16 %v2743, %v2727
    %v3816 = vpack.c.b16 %v2744, %v2728
    %v3817 = vpack.c.b16 %v2745, %v2729
    %v3818 = vpack.c.b16 %v2746, %v2730
    %v3819 = vpack.c.b16 %v2747, %v2731
    %v3820 = vpack.c.b16 %v2748, %v2732
    %v3821 = vpack.c.b16 %v2749, %v2733
    %v3822 = vpack.c.b16 %v2750, %v2734
    %v3823 = vpack.c.b16 %v2751, %v2735
    %v3824 = vpack.c.b16 %v2752, %v2736
    %v3825 = vpack.c.b16 %v2753, %v2737
    %v3826 = vpack.c.b16 %v2754, %v2738
    %v3827 = vpack.c.b16 %v2755, %v2739
    %v3828 = vpack.c.b16 %v2772, %v2756
    %v3829 = vpack.c.b16 %v2773, %v2757
    %v3830 = vpack.c.b16 %v2774, %v2758
    %v3831 = vpack.c.b16 %v2775, %v2759
    %v3832 = vpack.c.b16 %v2776, %v2760
    %v3833 = vpack.c.b16 %v2777, %v2761
    %v3834 = vpack.c.b16 %v2778, %v2762
    %v3835 = vpack.c.b16 %v2779, %v2763
    %v3836 = vpack.c.b16 %v2780, %v2764
    %v3837 = vpack.c.b16 %v2781, %v2765
    %v3838 = vpack.c.b16 %v2782, %v2766
    %v3839 = vpack.c.b16 %v2783, %v2767
    %v3840 = vpack.c.b16 %v2784, %v2768
    %v3841 = vpack.c.b16 %v2785, %v2769
    %v3842 = vpack.c.b16 %v2786, %v2770
    %v3843 = vpack.c.b16 %v2787, %v2771
    %v3844 = vpack.c.b16 %v2804, %v2788
    %v3845 = vpack.c.b16 %v2805, %v2789
    %v3846 = vpack.c.b16 %v2806, %v2790
    %v3847 = vpack.c.b16 %v2807, %v2791
    %v3848 = vpack.c.b16 %v2808, %v2792
    %v3849 = vpack.c.b16 %v2809, %v2793
    %v3850 = vpack.c.b16 %v2810, %v2794
    %v3851 = vpack.c.b16 %v2811, %v2795
    %v3852 = vpack.c.b16 %v2812, %v2796
    %v3853 = vpack.c.b16 %v2813, %v2797
    %v3854 = vpack.c.b16 %v2814, %v2798
    %v3855 = vpack.c.b16 %v2815, %v2799
    %v3856 = vpack.c.b16 %v2816, %v2800
    %v3857 = vpack.c.b16 %v2817, %v2801
    %v3858 = vpack.c.b16 %v2818, %v2802
    %v3859 = vpack.c.b16 %v2819, %v2803
    %v3860 = vpack.c.b16 %v2836, %v2820
    %v3861 = vpack.c.b16 %v2837, %v2821
    %v3862 = vpack.c.b16 %v2838, %v2822
    %v3863 = vpack.c.b16 %v2839, %v2823
    %v3864 = vpack.c.b16 %v2840, %v2824
    %v3865 = vpack.c.b16 %v2841, %v2825
    %v3866 = vpack.c.b16 %v2842, %v2826
    %v3867 = vpack.c.b16 %v2843, %v2827
    %v3868 = vpack.c.b16 %v2844, %v2828
    %v3869 = vpack.c.b16 %v2845, %v2829
    %v3870 = vpack.c.b16 %v2846, %v2830
    %v3871 = vpack.c.b16 %v2847, %v2831
    %v3872 = vpack.c.b16 %v2848, %v2832
    %v3873 = vpack.c.b16 %v2849, %v2833
    %v3874 = vpack.c.b16 %v2850, %v2834
    %v3875 = vpack.c.b16 %v2851, %v2835
    %v3876 = vpack.c.b16 %v2868, %v2852
    %v3877 = vpack.c.b16 %v2869, %v2853
    %v3878 = vpack.c.b16 %v2870, %v2854
    %v3879 = vpack.c.b16 %v2871, %v2855
    %v3880 = vpack.c.b16 %v2872, %v2856
    %v3881 = vpack.c.b16 %v2873, %v2857
    %v3882 = vpack.c.b16 %v2874, %v2858
    %v3883 = vpack.c.b16 %v2875, %v2859
    %v3884 = vpack.c.b16 %v2876, %v2860
    %v3885 = vpack.c.b16 %v2877, %v2861
    %v3886 = vpack.c.b16 %v2878, %v2862
    %v3887 = vpack.c.b16 %v2879, %v2863
    %v3888 = vpack.c.b16 %v2880, %v2864
    %v3889 = vpack.c.b16 %v2881, %v2865
    %v3890 = vpack.c.b16 %v2882, %v2866
    %v3891 = vpack.c.b16 %v2883, %v2867
    %v3892 = vpack.c.b16 %v2900, %v2884
    %v3893 = vpack.c.b16 %v2901, %v2885
    %v3894 = vpack.c.b16 %v2902, %v2886
    %v3895 = vpack.c.b16 %v2903, %v2887
    %v3896 = vpack.c.b16 %v2904, %v2888
    %v3897 = vpack.c.b16 %v2905, %v2889
    %v3898 = vpack.c.b16 %v2906, %v2890
    %v3899 = vpack.c.b16 %v2907, %v2891
    %v3900 = vpack.c.b16 %v2908, %v2892
    %v3901 = vpack.c.b16 %v2909, %v2893
    %v3902 = vpack.c.b16 %v2910, %v2894
    %v3903 = vpack.c.b16 %v2911, %v2895
    %v3904 = vpack.c.b16 %v2912, %v2896
    %v3905 = vpack.c.b16 %v2913, %v2897
    %v3906 = vpack.c.b16 %v2914, %v2898
    %v3907 = vpack.c.b16 %v2915, %v2899
    %v3908 = vpack.c.b16 %v2932, %v2916
    %v3909 = vpack.c.b16 %v2933, %v2917
    %v3910 = vpack.c.b16 %v2934, %v2918
    %v3911 = vpack.c.b16 %v2935, %v2919
    %v3912 = vpack.c.b16 %v2936, %v2920
    %v3913 = vpack.c.b16 %v2937, %v2921
    %v3914 = vpack.c.b16 %v2938, %v2922
    %v3915 = vpack.c.b16 %v2939, %v2923
    %v3916 = vpack.c.b16 %v2940, %v2924
    %v3917 = vpack.c.b16 %v2941, %v2925
    %v3918 = vpack.c.b16 %v2942, %v2926
    %v3919 = vpack.c.b16 %v2943, %v2927
    %v3920 = vpack.c.b16 %v2944, %v2928
    %v3921 = vpack.c.b16 %v2945, %v2929
    %v3922 = vpack.c.b16 %v2946, %v2930
    %v3923 = vpack.c.b16 %v2947, %v2931
    %v3924 = vpack.c.b16 %v2964, %v2948
    %v3925 = vpack.c.b16 %v2965, %v2949
    %v3926 = vpack.c.b16 %v2966, %v2950
    %v3927 = vpack.c.b16 %v2967, %v2951
    %v3928 = vpack.c.b16 %v2968, %v2952
    %v3929 = vpack.c.b16 %v2969, %v2953
    %v3930 = vpack.c.b16 %v2970, %v2954
    %v3931 = vpack.c.b16 %v2971, %v2955
    %v3932 = vpack.c.b16 %v2972, %v2956
    %v3933 = vpack.c.b16 %v2973, %v2957
    %v3934 = vpack.c.b16 %v2974, %v2958
    %v3935 = vpack.c.b16 %v2975, %v2959
    %v3936 = vpack.c.b16 %v2976, %v2960
    %v3937 = vpack.c.b16 %v2977, %v2961
    %v3938 = vpack.c.b16 %v2978, %v2962
    %v3939 = vpack.c.b16 %v2979, %v2963
    %v3940 = vpack.c.b16 %v2996, %v2980
    %v3941 = vpack.c.b16 %v2997, %v2981
    %v3942 = vpack.c.b16 %v2998, %v2982
    %v3943 = vpack.c.b16 %v2999, %v2983
    %v3944 = vpack.c.b16 %v3000, %v2984
    %v3945 = vpack.c.b16 %v3001, %v2985
    %v3946 = vpack.c.b16 %v3002, %v2986
    %v3947 = vpack.c.b16 %v3003, %v2987
    %v3948 = vpack.c.b16 %v3004, %v2988
    %v3949 = vpack.c.b16 %v3005, %v2989
    %v3950 = vpack.c.b16 %v3006, %v2990
    %v3951 = vpack.c.b16 %v3007, %v2991
    %v3952 = vpack.c.b16 %v3008, %v2992
    %v3953 = vpack.c.b16 %v3009, %v2993
    %v3954 = vpack.c.b16 %v3010, %v2994
    %v3955 = vpack.c.b16 %v3011, %v2995
    %v3956 = vpack.c.b16 %v3028, %v3012
    %v3957 = vpack.c.b16 %v3029, %v3013
    %v3958 = vpack.c.b16 %v3030, %v3014
    %v3959 = vpack.c.b16 %v3031, %v3015
    %v3960 = vpack.c.b16 %v3032, %v3016
    %v3961 = vpack.c.b16 %v3033, %v3017
    %v3962 = vpack.c.b16 %v3034, %v3018
    %v3963 = vpack.c.b16 %v3035, %v3019
    %v3964 = vpack.c.b16 %v3036, %v3020
    %v3965 = vpack.c.b16 %v3037, %v3021
    %v3966 = vpack.c.b16 %v3038, %v3022
    %v3967 = vpack.c.b16 %v3039, %v3023
    %v3968 = vpack.c.b16 %v3040, %v3024
    %v3969 = vpack.c.b16 %v3041, %v3025
    %v3970 = vpack.c.b16 %v3042, %v3026
    %v3971 = vpack.c.b16 %v3043, %v3027
    %v3972 = vpack.c.b16 %v3060, %v3044
    %v3973 = vpack.c.b16 %v3061, %v3045
    %v3974 = vpack.c.b16 %v3062, %v3046
    %v3975 = vpack.c.b16 %v3063, %v3047
    %v3976 = vpack.c.b16 %v3064, %v3048
    %v3977 = vpack.c.b16 %v3065, %v3049
    %v3978 = vpack.c.b16 %v3066, %v3050
    %v3979 = vpack.c.b16 %v3067, %v3051
    %v3980 = vpack.c.b16 %v3068, %v3052
    %v3981 = vpack.c.b16 %v3069, %v3053
    %v3982 = vpack.c.b16 %v3070, %v3054
    %v3983 = vpack.c.b16 %v3071, %v3055
    %v3984 = vpack.c.b16 %v3072, %v3056
    %v3985 = vpack.c.b16 %v3073, %v3057
    %v3986 = vpack.c.b16 %v3074, %v3058
    %v3987 = vpack.c.b16 %v3075, %v3059
    %v3988 = vpack.c.b16 %v3092, %v3076
    %v3989 = vpack.c.b16 %v3093, %v3077
    %v3990 = vpack.c.b16 %v3094, %v3078
    %v3991 = vpack.c.b16 %v3095, %v3079
    %v3992 = vpack.c.b16 %v3096, %v3080
    %v3993 = vpack.c.b16 %v3097, %v3081
    %v3994 = vpack.c.b16 %v3098, %v3082
    %v3995 = vpack.c.b16 %v3099, %v3083
    %v3996 = vpack.c.b16 %v3100, %v3084
    %v3997 = vpack.c.b16 %v3101, %v3085
    %v3998 = vpack.c.b16 %v3102, %v3086
    %v3999 = vpack.c.b16 %v3103, %v3087
    %v4000 = vpack.c.b16 %v3104, %v3088
    %v4001 = vpack.c.b16 %v3105, %v3089
    %v4002 = vpack.c.b16 %v3106, %v3090
    %v4003 = vpack.c.b16 %v3107, %v3091
    %v4004 = vpack.c.b16 %v3124, %v3108
    %v4005 = vpack.c.b16 %v3125, %v3109
    %v4006 = vpack.c.b16 %v3126, %v3110
    %v4007 = vpack.c.b16 %v3127, %v3111
    %v4008 = vpack.c.b16 %v3128, %v3112
    %v4009 = vpack.c.b16 %v3129, %v3113
    %v4010 = vpack.c.b16 %v3130, %v3114
    %v4011 = vpack.c.b16 %v3131, %v3115
    %v4012 = vpack.c.b16 %v3132, %v3116
    %v4013 = vpack.c.b16 %v3133, %v3117
    %v4014 = vpack.c.b16 %v3134, %v3118
    %v4015 = vpack.c.b16 %v3135, %v3119
    %v4016 = vpack.c.b16 %v3136, %v3120
    %v4017 = vpack.c.b16 %v3137, %v3121
    %v4018 = vpack.c.b16 %v3138, %v3122
    %v4019 = vpack.c.b16 %v3139, %v3123
    %v4020 = vpack.c.b16 %v3156, %v3140
    %v4021 = vpack.c.b16 %v3157, %v3141
    %v4022 = vpack.c.b16 %v3158, %v3142
    %v4023 = vpack.c.b16 %v3159, %v3143
    %v4024 = vpack.c.b16 %v3160, %v3144
    %v4025 = vpack.c.b16 %v3161, %v3145
    %v4026 = vpack.c.b16 %v3162, %v3146
    %v4027 = vpack.c.b16 %v3163, %v3147
    %v4028 = vpack.c.b16 %v3164, %v3148
    %v4029 = vpack.c.b16 %v3165, %v3149
    %v4030 = vpack.c.b16 %v3166, %v3150
    %v4031 = vpack.c.b16 %v3167, %v3151
    %v4032 = vpack.c.b16 %v3168, %v3152
    %v4033 = vpack.c.b16 %v3169, %v3153
    %v4034 = vpack.c.b16 %v3170, %v3154
    %v4035 = vpack.c.b16 %v3171, %v3155
    %v4036 = vpack.c.b16 %v3188, %v3172
    %v4037 = vpack.c.b16 %v3189, %v3173
    %v4038 = vpack.c.b16 %v3190, %v3174
    %v4039 = vpack.c.b16 %v3191, %v3175
    %v4040 = vpack.c.b16 %v3192, %v3176
    %v4041 = vpack.c.b16 %v3193, %v3177
    %v4042 = vpack.c.b16 %v3194, %v3178
    %v4043 = vpack.c.b16 %v3195, %v3179
    %v4044 = vpack.c.b16 %v3196, %v3180
    %v4045 = vpack.c.b16 %v3197, %v3181
    %v4046 = vpack.c.b16 %v3198, %v3182
    %v4047 = vpack.c.b16 %v3199, %v3183
    %v4048 = vpack.c.b16 %v3200, %v3184
    %v4049 = vpack.c.b16 %v3201, %v3185
    %v4050 = vpack.c.b16 %v3202, %v3186
    %v4051 = vpack.c.b16 %v3203, %v3187
    %v4052 = vpack.c.b16 %v3220, %v3204
    %v4053 = vpack.c.b16 %v3221, %v3205
    %v4054 = vpack.c.b16 %v3222, %v3206
    %v4055 = vpack.c.b16 %v3223, %v3207
    %v4056 = vpack.c.b16 %v3224, %v3208
    %v4057 = vpack.c.b16 %v3225, %v3209
    %v4058 = vpack.c.b16 %v3226, %v3210
    %v4059 = vpack.c.b16 %v3227, %v3211
    %v4060 = vpack.c.b16 %v3228, %v3212
    %v4061 = vpack.c.b16 %v3229, %v3213
    %v4062 = vpack.c.b16 %v3230, %v3214
    %v4063 = vpack.c.b16 %v3231, %v3215
    %v4064 = vpack.c.b16 %v3232, %v3216
    %v4065 = vpack.c.b16 %v3233, %v3217
    %v4066 = vpack.c.b16 %v3234, %v3218
    %v4067 = vpack.c.b16 %v3235, %v3219
    %v4068 = vpack.c.b16 %v3252, %v3236
    %v4069 = vpack.c.b16 %v3253, %v3237
    %v4070 = vpack.c.b16 %v3254, %v3238
    %v4071 = vpack.c.b16 %v3255, %v3239
    %v4072 = vpack.c.b16 %v3256, %v3240
    %v4073 = vpack.c.b16 %v3257, %v3241
    %v4074 = vpack.c.b16 %v3258, %v3242
    %v4075 = vpack.c.b16 %v3259, %v3243
    %v4076 = vpack.c.b16 %v3260, %v3244
    %v4077 = vpack.c.b16 %v3261, %v3245
    %v4078 = vpack.c.b16 %v3262, %v3246
    %v4079 = vpack.c.b16 %v3263, %v3247
    %v4080 = vpack.c.b16 %v3264, %v3248
    %v4081 = vpack.c.b16 %v3265, %v3249
    %v4082 = vpack.c.b16 %v3266, %v3250
    %v4083 = vpack.c.b16 %v3267, %v3251
    %v4084 = vpack.c.b16 %v3284, %v3268
    %v4085 = vpack.c.b16 %v3285, %v3269
    %v4086 = vpack.c.b16 %v3286, %v3270
    %v4087 = vpack.c.b16 %v3287, %v3271
    %v4088 = vpack.c.b16 %v3288, %v3272
    %v4089 = vpack.c.b16 %v3289, %v3273
    %v4090 = vpack.c.b16 %v3290, %v3274
    %v4091 = vpack.c.b16 %v3291, %v3275
    %v4092 = vpack.c.b16 %v3292, %v3276
    %v4093 = vpack.c.b16 %v3293, %v3277
    %v4094 = vpack.c.b16 %v3294, %v3278
    %v4095 = vpack.c.b16 %v3295, %v3279
    %v4096 = vpack.c.b16 %v3296, %v3280
    %v4097 = vpack.c.b16 %v3297, %v3281
    %v4098 = vpack.c.b16 %v3298, %v3282
    %v4099 = vpack.c.b16 %v3299, %v3283
    %v4100 = vpack.c.b16 %v3316, %v3300
    %v4101 = vpack.c.b16 %v3317, %v3301
    %v4102 = vpack.c.b16 %v3318, %v3302
    %v4103 = vpack.c.b16 %v3319, %v3303
    %v4104 = vpack.c.b16 %v3320, %v3304
    %v4105 = vpack.c.b16 %v3321, %v3305
    %v4106 = vpack.c.b16 %v3322, %v3306
    %v4107 = vpack.c.b16 %v3323, %v3307
    %v4108 = vpack.c.b16 %v3324, %v3308
    %v4109 = vpack.c.b16 %v3325, %v3309
    %v4110 = vpack.c.b16 %v3326, %v3310
    %v4111 = vpack.c.b16 %v3327, %v3311
    %v4112 = vpack.c.b16 %v3328, %v3312
    %v4113 = vpack.c.b16 %v3329, %v3313
    %v4114 = vpack.c.b16 %v3330, %v3314
    %v4115 = vpack.c.b16 %v3331, %v3315
    %vm4900 = vcmask 130048
    %v4902 = vsel %vm4900, %v973, 0
    %4904 = vmatprep.subr.bf16.mxu0 %v3333
    %4905 = vmatpush1.bf16.msra.mxu0 %v3332
    %4906 = vmatprep.subr.bf16.mxu0 %v3349
    %4907 = vmatpush1.bf16.msra.mxu0 %v3348
    %4908 = vmatprep.subr.bf16.mxu0 %v3365
    %4909 = vmatpush1.bf16.msra.mxu0 %v3364
    %4910 = vmatprep.subr.bf16.mxu0 %v3381
    %4911 = vmatpush1.bf16.msra.mxu0 %v3380
    %4912 = vmatprep.subr.bf16.mxu0 %v3397
    %4913 = vmatpush1.bf16.msra.mxu0 %v3396
    %4914 = vmatprep.subr.bf16.mxu0 %v3413
    %4915 = vmatpush1.bf16.msra.mxu0 %v3412
    %4916 = vmatprep.subr.bf16.mxu0 %v3429
    %4917 = vmatpush1.bf16.msra.mxu0 %v3428
    %4918 = vmatprep.subr.bf16.mxu0 %v3445
    %4919 = vmatpush1.bf16.msra.mxu0 %v3444
    %4920 = vmatprep.subr.bf16.mxu0 %v3461
    %4921 = vmatpush1.bf16.msra.mxu0 %v3460
    %4922 = vmatprep.subr.bf16.mxu0 %v3477
    %4923 = vmatpush1.bf16.msra.mxu0 %v3476
    %4924 = vmatprep.subr.bf16.mxu0 %v3493
    %4925 = vmatpush1.bf16.msra.mxu0 %v3492
    %4926 = vmatprep.subr.bf16.mxu0 %v3509
    %4927 = vmatpush1.bf16.msra.mxu0 %v3508
    %4928 = vmatprep.subr.bf16.mxu0 %v3525
    %4929 = vmatpush1.bf16.msra.mxu0 %v3524
    %4930 = vmatprep.subr.bf16.mxu0 %v3541
    %4931 = vmatpush1.bf16.msra.mxu0 %v3540
    %4932 = vmatprep.subr.bf16.mxu0 %v3557
    %4933 = vmatpush1.bf16.msra.mxu0 %v3556
    %4934 = vmatprep.subr.bf16.mxu0 %v3573
    %4935 = vmatpush1.bf16.msra.mxu0 %v3572
    %4936 = vmatprep.mubr.bf16.mxu0 %v968
    %4937 = vmatmul.mubr.bf16.gmra.mrb[0].mxu0 %v967
    %v4938 = vpop.f32.mrb[0].mxu0
    %v4939 = vadd.f32 %v879, %v4938
    %v4940 = vpop.f32.mrb[0].mxu0
    %v4941 = vadd.f32 %v883, %v4940
    %v4942 = vpop.f32.mrb[0].mxu0
    %v4943 = vpop.f32.mrb[0].mxu0
    %4944 = vdwg.mxu0
    %4945 = vmatprep.subr.bf16.mxu0 %v3589
    %4946 = vmatpush1.bf16.msra.mxu0 %v3588
    %4947 = vmatprep.subr.bf16.mxu0 %v3605
    %4948 = vmatpush1.bf16.msra.mxu0 %v3604
    %4949 = vmatprep.subr.bf16.mxu0 %v3621
    %4950 = vmatpush1.bf16.msra.mxu0 %v3620
    %4951 = vmatprep.subr.bf16.mxu0 %v3637
    %4952 = vmatpush1.bf16.msra.mxu0 %v3636
    %4953 = vmatprep.subr.bf16.mxu0 %v3653
    %4954 = vmatpush1.bf16.msra.mxu0 %v3652
    %4955 = vmatprep.subr.bf16.mxu0 %v3669
    %4956 = vmatpush1.bf16.msra.mxu0 %v3668
    %4957 = vmatprep.subr.bf16.mxu0 %v3685
    %4958 = vmatpush1.bf16.msra.mxu0 %v3684
    %4959 = vmatprep.subr.bf16.mxu0 %v3701
    %4960 = vmatpush1.bf16.msra.mxu0 %v3700
    %4961 = vmatprep.subr.bf16.mxu0 %v3717
    %4962 = vmatpush1.bf16.msra.mxu0 %v3716
    %4963 = vmatprep.subr.bf16.mxu0 %v3733
    %4964 = vmatpush1.bf16.msra.mxu0 %v3732
    %4965 = vmatprep.subr.bf16.mxu0 %v3749
    %4966 = vmatpush1.bf16.msra.mxu0 %v3748
    %4967 = vmatprep.subr.bf16.mxu0 %v3765
    %4968 = vmatpush1.bf16.msra.mxu0 %v3764
    %4969 = vmatprep.subr.bf16.mxu0 %v3781
    %4970 = vmatpush1.bf16.msra.mxu0 %v3780
    %4971 = vmatprep.subr.bf16.mxu0 %v3797
    %4972 = vmatpush1.bf16.msra.mxu0 %v3796
    %4973 = vmatprep.subr.bf16.mxu0 %v3813
    %4974 = vmatpush1.bf16.msra.mxu0 %v3812
    %4975 = vmatprep.subr.bf16.mxu0 %v3829
    %4976 = vmatpush1.bf16.msra.mxu0 %v3828
    %4977 = vmatprep.mubr.bf16.mxu0 %v970
    %4978 = vmatmul.mubr.bf16.gmra.mrb[0].mxu0 %v969
    %v4979 = vpop.f32.mrb[0].mxu0
    %v4980 = vadd.f32 %v4939, %v4979
    %v4981 = vpop.f32.mrb[0].mxu0
    %v4982 = vadd.f32 %v4941, %v4981
    %v4983 = vpop.f32.mrb[0].mxu0
    %v4984 = vpop.f32.mrb[0].mxu0
    %4985 = vdwg.mxu0
    %4986 = vmatprep.subr.bf16.mxu0 %v3845
    %4987 = vmatpush1.bf16.msra.mxu0 %v3844
    %4988 = vmatprep.subr.bf16.mxu0 %v3861
    %4989 = vmatpush1.bf16.msra.mxu0 %v3860
    %4990 = vmatprep.subr.bf16.mxu0 %v3877
    %4991 = vmatpush1.bf16.msra.mxu0 %v3876
    %4992 = vmatprep.subr.bf16.mxu0 %v3893
    %4993 = vmatpush1.bf16.msra.mxu0 %v3892
    %4994 = vmatprep.subr.bf16.mxu0 %v3909
    %4995 = vmatpush1.bf16.msra.mxu0 %v3908
    %4996 = vmatprep.subr.bf16.mxu0 %v3925
    %4997 = vmatpush1.bf16.msra.mxu0 %v3924
    %4998 = vmatprep.subr.bf16.mxu0 %v3941
    %4999 = vmatpush1.bf16.msra.mxu0 %v3940
    %5000 = vmatprep.subr.bf16.mxu0 %v3957
    %5001 = vmatpush1.bf16.msra.mxu0 %v3956
    %5002 = vmatprep.subr.bf16.mxu0 %v3973
    %5003 = vmatpush1.bf16.msra.mxu0 %v3972
    %5004 = vmatprep.subr.bf16.mxu0 %v3989
    %5005 = vmatpush1.bf16.msra.mxu0 %v3988
    %5006 = vmatprep.subr.bf16.mxu0 %v4005
    %5007 = vmatpush1.bf16.msra.mxu0 %v4004
    %5008 = vmatprep.subr.bf16.mxu0 %v4021
    %5009 = vmatpush1.bf16.msra.mxu0 %v4020
    %5010 = vmatprep.subr.bf16.mxu0 %v4037
    %5011 = vmatpush1.bf16.msra.mxu0 %v4036
    %5012 = vmatprep.subr.bf16.mxu0 %v4053
    %5013 = vmatpush1.bf16.msra.mxu0 %v4052
    %5014 = vmatprep.subr.bf16.mxu0 %v4069
    %5015 = vmatpush1.bf16.msra.mxu0 %v4068
    %5016 = vmatprep.subr.bf16.mxu0 %v4085
    %5017 = vmatpush1.bf16.msra.mxu0 %v4084
    %5018 = vmatprep.mubr.bf16.mxu0 %v972
    %5019 = vmatmul.mubr.bf16.gmra.mrb[0].mxu0 %v971
    %v5020 = vpop.f32.mrb[0].mxu0
    %v5021 = vadd.f32 %v4980, %v5020
    %v5022 = vpop.f32.mrb[0].mxu0
    %v5023 = vadd.f32 %v4982, %v5022
    %v5024 = vpop.f32.mrb[0].mxu0
    %v5025 = vpop.f32.mrb[0].mxu0
    %5026 = vdwg.mxu0
    %5027 = vmatprep.subr.bf16.mxu0 %v4101
    %5028 = vmatpush1.bf16.msra.mxu0 %v4100
    %5029 = vmatprep.subr.bf16.mxu0 0
    %5030 = vmatpush1.bf16.msra.mxu0 0
    %5031 = vmatprep.subr.bf16.mxu0 0
    %5032 = vmatpush1.bf16.msra.mxu0 0
    %5033 = vmatprep.subr.bf16.mxu0 0
    %5034 = vmatpush1.bf16.msra.mxu0 0
    %5035 = vmatprep.subr.bf16.mxu0 0
    %5036 = vmatpush1.bf16.msra.mxu0 0
    %5037 = vmatprep.subr.bf16.mxu0 0
    %5038 = vmatpush1.bf16.msra.mxu0 0
    %5039 = vmatprep.subr.bf16.mxu0 0
    %5040 = vmatpush1.bf16.msra.mxu0 0
    %5041 = vmatprep.subr.bf16.mxu0 0
    %5042 = vmatpush1.bf16.msra.mxu0 0
    %5043 = vmatprep.subr.bf16.mxu0 0
    %5044 = vmatpush1.bf16.msra.mxu0 0
    %5045 = vmatprep.subr.bf16.mxu0 0
    %5046 = vmatpush1.bf16.msra.mxu0 0
    %5047 = vmatprep.subr.bf16.mxu0 0
    %5048 = vmatpush1.bf16.msra.mxu0 0
    %5049 = vmatprep.subr.bf16.mxu0 0
    %5050 = vmatpush1.bf16.msra.mxu0 0
    %5051 = vmatprep.subr.bf16.mxu0 0
    %5052 = vmatpush1.bf16.msra.mxu0 0
    %5053 = vmatprep.subr.bf16.mxu0 0
    %5054 = vmatpush1.bf16.msra.mxu0 0
    %5055 = vmatprep.subr.bf16.mxu0 0
    %5056 = vmatpush1.bf16.msra.mxu0 0
    %5057 = vmatprep.subr.bf16.mxu0 0
    %5058 = vmatpush1.bf16.msra.mxu0 0
    %5059 = vmatprep.mubr.bf16.mxu0 0
    %5060 = vmatmul.mubr.bf16.gmra.mrb[0].mxu0 %v4902
    %v5061 = vpop.f32.mrb[0].mxu0
    %v5062 = vadd.f32 %v5021, %v5061
    %v5063 = vpop.f32.mrb[0].mxu0
    %v5064 = vadd.f32 %v5023, %v5063
    %v5065 = vpop.f32.mrb[0].mxu0
    %v5066 = vpop.f32.mrb[0].mxu0
    %5067 = vdwg.mxu0
    %5068 = vmatprep.subr.bf16.mxu0 %v3335
    %5069 = vmatpush1.bf16.msra.mxu0 %v3334
    %5070 = vmatprep.subr.bf16.mxu0 %v3351
    %5071 = vmatpush1.bf16.msra.mxu0 %v3350
    %5072 = vmatprep.subr.bf16.mxu0 %v3367
    %5073 = vmatpush1.bf16.msra.mxu0 %v3366
    %5074 = vmatprep.subr.bf16.mxu0 %v3383
    %5075 = vmatpush1.bf16.msra.mxu0 %v3382
    %5076 = vmatprep.subr.bf16.mxu0 %v3399
    %5077 = vmatpush1.bf16.msra.mxu0 %v3398
    %5078 = vmatprep.subr.bf16.mxu0 %v3415
    %5079 = vmatpush1.bf16.msra.mxu0 %v3414
    %5080 = vmatprep.subr.bf16.mxu0 %v3431
    %5081 = vmatpush1.bf16.msra.mxu0 %v3430
    %5082 = vmatprep.subr.bf16.mxu0 %v3447
    %5083 = vmatpush1.bf16.msra.mxu0 %v3446
    %5084 = vmatprep.subr.bf16.mxu0 %v3463
    %5085 = vmatpush1.bf16.msra.mxu0 %v3462
    %5086 = vmatprep.subr.bf16.mxu0 %v3479
    %5087 = vmatpush1.bf16.msra.mxu0 %v3478
    %5088 = vmatprep.subr.bf16.mxu0 %v3495
    %5089 = vmatpush1.bf16.msra.mxu0 %v3494
    %5090 = vmatprep.subr.bf16.mxu0 %v3511
    %5091 = vmatpush1.bf16.msra.mxu0 %v3510
    %5092 = vmatprep.subr.bf16.mxu0 %v3527
    %5093 = vmatpush1.bf16.msra.mxu0 %v3526
    %5094 = vmatprep.subr.bf16.mxu0 %v3543
    %5095 = vmatpush1.bf16.msra.mxu0 %v3542
    %5096 = vmatprep.subr.bf16.mxu0 %v3559
    %5097 = vmatpush1.bf16.msra.mxu0 %v3558
    %5098 = vmatprep.subr.bf16.mxu0 %v3575
    %5099 = vmatpush1.bf16.msra.mxu0 %v3574
    %5100 = vmatprep.mubr.bf16.mxu0 %v968
    %5101 = vmatmul.mubr.bf16.gmra.mrb[0].mxu0 %v967
    %v5102 = vpop.f32.mrb[0].mxu0
    %v5103 = vadd.f32 %v887, %v5102
    %v5104 = vpop.f32.mrb[0].mxu0
    %v5105 = vadd.f32 %v891, %v5104
    %v5106 = vpop.f32.mrb[0].mxu0
    %v5107 = vpop.f32.mrb[0].mxu0
    %5108 = vdwg.mxu0
    %5109 = vmatprep.subr.bf16.mxu0 %v3591
    %5110 = vmatpush1.bf16.msra.mxu0 %v3590
    %5111 = vmatprep.subr.bf16.mxu0 %v3607
    %5112 = vmatpush1.bf16.msra.mxu0 %v3606
    %5113 = vmatprep.subr.bf16.mxu0 %v3623
    %5114 = vmatpush1.bf16.msra.mxu0 %v3622
    %5115 = vmatprep.subr.bf16.mxu0 %v3639
    %5116 = vmatpush1.bf16.msra.mxu0 %v3638
    %5117 = vmatprep.subr.bf16.mxu0 %v3655
    %5118 = vmatpush1.bf16.msra.mxu0 %v3654
    %5119 = vmatprep.subr.bf16.mxu0 %v3671
    %5120 = vmatpush1.bf16.msra.mxu0 %v3670
    %5121 = vmatprep.subr.bf16.mxu0 %v3687
    %5122 = vmatpush1.bf16.msra.mxu0 %v3686
    %5123 = vmatprep.subr.bf16.mxu0 %v3703
    %5124 = vmatpush1.bf16.msra.mxu0 %v3702
    %5125 = vmatprep.subr.bf16.mxu0 %v3719
    %5126 = vmatpush1.bf16.msra.mxu0 %v3718
    %5127 = vmatprep.subr.bf16.mxu0 %v3735
    %5128 = vmatpush1.bf16.msra.mxu0 %v3734
    %5129 = vmatprep.subr.bf16.mxu0 %v3751
    %5130 = vmatpush1.bf16.msra.mxu0 %v3750
    %5131 = vmatprep.subr.bf16.mxu0 %v3767
    %5132 = vmatpush1.bf16.msra.mxu0 %v3766
    %5133 = vmatprep.subr.bf16.mxu0 %v3783
    %5134 = vmatpush1.bf16.msra.mxu0 %v3782
    %5135 = vmatprep.subr.bf16.mxu0 %v3799
    %5136 = vmatpush1.bf16.msra.mxu0 %v3798
    %5137 = vmatprep.subr.bf16.mxu0 %v3815
    %5138 = vmatpush1.bf16.msra.mxu0 %v3814
    %5139 = vmatprep.subr.bf16.mxu0 %v3831
    %5140 = vmatpush1.bf16.msra.mxu0 %v3830
    %5141 = vmatprep.mubr.bf16.mxu0 %v970
    %5142 = vmatmul.mubr.bf16.gmra.mrb[0].mxu0 %v969
    %v5143 = vpop.f32.mrb[0].mxu0
    %v5144 = vadd.f32 %v5103, %v5143
    %v5145 = vpop.f32.mrb[0].mxu0
    %v5146 = vadd.f32 %v5105, %v5145
    %v5147 = vpop.f32.mrb[0].mxu0
    %v5148 = vpop.f32.mrb[0].mxu0
    %5149 = vdwg.mxu0
    %5150 = vmatprep.subr.bf16.mxu0 %v3847
    %5151 = vmatpush1.bf16.msra.mxu0 %v3846
    %5152 = vmatprep.subr.bf16.mxu0 %v3863
    %5153 = vmatpush1.bf16.msra.mxu0 %v3862
    %5154 = vmatprep.subr.bf16.mxu0 %v3879
    %5155 = vmatpush1.bf16.msra.mxu0 %v3878
    %5156 = vmatprep.subr.bf16.mxu0 %v3895
    %5157 = vmatpush1.bf16.msra.mxu0 %v3894
    %5158 = vmatprep.subr.bf16.mxu0 %v3911
    %5159 = vmatpush1.bf16.msra.mxu0 %v3910
    %5160 = vmatprep.subr.bf16.mxu0 %v3927
    %5161 = vmatpush1.bf16.msra.mxu0 %v3926
    %5162 = vmatprep.subr.bf16.mxu0 %v3943
    %5163 = vmatpush1.bf16.msra.mxu0 %v3942
    %5164 = vmatprep.subr.bf16.mxu0 %v3959
    %5165 = vmatpush1.bf16.msra.mxu0 %v3958
    %5166 = vmatprep.subr.bf16.mxu0 %v3975
    %5167 = vmatpush1.bf16.msra.mxu0 %v3974
    %5168 = vmatprep.subr.bf16.mxu0 %v3991
    %5169 = vmatpush1.bf16.msra.mxu0 %v3990
    %5170 = vmatprep.subr.bf16.mxu0 %v4007
    %5171 = vmatpush1.bf16.msra.mxu0 %v4006
    %5172 = vmatprep.subr.bf16.mxu0 %v4023
    %5173 = vmatpush1.bf16.msra.mxu0 %v4022
    %5174 = vmatprep.subr.bf16.mxu0 %v4039
    %5175 = vmatpush1.bf16.msra.mxu0 %v4038
    %5176 = vmatprep.subr.bf16.mxu0 %v4055
    %5177 = vmatpush1.bf16.msra.mxu0 %v4054
    %5178 = vmatprep.subr.bf16.mxu0 %v4071
    %5179 = vmatpush1.bf16.msra.mxu0 %v4070
    %5180 = vmatprep.subr.bf16.mxu0 %v4087
    %5181 = vmatpush1.bf16.msra.mxu0 %v4086
    %5182 = vmatprep.mubr.bf16.mxu0 %v972
    %5183 = vmatmul.mubr.bf16.gmra.mrb[0].mxu0 %v971
    %v5184 = vpop.f32.mrb[0].mxu0
    %v5185 = vadd.f32 %v5144, %v5184
    %v5186 = vpop.f32.mrb[0].mxu0
    %v5187 = vadd.f32 %v5146, %v5186
    %v5188 = vpop.f32.mrb[0].mxu0
    %v5189 = vpop.f32.mrb[0].mxu0
    %5190 = vdwg.mxu0
    %5191 = vmatprep.subr.bf16.mxu0 %v4103
    %5192 = vmatpush1.bf16.msra.mxu0 %v4102
    %5193 = vmatprep.subr.bf16.mxu0 0
    %5194 = vmatpush1.bf16.msra.mxu0 0
    %5195 = vmatprep.subr.bf16.mxu0 0
    %5196 = vmatpush1.bf16.msra.mxu0 0
    %5197 = vmatprep.subr.bf16.mxu0 0
    %5198 = vmatpush1.bf16.msra.mxu0 0
    %5199 = vmatprep.subr.bf16.mxu0 0
    %5200 = vmatpush1.bf16.msra.mxu0 0
    %5201 = vmatprep.subr.bf16.mxu0 0
    %5202 = vmatpush1.bf16.msra.mxu0 0
    %5203 = vmatprep.subr.bf16.mxu0 0
    %5204 = vmatpush1.bf16.msra.mxu0 0
    %5205 = vmatprep.subr.bf16.mxu0 0
    %5206 = vmatpush1.bf16.msra.mxu0 0
    %5207 = vmatprep.subr.bf16.mxu0 0
    %5208 = vmatpush1.bf16.msra.mxu0 0
    %5209 = vmatprep.subr.bf16.mxu0 0
    %5210 = vmatpush1.bf16.msra.mxu0 0
    %5211 = vmatprep.subr.bf16.mxu0 0
    %5212 = vmatpush1.bf16.msra.mxu0 0
    %5213 = vmatprep.subr.bf16.mxu0 0
    %5214 = vmatpush1.bf16.msra.mxu0 0
    %5215 = vmatprep.subr.bf16.mxu0 0
    %5216 = vmatpush1.bf16.msra.mxu0 0
    %5217 = vmatprep.subr.bf16.mxu0 0
    %5218 = vmatpush1.bf16.msra.mxu0 0
    %5219 = vmatprep.subr.bf16.mxu0 0
    %5220 = vmatpush1.bf16.msra.mxu0 0
    %5221 = vmatprep.subr.bf16.mxu0 0
    %5222 = vmatpush1.bf16.msra.mxu0 0
    %5223 = vmatprep.mubr.bf16.mxu0 0
    %5224 = vmatmul.mubr.bf16.gmra.mrb[0].mxu0 %v4902
    %v5225 = vpop.f32.mrb[0].mxu0
    %v5226 = vadd.f32 %v5185, %v5225
    %v5227 = vpop.f32.mrb[0].mxu0
    %v5228 = vadd.f32 %v5187, %v5227
    %v5229 = vpop.f32.mrb[0].mxu0
    %v5230 = vpop.f32.mrb[0].mxu0
    %5231 = vdwg.mxu0
    %5232 = vmatprep.subr.bf16.mxu0 %v3337
    %5233 = vmatpush1.bf16.msra.mxu0 %v3336
    %5234 = vmatprep.subr.bf16.mxu0 %v3353
    %5235 = vmatpush1.bf16.msra.mxu0 %v3352
    %5236 = vmatprep.subr.bf16.mxu0 %v3369
    %5237 = vmatpush1.bf16.msra.mxu0 %v3368
    %5238 = vmatprep.subr.bf16.mxu0 %v3385
    %5239 = vmatpush1.bf16.msra.mxu0 %v3384
    %5240 = vmatprep.subr.bf16.mxu0 %v3401
    %5241 = vmatpush1.bf16.msra.mxu0 %v3400
    %5242 = vmatprep.subr.bf16.mxu0 %v3417
    %5243 = vmatpush1.bf16.msra.mxu0 %v3416
    %5244 = vmatprep.subr.bf16.mxu0 %v3433
    %5245 = vmatpush1.bf16.msra.mxu0 %v3432
    %5246 = vmatprep.subr.bf16.mxu0 %v3449
    %5247 = vmatpush1.bf16.msra.mxu0 %v3448
    %5248 = vmatprep.subr.bf16.mxu0 %v3465
    %5249 = vmatpush1.bf16.msra.mxu0 %v3464
    %5250 = vmatprep.subr.bf16.mxu0 %v3481
    %5251 = vmatpush1.bf16.msra.mxu0 %v3480
    %5252 = vmatprep.subr.bf16.mxu0 %v3497
    %5253 = vmatpush1.bf16.msra.mxu0 %v3496
    %5254 = vmatprep.subr.bf16.mxu0 %v3513
    %5255 = vmatpush1.bf16.msra.mxu0 %v3512
    %5256 = vmatprep.subr.bf16.mxu0 %v3529
    %5257 = vmatpush1.bf16.msra.mxu0 %v3528
    %5258 = vmatprep.subr.bf16.mxu0 %v3545
    %5259 = vmatpush1.bf16.msra.mxu0 %v3544
    %5260 = vmatprep.subr.bf16.mxu0 %v3561
    %5261 = vmatpush1.bf16.msra.mxu0 %v3560
    %5262 = vmatprep.subr.bf16.mxu0 %v3577
    %5263 = vmatpush1.bf16.msra.mxu0 %v3576
    %5264 = vmatprep.mubr.bf16.mxu0 %v968
    %5265 = vmatmul.mubr.bf16.gmra.mrb[0].mxu0 %v967
    %v5266 = vpop.f32.mrb[0].mxu0
    %v5267 = vadd.f32 %v895, %v5266
    %v5268 = vpop.f32.mrb[0].mxu0
    %v5269 = vadd.f32 %v899, %v5268
    %v5270 = vpop.f32.mrb[0].mxu0
    %v5271 = vpop.f32.mrb[0].mxu0
    %5272 = vdwg.mxu0
    %5273 = vmatprep.subr.bf16.mxu0 %v3593
    %5274 = vmatpush1.bf16.msra.mxu0 %v3592
    %5275 = vmatprep.subr.bf16.mxu0 %v3609
    %5276 = vmatpush1.bf16.msra.mxu0 %v3608
    %5277 = vmatprep.subr.bf16.mxu0 %v3625
    %5278 = vmatpush1.bf16.msra.mxu0 %v3624
    %5279 = vmatprep.subr.bf16.mxu0 %v3641
    %5280 = vmatpush1.bf16.msra.mxu0 %v3640
    %5281 = vmatprep.subr.bf16.mxu0 %v3657
    %5282 = vmatpush1.bf16.msra.mxu0 %v3656
    %5283 = vmatprep.subr.bf16.mxu0 %v3673
    %5284 = vmatpush1.bf16.msra.mxu0 %v3672
    %5285 = vmatprep.subr.bf16.mxu0 %v3689
    %5286 = vmatpush1.bf16.msra.mxu0 %v3688
    %5287 = vmatprep.subr.bf16.mxu0 %v3705
    %5288 = vmatpush1.bf16.msra.mxu0 %v3704
    %5289 = vmatprep.subr.bf16.mxu0 %v3721
    %5290 = vmatpush1.bf16.msra.mxu0 %v3720
    %5291 = vmatprep.subr.bf16.mxu0 %v3737
    %5292 = vmatpush1.bf16.msra.mxu0 %v3736
    %5293 = vmatprep.subr.bf16.mxu0 %v3753
    %5294 = vmatpush1.bf16.msra.mxu0 %v3752
    %5295 = vmatprep.subr.bf16.mxu0 %v3769
    %5296 = vmatpush1.bf16.msra.mxu0 %v3768
    %5297 = vmatprep.subr.bf16.mxu0 %v3785
    %5298 = vmatpush1.bf16.msra.mxu0 %v3784
    %5299 = vmatprep.subr.bf16.mxu0 %v3801
    %5300 = vmatpush1.bf16.msra.mxu0 %v3800
    %5301 = vmatprep.subr.bf16.mxu0 %v3817
    %5302 = vmatpush1.bf16.msra.mxu0 %v3816
    %5303 = vmatprep.subr.bf16.mxu0 %v3833
    %5304 = vmatpush1.bf16.msra.mxu0 %v3832
    %5305 = vmatprep.mubr.bf16.mxu0 %v970
    %5306 = vmatmul.mubr.bf16.gmra.mrb[0].mxu0 %v969
    %v5307 = vpop.f32.mrb[0].mxu0
    %v5308 = vadd.f32 %v5267, %v5307
    %v5309 = vpop.f32.mrb[0].mxu0
    %v5310 = vadd.f32 %v5269, %v5309
    %v5311 = vpop.f32.mrb[0].mxu0
    %v5312 = vpop.f32.mrb[0].mxu0
    %5313 = vdwg.mxu0
    %5314 = vmatprep.subr.bf16.mxu0 %v3849
    %5315 = vmatpush1.bf16.msra.mxu0 %v3848
    %5316 = vmatprep.subr.bf16.mxu0 %v3865
    %5317 = vmatpush1.bf16.msra.mxu0 %v3864
    %5318 = vmatprep.subr.bf16.mxu0 %v3881
    %5319 = vmatpush1.bf16.msra.mxu0 %v3880
    %5320 = vmatprep.subr.bf16.mxu0 %v3897
    %5321 = vmatpush1.bf16.msra.mxu0 %v3896
    %5322 = vmatprep.subr.bf16.mxu0 %v3913
    %5323 = vmatpush1.bf16.msra.mxu0 %v3912
    %5324 = vmatprep.subr.bf16.mxu0 %v3929
    %5325 = vmatpush1.bf16.msra.mxu0 %v3928
    %5326 = vmatprep.subr.bf16.mxu0 %v3945
    %5327 = vmatpush1.bf16.msra.mxu0 %v3944
    %5328 = vmatprep.subr.bf16.mxu0 %v3961
    %5329 = vmatpush1.bf16.msra.mxu0 %v3960
    %5330 = vmatprep.subr.bf16.mxu0 %v3977
    %5331 = vmatpush1.bf16.msra.mxu0 %v3976
    %5332 = vmatprep.subr.bf16.mxu0 %v3993
    %5333 = vmatpush1.bf16.msra.mxu0 %v3992
    %5334 = vmatprep.subr.bf16.mxu0 %v4009
    %5335 = vmatpush1.bf16.msra.mxu0 %v4008
    %5336 = vmatprep.subr.bf16.mxu0 %v4025
    %5337 = vmatpush1.bf16.msra.mxu0 %v4024
    %5338 = vmatprep.subr.bf16.mxu0 %v4041
    %5339 = vmatpush1.bf16.msra.mxu0 %v4040
    %5340 = vmatprep.subr.bf16.mxu0 %v4057
    %5341 = vmatpush1.bf16.msra.mxu0 %v4056
    %5342 = vmatprep.subr.bf16.mxu0 %v4073
    %5343 = vmatpush1.bf16.msra.mxu0 %v4072
    %5344 = vmatprep.subr.bf16.mxu0 %v4089
    %5345 = vmatpush1.bf16.msra.mxu0 %v4088
    %5346 = vmatprep.mubr.bf16.mxu0 %v972
    %5347 = vmatmul.mubr.bf16.gmra.mrb[0].mxu0 %v971
    %v5348 = vpop.f32.mrb[0].mxu0
    %v5349 = vadd.f32 %v5308, %v5348
    %v5350 = vpop.f32.mrb[0].mxu0
    %v5351 = vadd.f32 %v5310, %v5350
    %v5352 = vpop.f32.mrb[0].mxu0
    %v5353 = vpop.f32.mrb[0].mxu0
    %5354 = vdwg.mxu0
    %5355 = vmatprep.subr.bf16.mxu0 %v4105
    %5356 = vmatpush1.bf16.msra.mxu0 %v4104
    %5357 = vmatprep.subr.bf16.mxu0 0
    %5358 = vmatpush1.bf16.msra.mxu0 0
    %5359 = vmatprep.subr.bf16.mxu0 0
    %5360 = vmatpush1.bf16.msra.mxu0 0
    %5361 = vmatprep.subr.bf16.mxu0 0
    %5362 = vmatpush1.bf16.msra.mxu0 0
    %5363 = vmatprep.subr.bf16.mxu0 0
    %5364 = vmatpush1.bf16.msra.mxu0 0
    %5365 = vmatprep.subr.bf16.mxu0 0
    %5366 = vmatpush1.bf16.msra.mxu0 0
    %5367 = vmatprep.subr.bf16.mxu0 0
    %5368 = vmatpush1.bf16.msra.mxu0 0
    %5369 = vmatprep.subr.bf16.mxu0 0
    %5370 = vmatpush1.bf16.msra.mxu0 0
    %5371 = vmatprep.subr.bf16.mxu0 0
    %5372 = vmatpush1.bf16.msra.mxu0 0
    %5373 = vmatprep.subr.bf16.mxu0 0
    %5374 = vmatpush1.bf16.msra.mxu0 0
    %5375 = vmatprep.subr.bf16.mxu0 0
    %5376 = vmatpush1.bf16.msra.mxu0 0
    %5377 = vmatprep.subr.bf16.mxu0 0
    %5378 = vmatpush1.bf16.msra.mxu0 0
    %5379 = vmatprep.subr.bf16.mxu0 0
    %5380 = vmatpush1.bf16.msra.mxu0 0
    %5381 = vmatprep.subr.bf16.mxu0 0
    %5382 = vmatpush1.bf16.msra.mxu0 0
    %5383 = vmatprep.subr.bf16.mxu0 0
    %5384 = vmatpush1.bf16.msra.mxu0 0
    %5385 = vmatprep.subr.bf16.mxu0 0
    %5386 = vmatpush1.bf16.msra.mxu0 0
    %5387 = vmatprep.mubr.bf16.mxu0 0
    %5388 = vmatmul.mubr.bf16.gmra.mrb[0].mxu0 %v4902
    %v5389 = vpop.f32.mrb[0].mxu0
    %v5390 = vadd.f32 %v5349, %v5389
    %v5391 = vpop.f32.mrb[0].mxu0
    %v5392 = vadd.f32 %v5351, %v5391
    %v5393 = vpop.f32.mrb[0].mxu0
    %v5394 = vpop.f32.mrb[0].mxu0
    %5395 = vdwg.mxu0
    %5396 = vmatprep.subr.bf16.mxu0 %v3339
    %5397 = vmatpush1.bf16.msra.mxu0 %v3338
    %5398 = vmatprep.subr.bf16.mxu0 %v3355
    %5399 = vmatpush1.bf16.msra.mxu0 %v3354
    %5400 = vmatprep.subr.bf16.mxu0 %v3371
    %5401 = vmatpush1.bf16.msra.mxu0 %v3370
    %5402 = vmatprep.subr.bf16.mxu0 %v3387
    %5403 = vmatpush1.bf16.msra.mxu0 %v3386
    %5404 = vmatprep.subr.bf16.mxu0 %v3403
    %5405 = vmatpush1.bf16.msra.mxu0 %v3402
    %5406 = vmatprep.subr.bf16.mxu0 %v3419
    %5407 = vmatpush1.bf16.msra.mxu0 %v3418
    %5408 = vmatprep.subr.bf16.mxu0 %v3435
    %5409 = vmatpush1.bf16.msra.mxu0 %v3434
    %5410 = vmatprep.subr.bf16.mxu0 %v3451
    %5411 = vmatpush1.bf16.msra.mxu0 %v3450
    %5412 = vmatprep.subr.bf16.mxu0 %v3467
    %5413 = vmatpush1.bf16.msra.mxu0 %v3466
    %5414 = vmatprep.subr.bf16.mxu0 %v3483
    %5415 = vmatpush1.bf16.msra.mxu0 %v3482
    %5416 = vmatprep.subr.bf16.mxu0 %v3499
    %5417 = vmatpush1.bf16.msra.mxu0 %v3498
    %5418 = vmatprep.subr.bf16.mxu0 %v3515
    %5419 = vmatpush1.bf16.msra.mxu0 %v3514
    %5420 = vmatprep.subr.bf16.mxu0 %v3531
    %5421 = vmatpush1.bf16.msra.mxu0 %v3530
    %5422 = vmatprep.subr.bf16.mxu0 %v3547
    %5423 = vmatpush1.bf16.msra.mxu0 %v3546
    %5424 = vmatprep.subr.bf16.mxu0 %v3563
    %5425 = vmatpush1.bf16.msra.mxu0 %v3562
    %5426 = vmatprep.subr.bf16.mxu0 %v3579
    %5427 = vmatpush1.bf16.msra.mxu0 %v3578
    %5428 = vmatprep.mubr.bf16.mxu0 %v968
    %5429 = vmatmul.mubr.bf16.gmra.mrb[0].mxu0 %v967
    %v5430 = vpop.f32.mrb[0].mxu0
    %v5431 = vadd.f32 %v903, %v5430
    %v5432 = vpop.f32.mrb[0].mxu0
    %v5433 = vadd.f32 %v907, %v5432
    %v5434 = vpop.f32.mrb[0].mxu0
    %v5435 = vpop.f32.mrb[0].mxu0
    %5436 = vdwg.mxu0
    %5437 = vmatprep.subr.bf16.mxu0 %v3595
    %5438 = vmatpush1.bf16.msra.mxu0 %v3594
    %5439 = vmatprep.subr.bf16.mxu0 %v3611
    %5440 = vmatpush1.bf16.msra.mxu0 %v3610
    %5441 = vmatprep.subr.bf16.mxu0 %v3627
    %5442 = vmatpush1.bf16.msra.mxu0 %v3626
    %5443 = vmatprep.subr.bf16.mxu0 %v3643
    %5444 = vmatpush1.bf16.msra.mxu0 %v3642
    %5445 = vmatprep.subr.bf16.mxu0 %v3659
    %5446 = vmatpush1.bf16.msra.mxu0 %v3658
    %5447 = vmatprep.subr.bf16.mxu0 %v3675
    %5448 = vmatpush1.bf16.msra.mxu0 %v3674
    %5449 = vmatprep.subr.bf16.mxu0 %v3691
    %5450 = vmatpush1.bf16.msra.mxu0 %v3690
    %5451 = vmatprep.subr.bf16.mxu0 %v3707
    %5452 = vmatpush1.bf16.msra.mxu0 %v3706
    %5453 = vmatprep.subr.bf16.mxu0 %v3723
    %5454 = vmatpush1.bf16.msra.mxu0 %v3722
    %5455 = vmatprep.subr.bf16.mxu0 %v3739
    %5456 = vmatpush1.bf16.msra.mxu0 %v3738
    %5457 = vmatprep.subr.bf16.mxu0 %v3755
    %5458 = vmatpush1.bf16.msra.mxu0 %v3754
    %5459 = vmatprep.subr.bf16.mxu0 %v3771
    %5460 = vmatpush1.bf16.msra.mxu0 %v3770
    %5461 = vmatprep.subr.bf16.mxu0 %v3787
    %5462 = vmatpush1.bf16.msra.mxu0 %v3786
    %5463 = vmatprep.subr.bf16.mxu0 %v3803
    %5464 = vmatpush1.bf16.msra.mxu0 %v3802
    %5465 = vmatprep.subr.bf16.mxu0 %v3819
    %5466 = vmatpush1.bf16.msra.mxu0 %v3818
    %5467 = vmatprep.subr.bf16.mxu0 %v3835
    %5468 = vmatpush1.bf16.msra.mxu0 %v3834
    %5469 = vmatprep.mubr.bf16.mxu0 %v970
    %5470 = vmatmul.mubr.bf16.gmra.mrb[0].mxu0 %v969
    %v5471 = vpop.f32.mrb[0].mxu0
    %v5472 = vadd.f32 %v5431, %v5471
    %v5473 = vpop.f32.mrb[0].mxu0
    %v5474 = vadd.f32 %v5433, %v5473
    %v5475 = vpop.f32.mrb[0].mxu0
    %v5476 = vpop.f32.mrb[0].mxu0
    %5477 = vdwg.mxu0
    %5478 = vmatprep.subr.bf16.mxu0 %v3851
    %5479 = vmatpush1.bf16.msra.mxu0 %v3850
    %5480 = vmatprep.subr.bf16.mxu0 %v3867
    %5481 = vmatpush1.bf16.msra.mxu0 %v3866
    %5482 = vmatprep.subr.bf16.mxu0 %v3883
    %5483 = vmatpush1.bf16.msra.mxu0 %v3882
    %5484 = vmatprep.subr.bf16.mxu0 %v3899
    %5485 = vmatpush1.bf16.msra.mxu0 %v3898
    %5486 = vmatprep.subr.bf16.mxu0 %v3915
    %5487 = vmatpush1.bf16.msra.mxu0 %v3914
    %5488 = vmatprep.subr.bf16.mxu0 %v3931
    %5489 = vmatpush1.bf16.msra.mxu0 %v3930
    %5490 = vmatprep.subr.bf16.mxu0 %v3947
    %5491 = vmatpush1.bf16.msra.mxu0 %v3946
    %5492 = vmatprep.subr.bf16.mxu0 %v3963
    %5493 = vmatpush1.bf16.msra.mxu0 %v3962
    %5494 = vmatprep.subr.bf16.mxu0 %v3979
    %5495 = vmatpush1.bf16.msra.mxu0 %v3978
    %5496 = vmatprep.subr.bf16.mxu0 %v3995
    %5497 = vmatpush1.bf16.msra.mxu0 %v3994
    %5498 = vmatprep.subr.bf16.mxu0 %v4011
    %5499 = vmatpush1.bf16.msra.mxu0 %v4010
    %5500 = vmatprep.subr.bf16.mxu0 %v4027
    %5501 = vmatpush1.bf16.msra.mxu0 %v4026
    %5502 = vmatprep.subr.bf16.mxu0 %v4043
    %5503 = vmatpush1.bf16.msra.mxu0 %v4042
    %5504 = vmatprep.subr.bf16.mxu0 %v4059
    %5505 = vmatpush1.bf16.msra.mxu0 %v4058
    %5506 = vmatprep.subr.bf16.mxu0 %v4075
    %5507 = vmatpush1.bf16.msra.mxu0 %v4074
    %5508 = vmatprep.subr.bf16.mxu0 %v4091
    %5509 = vmatpush1.bf16.msra.mxu0 %v4090
    %5510 = vmatprep.mubr.bf16.mxu0 %v972
    %5511 = vmatmul.mubr.bf16.gmra.mrb[0].mxu0 %v971
    %v5512 = vpop.f32.mrb[0].mxu0
    %v5513 = vadd.f32 %v5472, %v5512
    %v5514 = vpop.f32.mrb[0].mxu0
    %v5515 = vadd.f32 %v5474, %v5514
    %v5516 = vpop.f32.mrb[0].mxu0
    %v5517 = vpop.f32.mrb[0].mxu0
    %5518 = vdwg.mxu0
    %5519 = vmatprep.subr.bf16.mxu0 %v4107
    %5520 = vmatpush1.bf16.msra.mxu0 %v4106
    %5521 = vmatprep.subr.bf16.mxu0 0
    %5522 = vmatpush1.bf16.msra.mxu0 0
    %5523 = vmatprep.subr.bf16.mxu0 0
    %5524 = vmatpush1.bf16.msra.mxu0 0
    %5525 = vmatprep.subr.bf16.mxu0 0
    %5526 = vmatpush1.bf16.msra.mxu0 0
    %5527 = vmatprep.subr.bf16.mxu0 0
    %5528 = vmatpush1.bf16.msra.mxu0 0
    %5529 = vmatprep.subr.bf16.mxu0 0
    %5530 = vmatpush1.bf16.msra.mxu0 0
    %5531 = vmatprep.subr.bf16.mxu0 0
    %5532 = vmatpush1.bf16.msra.mxu0 0
    %5533 = vmatprep.subr.bf16.mxu0 0
    %5534 = vmatpush1.bf16.msra.mxu0 0
    %5535 = vmatprep.subr.bf16.mxu0 0
    %5536 = vmatpush1.bf16.msra.mxu0 0
    %5537 = vmatprep.subr.bf16.mxu0 0
    %5538 = vmatpush1.bf16.msra.mxu0 0
    %5539 = vmatprep.subr.bf16.mxu0 0
    %5540 = vmatpush1.bf16.msra.mxu0 0
    %5541 = vmatprep.subr.bf16.mxu0 0
    %5542 = vmatpush1.bf16.msra.mxu0 0
    %5543 = vmatprep.subr.bf16.mxu0 0
    %5544 = vmatpush1.bf16.msra.mxu0 0
    %5545 = vmatprep.subr.bf16.mxu0 0
    %5546 = vmatpush1.bf16.msra.mxu0 0
    %5547 = vmatprep.subr.bf16.mxu0 0
    %5548 = vmatpush1.bf16.msra.mxu0 0
    %5549 = vmatprep.subr.bf16.mxu0 0
    %5550 = vmatpush1.bf16.msra.mxu0 0
    %5551 = vmatprep.mubr.bf16.mxu0 0
    %5552 = vmatmul.mubr.bf16.gmra.mrb[0].mxu0 %v4902
    %v5553 = vpop.f32.mrb[0].mxu0
    %v5554 = vadd.f32 %v5513, %v5553
    %v5555 = vpop.f32.mrb[0].mxu0
    %v5556 = vadd.f32 %v5515, %v5555
    %v5557 = vpop.f32.mrb[0].mxu0
    %v5558 = vpop.f32.mrb[0].mxu0
    %5559 = vdwg.mxu0
    %5560 = vmatprep.subr.bf16.mxu0 %v3341
    %5561 = vmatpush1.bf16.msra.mxu0 %v3340
    %5562 = vmatprep.subr.bf16.mxu0 %v3357
    %5563 = vmatpush1.bf16.msra.mxu0 %v3356
    %5564 = vmatprep.subr.bf16.mxu0 %v3373
    %5565 = vmatpush1.bf16.msra.mxu0 %v3372
    %5566 = vmatprep.subr.bf16.mxu0 %v3389
    %5567 = vmatpush1.bf16.msra.mxu0 %v3388
    %5568 = vmatprep.subr.bf16.mxu0 %v3405
    %5569 = vmatpush1.bf16.msra.mxu0 %v3404
    %5570 = vmatprep.subr.bf16.mxu0 %v3421
    %5571 = vmatpush1.bf16.msra.mxu0 %v3420
    %5572 = vmatprep.subr.bf16.mxu0 %v3437
    %5573 = vmatpush1.bf16.msra.mxu0 %v3436
    %5574 = vmatprep.subr.bf16.mxu0 %v3453
    %5575 = vmatpush1.bf16.msra.mxu0 %v3452
    %5576 = vmatprep.subr.bf16.mxu0 %v3469
    %5577 = vmatpush1.bf16.msra.mxu0 %v3468
    %5578 = vmatprep.subr.bf16.mxu0 %v3485
    %5579 = vmatpush1.bf16.msra.mxu0 %v3484
    %5580 = vmatprep.subr.bf16.mxu0 %v3501
    %5581 = vmatpush1.bf16.msra.mxu0 %v3500
    %5582 = vmatprep.subr.bf16.mxu0 %v3517
    %5583 = vmatpush1.bf16.msra.mxu0 %v3516
    %5584 = vmatprep.subr.bf16.mxu0 %v3533
    %5585 = vmatpush1.bf16.msra.mxu0 %v3532
    %5586 = vmatprep.subr.bf16.mxu0 %v3549
    %5587 = vmatpush1.bf16.msra.mxu0 %v3548
    %5588 = vmatprep.subr.bf16.mxu0 %v3565
    %5589 = vmatpush1.bf16.msra.mxu0 %v3564
    %5590 = vmatprep.subr.bf16.mxu0 %v3581
    %5591 = vmatpush1.bf16.msra.mxu0 %v3580
    %5592 = vmatprep.mubr.bf16.mxu0 %v968
    %5593 = vmatmul.mubr.bf16.gmra.mrb[0].mxu0 %v967
    %v5594 = vpop.f32.mrb[0].mxu0
    %v5595 = vadd.f32 %v911, %v5594
    %v5596 = vpop.f32.mrb[0].mxu0
    %v5597 = vadd.f32 %v915, %v5596
    %v5598 = vpop.f32.mrb[0].mxu0
    %v5599 = vpop.f32.mrb[0].mxu0
    %5600 = vdwg.mxu0
    %5601 = vmatprep.subr.bf16.mxu0 %v3597
    %5602 = vmatpush1.bf16.msra.mxu0 %v3596
    %5603 = vmatprep.subr.bf16.mxu0 %v3613
    %5604 = vmatpush1.bf16.msra.mxu0 %v3612
    %5605 = vmatprep.subr.bf16.mxu0 %v3629
    %5606 = vmatpush1.bf16.msra.mxu0 %v3628
    %5607 = vmatprep.subr.bf16.mxu0 %v3645
    %5608 = vmatpush1.bf16.msra.mxu0 %v3644
    %5609 = vmatprep.subr.bf16.mxu0 %v3661
    %5610 = vmatpush1.bf16.msra.mxu0 %v3660
    %5611 = vmatprep.subr.bf16.mxu0 %v3677
    %5612 = vmatpush1.bf16.msra.mxu0 %v3676
    %5613 = vmatprep.subr.bf16.mxu0 %v3693
    %5614 = vmatpush1.bf16.msra.mxu0 %v3692
    %5615 = vmatprep.subr.bf16.mxu0 %v3709
    %5616 = vmatpush1.bf16.msra.mxu0 %v3708
    %5617 = vmatprep.subr.bf16.mxu0 %v3725
    %5618 = vmatpush1.bf16.msra.mxu0 %v3724
    %5619 = vmatprep.subr.bf16.mxu0 %v3741
    %5620 = vmatpush1.bf16.msra.mxu0 %v3740
    %5621 = vmatprep.subr.bf16.mxu0 %v3757
    %5622 = vmatpush1.bf16.msra.mxu0 %v3756
    %5623 = vmatprep.subr.bf16.mxu0 %v3773
    %5624 = vmatpush1.bf16.msra.mxu0 %v3772
    %5625 = vmatprep.subr.bf16.mxu0 %v3789
    %5626 = vmatpush1.bf16.msra.mxu0 %v3788
    %5627 = vmatprep.subr.bf16.mxu0 %v3805
    %5628 = vmatpush1.bf16.msra.mxu0 %v3804
    %5629 = vmatprep.subr.bf16.mxu0 %v3821
    %5630 = vmatpush1.bf16.msra.mxu0 %v3820
    %5631 = vmatprep.subr.bf16.mxu0 %v3837
    %5632 = vmatpush1.bf16.msra.mxu0 %v3836
    %5633 = vmatprep.mubr.bf16.mxu0 %v970
    %5634 = vmatmul.mubr.bf16.gmra.mrb[0].mxu0 %v969
    %v5635 = vpop.f32.mrb[0].mxu0
    %v5636 = vadd.f32 %v5595, %v5635
    %v5637 = vpop.f32.mrb[0].mxu0
    %v5638 = vadd.f32 %v5597, %v5637
    %v5639 = vpop.f32.mrb[0].mxu0
    %v5640 = vpop.f32.mrb[0].mxu0
    %5641 = vdwg.mxu0
    %5642 = vmatprep.subr.bf16.mxu0 %v3853
    %5643 = vmatpush1.bf16.msra.mxu0 %v3852
    %5644 = vmatprep.subr.bf16.mxu0 %v3869
    %5645 = vmatpush1.bf16.msra.mxu0 %v3868
    %5646 = vmatprep.subr.bf16.mxu0 %v3885
    %5647 = vmatpush1.bf16.msra.mxu0 %v3884
    %5648 = vmatprep.subr.bf16.mxu0 %v3901
    %5649 = vmatpush1.bf16.msra.mxu0 %v3900
    %5650 = vmatprep.subr.bf16.mxu0 %v3917
    %5651 = vmatpush1.bf16.msra.mxu0 %v3916
    %5652 = vmatprep.subr.bf16.mxu0 %v3933
    %5653 = vmatpush1.bf16.msra.mxu0 %v3932
    %5654 = vmatprep.subr.bf16.mxu0 %v3949
    %5655 = vmatpush1.bf16.msra.mxu0 %v3948
    %5656 = vmatprep.subr.bf16.mxu0 %v3965
    %5657 = vmatpush1.bf16.msra.mxu0 %v3964
    %5658 = vmatprep.subr.bf16.mxu0 %v3981
    %5659 = vmatpush1.bf16.msra.mxu0 %v3980
    %5660 = vmatprep.subr.bf16.mxu0 %v3997
    %5661 = vmatpush1.bf16.msra.mxu0 %v3996
    %5662 = vmatprep.subr.bf16.mxu0 %v4013
    %5663 = vmatpush1.bf16.msra.mxu0 %v4012
    %5664 = vmatprep.subr.bf16.mxu0 %v4029
    %5665 = vmatpush1.bf16.msra.mxu0 %v4028
    %5666 = vmatprep.subr.bf16.mxu0 %v4045
    %5667 = vmatpush1.bf16.msra.mxu0 %v4044
    %5668 = vmatprep.subr.bf16.mxu0 %v4061
    %5669 = vmatpush1.bf16.msra.mxu0 %v4060
    %5670 = vmatprep.subr.bf16.mxu0 %v4077
    %5671 = vmatpush1.bf16.msra.mxu0 %v4076
    %5672 = vmatprep.subr.bf16.mxu0 %v4093
    %5673 = vmatpush1.bf16.msra.mxu0 %v4092
    %5674 = vmatprep.mubr.bf16.mxu0 %v972
    %5675 = vmatmul.mubr.bf16.gmra.mrb[0].mxu0 %v971
    %v5676 = vpop.f32.mrb[0].mxu0
    %v5677 = vadd.f32 %v5636, %v5676
    %v5678 = vpop.f32.mrb[0].mxu0
    %v5679 = vadd.f32 %v5638, %v5678
    %v5680 = vpop.f32.mrb[0].mxu0
    %v5681 = vpop.f32.mrb[0].mxu0
    %5682 = vdwg.mxu0
    %5683 = vmatprep.subr.bf16.mxu0 %v4109
    %5684 = vmatpush1.bf16.msra.mxu0 %v4108
    %5685 = vmatprep.subr.bf16.mxu0 0
    %5686 = vmatpush1.bf16.msra.mxu0 0
    %5687 = vmatprep.subr.bf16.mxu0 0
    %5688 = vmatpush1.bf16.msra.mxu0 0
    %5689 = vmatprep.subr.bf16.mxu0 0
    %5690 = vmatpush1.bf16.msra.mxu0 0
    %5691 = vmatprep.subr.bf16.mxu0 0
    %5692 = vmatpush1.bf16.msra.mxu0 0
    %5693 = vmatprep.subr.bf16.mxu0 0
    %5694 = vmatpush1.bf16.msra.mxu0 0
    %5695 = vmatprep.subr.bf16.mxu0 0
    %5696 = vmatpush1.bf16.msra.mxu0 0
    %5697 = vmatprep.subr.bf16.mxu0 0
    %5698 = vmatpush1.bf16.msra.mxu0 0
    %5699 = vmatprep.subr.bf16.mxu0 0
    %5700 = vmatpush1.bf16.msra.mxu0 0
    %5701 = vmatprep.subr.bf16.mxu0 0
    %5702 = vmatpush1.bf16.msra.mxu0 0
    %5703 = vmatprep.subr.bf16.mxu0 0
    %5704 = vmatpush1.bf16.msra.mxu0 0
    %5705 = vmatprep.subr.bf16.mxu0 0
    %5706 = vmatpush1.bf16.msra.mxu0 0
    %5707 = vmatprep.subr.bf16.mxu0 0
    %5708 = vmatpush1.bf16.msra.mxu0 0
    %5709 = vmatprep.subr.bf16.mxu0 0
    %5710 = vmatpush1.bf16.msra.mxu0 0
    %5711 = vmatprep.subr.bf16.mxu0 0
    %5712 = vmatpush1.bf16.msra.mxu0 0
    %5713 = vmatprep.subr.bf16.mxu0 0
    %5714 = vmatpush1.bf16.msra.mxu0 0
    %5715 = vmatprep.mubr.bf16.mxu0 0
    %5716 = vmatmul.mubr.bf16.gmra.mrb[0].mxu0 %v4902
    %v5717 = vpop.f32.mrb[0].mxu0
    %v5718 = vadd.f32 %v5677, %v5717
    %v5719 = vpop.f32.mrb[0].mxu0
    %v5720 = vadd.f32 %v5679, %v5719
    %v5721 = vpop.f32.mrb[0].mxu0
    %v5722 = vpop.f32.mrb[0].mxu0
    %5723 = vdwg.mxu0
    %5724 = vmatprep.subr.bf16.mxu0 %v3343
    %5725 = vmatpush1.bf16.msra.mxu0 %v3342
    %5726 = vmatprep.subr.bf16.mxu0 %v3359
    %5727 = vmatpush1.bf16.msra.mxu0 %v3358
    %5728 = vmatprep.subr.bf16.mxu0 %v3375
    %5729 = vmatpush1.bf16.msra.mxu0 %v3374
    %5730 = vmatprep.subr.bf16.mxu0 %v3391
    %5731 = vmatpush1.bf16.msra.mxu0 %v3390
    %5732 = vmatprep.subr.bf16.mxu0 %v3407
    %5733 = vmatpush1.bf16.msra.mxu0 %v3406
    %5734 = vmatprep.subr.bf16.mxu0 %v3423
    %5735 = vmatpush1.bf16.msra.mxu0 %v3422
    %5736 = vmatprep.subr.bf16.mxu0 %v3439
    %5737 = vmatpush1.bf16.msra.mxu0 %v3438
    %5738 = vmatprep.subr.bf16.mxu0 %v3455
    %5739 = vmatpush1.bf16.msra.mxu0 %v3454
    %5740 = vmatprep.subr.bf16.mxu0 %v3471
    %5741 = vmatpush1.bf16.msra.mxu0 %v3470
    %5742 = vmatprep.subr.bf16.mxu0 %v3487
    %5743 = vmatpush1.bf16.msra.mxu0 %v3486
    %5744 = vmatprep.subr.bf16.mxu0 %v3503
    %5745 = vmatpush1.bf16.msra.mxu0 %v3502
    %5746 = vmatprep.subr.bf16.mxu0 %v3519
    %5747 = vmatpush1.bf16.msra.mxu0 %v3518
    %5748 = vmatprep.subr.bf16.mxu0 %v3535
    %5749 = vmatpush1.bf16.msra.mxu0 %v3534
    %5750 = vmatprep.subr.bf16.mxu0 %v3551
    %5751 = vmatpush1.bf16.msra.mxu0 %v3550
    %5752 = vmatprep.subr.bf16.mxu0 %v3567
    %5753 = vmatpush1.bf16.msra.mxu0 %v3566
    %5754 = vmatprep.subr.bf16.mxu0 %v3583
    %5755 = vmatpush1.bf16.msra.mxu0 %v3582
    %5756 = vmatprep.mubr.bf16.mxu0 %v968
    %5757 = vmatmul.mubr.bf16.gmra.mrb[0].mxu0 %v967
    %v5758 = vpop.f32.mrb[0].mxu0
    %v5759 = vadd.f32 %v919, %v5758
    %v5760 = vpop.f32.mrb[0].mxu0
    %v5761 = vadd.f32 %v923, %v5760
    %v5762 = vpop.f32.mrb[0].mxu0
    %v5763 = vpop.f32.mrb[0].mxu0
    %5764 = vdwg.mxu0
    %5765 = vmatprep.subr.bf16.mxu0 %v3599
    %5766 = vmatpush1.bf16.msra.mxu0 %v3598
    %5767 = vmatprep.subr.bf16.mxu0 %v3615
    %5768 = vmatpush1.bf16.msra.mxu0 %v3614
    %5769 = vmatprep.subr.bf16.mxu0 %v3631
    %5770 = vmatpush1.bf16.msra.mxu0 %v3630
    %5771 = vmatprep.subr.bf16.mxu0 %v3647
    %5772 = vmatpush1.bf16.msra.mxu0 %v3646
    %5773 = vmatprep.subr.bf16.mxu0 %v3663
    %5774 = vmatpush1.bf16.msra.mxu0 %v3662
    %5775 = vmatprep.subr.bf16.mxu0 %v3679
    %5776 = vmatpush1.bf16.msra.mxu0 %v3678
    %5777 = vmatprep.subr.bf16.mxu0 %v3695
    %5778 = vmatpush1.bf16.msra.mxu0 %v3694
    %5779 = vmatprep.subr.bf16.mxu0 %v3711
    %5780 = vmatpush1.bf16.msra.mxu0 %v3710
    %5781 = vmatprep.subr.bf16.mxu0 %v3727
    %5782 = vmatpush1.bf16.msra.mxu0 %v3726
    %5783 = vmatprep.subr.bf16.mxu0 %v3743
    %5784 = vmatpush1.bf16.msra.mxu0 %v3742
    %5785 = vmatprep.subr.bf16.mxu0 %v3759
    %5786 = vmatpush1.bf16.msra.mxu0 %v3758
    %5787 = vmatprep.subr.bf16.mxu0 %v3775
    %5788 = vmatpush1.bf16.msra.mxu0 %v3774
    %5789 = vmatprep.subr.bf16.mxu0 %v3791
    %5790 = vmatpush1.bf16.msra.mxu0 %v3790
    %5791 = vmatprep.subr.bf16.mxu0 %v3807
    %5792 = vmatpush1.bf16.msra.mxu0 %v3806
    %5793 = vmatprep.subr.bf16.mxu0 %v3823
    %5794 = vmatpush1.bf16.msra.mxu0 %v3822
    %5795 = vmatprep.subr.bf16.mxu0 %v3839
    %5796 = vmatpush1.bf16.msra.mxu0 %v3838
    %5797 = vmatprep.mubr.bf16.mxu0 %v970
    %5798 = vmatmul.mubr.bf16.gmra.mrb[0].mxu0 %v969
    %v5799 = vpop.f32.mrb[0].mxu0
    %v5800 = vadd.f32 %v5759, %v5799
    %v5801 = vpop.f32.mrb[0].mxu0
    %v5802 = vadd.f32 %v5761, %v5801
    %v5803 = vpop.f32.mrb[0].mxu0
    %v5804 = vpop.f32.mrb[0].mxu0
    %5805 = vdwg.mxu0
    %5806 = vmatprep.subr.bf16.mxu0 %v3855
    %5807 = vmatpush1.bf16.msra.mxu0 %v3854
    %5808 = vmatprep.subr.bf16.mxu0 %v3871
    %5809 = vmatpush1.bf16.msra.mxu0 %v3870
    %5810 = vmatprep.subr.bf16.mxu0 %v3887
    %5811 = vmatpush1.bf16.msra.mxu0 %v3886
    %5812 = vmatprep.subr.bf16.mxu0 %v3903
    %5813 = vmatpush1.bf16.msra.mxu0 %v3902
    %5814 = vmatprep.subr.bf16.mxu0 %v3919
    %5815 = vmatpush1.bf16.msra.mxu0 %v3918
    %5816 = vmatprep.subr.bf16.mxu0 %v3935
    %5817 = vmatpush1.bf16.msra.mxu0 %v3934
    %5818 = vmatprep.subr.bf16.mxu0 %v3951
    %5819 = vmatpush1.bf16.msra.mxu0 %v3950
    %5820 = vmatprep.subr.bf16.mxu0 %v3967
    %5821 = vmatpush1.bf16.msra.mxu0 %v3966
    %5822 = vmatprep.subr.bf16.mxu0 %v3983
    %5823 = vmatpush1.bf16.msra.mxu0 %v3982
    %5824 = vmatprep.subr.bf16.mxu0 %v3999
    %5825 = vmatpush1.bf16.msra.mxu0 %v3998
    %5826 = vmatprep.subr.bf16.mxu0 %v4015
    %5827 = vmatpush1.bf16.msra.mxu0 %v4014
    %5828 = vmatprep.subr.bf16.mxu0 %v4031
    %5829 = vmatpush1.bf16.msra.mxu0 %v4030
    %5830 = vmatprep.subr.bf16.mxu0 %v4047
    %5831 = vmatpush1.bf16.msra.mxu0 %v4046
    %5832 = vmatprep.subr.bf16.mxu0 %v4063
    %5833 = vmatpush1.bf16.msra.mxu0 %v4062
    %5834 = vmatprep.subr.bf16.mxu0 %v4079
    %5835 = vmatpush1.bf16.msra.mxu0 %v4078
    %5836 = vmatprep.subr.bf16.mxu0 %v4095
    %5837 = vmatpush1.bf16.msra.mxu0 %v4094
    %5838 = vmatprep.mubr.bf16.mxu0 %v972
    %5839 = vmatmul.mubr.bf16.gmra.mrb[0].mxu0 %v971
    %v5840 = vpop.f32.mrb[0].mxu0
    %v5841 = vadd.f32 %v5800, %v5840
    %v5842 = vpop.f32.mrb[0].mxu0
    %v5843 = vadd.f32 %v5802, %v5842
    %v5844 = vpop.f32.mrb[0].mxu0
    %v5845 = vpop.f32.mrb[0].mxu0
    %5846 = vdwg.mxu0
    %5847 = vmatprep.subr.bf16.mxu0 %v4111
    %5848 = vmatpush1.bf16.msra.mxu0 %v4110
    %5849 = vmatprep.subr.bf16.mxu0 0
    %5850 = vmatpush1.bf16.msra.mxu0 0
    %5851 = vmatprep.subr.bf16.mxu0 0
    %5852 = vmatpush1.bf16.msra.mxu0 0
    %5853 = vmatprep.subr.bf16.mxu0 0
    %5854 = vmatpush1.bf16.msra.mxu0 0
    %5855 = vmatprep.subr.bf16.mxu0 0
    %5856 = vmatpush1.bf16.msra.mxu0 0
    %5857 = vmatprep.subr.bf16.mxu0 0
    %5858 = vmatpush1.bf16.msra.mxu0 0
    %5859 = vmatprep.subr.bf16.mxu0 0
    %5860 = vmatpush1.bf16.msra.mxu0 0
    %5861 = vmatprep.subr.bf16.mxu0 0
    %5862 = vmatpush1.bf16.msra.mxu0 0
    %5863 = vmatprep.subr.bf16.mxu0 0
    %5864 = vmatpush1.bf16.msra.mxu0 0
    %5865 = vmatprep.subr.bf16.mxu0 0
    %5866 = vmatpush1.bf16.msra.mxu0 0
    %5867 = vmatprep.subr.bf16.mxu0 0
    %5868 = vmatpush1.bf16.msra.mxu0 0
    %5869 = vmatprep.subr.bf16.mxu0 0
    %5870 = vmatpush1.bf16.msra.mxu0 0
    %5871 = vmatprep.subr.bf16.mxu0 0
    %5872 = vmatpush1.bf16.msra.mxu0 0
    %5873 = vmatprep.subr.bf16.mxu0 0
    %5874 = vmatpush1.bf16.msra.mxu0 0
    %5875 = vmatprep.subr.bf16.mxu0 0
    %5876 = vmatpush1.bf16.msra.mxu0 0
    %5877 = vmatprep.subr.bf16.mxu0 0
    %5878 = vmatpush1.bf16.msra.mxu0 0
    %5879 = vmatprep.mubr.bf16.mxu0 0
    %5880 = vmatmul.mubr.bf16.gmra.mrb[0].mxu0 %v4902
    %v5881 = vpop.f32.mrb[0].mxu0
    %v5882 = vadd.f32 %v5841, %v5881
    %v5883 = vpop.f32.mrb[0].mxu0
    %v5884 = vadd.f32 %v5843, %v5883
    %v5885 = vpop.f32.mrb[0].mxu0
    %v5886 = vpop.f32.mrb[0].mxu0
    %5887 = vdwg.mxu0
    %5888 = vmatprep.subr.bf16.mxu0 %v3345
    %5889 = vmatpush1.bf16.msra.mxu0 %v3344
    %5890 = vmatprep.subr.bf16.mxu0 %v3361
    %5891 = vmatpush1.bf16.msra.mxu0 %v3360
    %5892 = vmatprep.subr.bf16.mxu0 %v3377
    %5893 = vmatpush1.bf16.msra.mxu0 %v3376
    %5894 = vmatprep.subr.bf16.mxu0 %v3393
    %5895 = vmatpush1.bf16.msra.mxu0 %v3392
    %5896 = vmatprep.subr.bf16.mxu0 %v3409
    %5897 = vmatpush1.bf16.msra.mxu0 %v3408
    %5898 = vmatprep.subr.bf16.mxu0 %v3425
    %5899 = vmatpush1.bf16.msra.mxu0 %v3424
    %5900 = vmatprep.subr.bf16.mxu0 %v3441
    %5901 = vmatpush1.bf16.msra.mxu0 %v3440
    %5902 = vmatprep.subr.bf16.mxu0 %v3457
    %5903 = vmatpush1.bf16.msra.mxu0 %v3456
    %5904 = vmatprep.subr.bf16.mxu0 %v3473
    %5905 = vmatpush1.bf16.msra.mxu0 %v3472
    %5906 = vmatprep.subr.bf16.mxu0 %v3489
    %5907 = vmatpush1.bf16.msra.mxu0 %v3488
    %5908 = vmatprep.subr.bf16.mxu0 %v3505
    %5909 = vmatpush1.bf16.msra.mxu0 %v3504
    %5910 = vmatprep.subr.bf16.mxu0 %v3521
    %5911 = vmatpush1.bf16.msra.mxu0 %v3520
    %5912 = vmatprep.subr.bf16.mxu0 %v3537
    %5913 = vmatpush1.bf16.msra.mxu0 %v3536
    %5914 = vmatprep.subr.bf16.mxu0 %v3553
    %5915 = vmatpush1.bf16.msra.mxu0 %v3552
    %5916 = vmatprep.subr.bf16.mxu0 %v3569
    %5917 = vmatpush1.bf16.msra.mxu0 %v3568
    %5918 = vmatprep.subr.bf16.mxu0 %v3585
    %5919 = vmatpush1.bf16.msra.mxu0 %v3584
    %5920 = vmatprep.mubr.bf16.mxu0 %v968
    %5921 = vmatmul.mubr.bf16.gmra.mrb[0].mxu0 %v967
    %v5922 = vpop.f32.mrb[0].mxu0
    %v5923 = vadd.f32 %v927, %v5922
    %v5924 = vpop.f32.mrb[0].mxu0
    %v5925 = vadd.f32 %v931, %v5924
    %v5926 = vpop.f32.mrb[0].mxu0
    %v5927 = vpop.f32.mrb[0].mxu0
    %5928 = vdwg.mxu0
    %5929 = vmatprep.subr.bf16.mxu0 %v3601
    %5930 = vmatpush1.bf16.msra.mxu0 %v3600
    %5931 = vmatprep.subr.bf16.mxu0 %v3617
    %5932 = vmatpush1.bf16.msra.mxu0 %v3616
    %5933 = vmatprep.subr.bf16.mxu0 %v3633
    %5934 = vmatpush1.bf16.msra.mxu0 %v3632
    %5935 = vmatprep.subr.bf16.mxu0 %v3649
    %5936 = vmatpush1.bf16.msra.mxu0 %v3648
    %5937 = vmatprep.subr.bf16.mxu0 %v3665
    %5938 = vmatpush1.bf16.msra.mxu0 %v3664
    %5939 = vmatprep.subr.bf16.mxu0 %v3681
    %5940 = vmatpush1.bf16.msra.mxu0 %v3680
    %5941 = vmatprep.subr.bf16.mxu0 %v3697
    %5942 = vmatpush1.bf16.msra.mxu0 %v3696
    %5943 = vmatprep.subr.bf16.mxu0 %v3713
    %5944 = vmatpush1.bf16.msra.mxu0 %v3712
    %5945 = vmatprep.subr.bf16.mxu0 %v3729
    %5946 = vmatpush1.bf16.msra.mxu0 %v3728
    %5947 = vmatprep.subr.bf16.mxu0 %v3745
    %5948 = vmatpush1.bf16.msra.mxu0 %v3744
    %5949 = vmatprep.subr.bf16.mxu0 %v3761
    %5950 = vmatpush1.bf16.msra.mxu0 %v3760
    %5951 = vmatprep.subr.bf16.mxu0 %v3777
    %5952 = vmatpush1.bf16.msra.mxu0 %v3776
    %5953 = vmatprep.subr.bf16.mxu0 %v3793
    %5954 = vmatpush1.bf16.msra.mxu0 %v3792
    %5955 = vmatprep.subr.bf16.mxu0 %v3809
    %5956 = vmatpush1.bf16.msra.mxu0 %v3808
    %5957 = vmatprep.subr.bf16.mxu0 %v3825
    %5958 = vmatpush1.bf16.msra.mxu0 %v3824
    %5959 = vmatprep.subr.bf16.mxu0 %v3841
    %5960 = vmatpush1.bf16.msra.mxu0 %v3840
    %5961 = vmatprep.mubr.bf16.mxu0 %v970
    %5962 = vmatmul.mubr.bf16.gmra.mrb[0].mxu0 %v969
    %v5963 = vpop.f32.mrb[0].mxu0
    %v5964 = vadd.f32 %v5923, %v5963
    %v5965 = vpop.f32.mrb[0].mxu0
    %v5966 = vadd.f32 %v5925, %v5965
    %v5967 = vpop.f32.mrb[0].mxu0
    %v5968 = vpop.f32.mrb[0].mxu0
    %5969 = vdwg.mxu0
    %5970 = vmatprep.subr.bf16.mxu0 %v3857
    %5971 = vmatpush1.bf16.msra.mxu0 %v3856
    %5972 = vmatprep.subr.bf16.mxu0 %v3873
    %5973 = vmatpush1.bf16.msra.mxu0 %v3872
    %5974 = vmatprep.subr.bf16.mxu0 %v3889
    %5975 = vmatpush1.bf16.msra.mxu0 %v3888
    %5976 = vmatprep.subr.bf16.mxu0 %v3905
    %5977 = vmatpush1.bf16.msra.mxu0 %v3904
    %5978 = vmatprep.subr.bf16.mxu0 %v3921
    %5979 = vmatpush1.bf16.msra.mxu0 %v3920
    %5980 = vmatprep.subr.bf16.mxu0 %v3937
    %5981 = vmatpush1.bf16.msra.mxu0 %v3936
    %5982 = vmatprep.subr.bf16.mxu0 %v3953
    %5983 = vmatpush1.bf16.msra.mxu0 %v3952
    %5984 = vmatprep.subr.bf16.mxu0 %v3969
    %5985 = vmatpush1.bf16.msra.mxu0 %v3968
    %5986 = vmatprep.subr.bf16.mxu0 %v3985
    %5987 = vmatpush1.bf16.msra.mxu0 %v3984
    %5988 = vmatprep.subr.bf16.mxu0 %v4001
    %5989 = vmatpush1.bf16.msra.mxu0 %v4000
    %5990 = vmatprep.subr.bf16.mxu0 %v4017
    %5991 = vmatpush1.bf16.msra.mxu0 %v4016
    %5992 = vmatprep.subr.bf16.mxu0 %v4033
    %5993 = vmatpush1.bf16.msra.mxu0 %v4032
    %5994 = vmatprep.subr.bf16.mxu0 %v4049
    %5995 = vmatpush1.bf16.msra.mxu0 %v4048
    %5996 = vmatprep.subr.bf16.mxu0 %v4065
    %5997 = vmatpush1.bf16.msra.mxu0 %v4064
    %5998 = vmatprep.subr.bf16.mxu0 %v4081
    %5999 = vmatpush1.bf16.msra.mxu0 %v4080
    %6000 = vmatprep.subr.bf16.mxu0 %v4097
    %6001 = vmatpush1.bf16.msra.mxu0 %v4096
    %6002 = vmatprep.mubr.bf16.mxu0 %v972
    %6003 = vmatmul.mubr.bf16.gmra.mrb[0].mxu0 %v971
    %v6004 = vpop.f32.mrb[0].mxu0
    %v6005 = vadd.f32 %v5964, %v6004
    %v6006 = vpop.f32.mrb[0].mxu0
    %v6007 = vadd.f32 %v5966, %v6006
    %v6008 = vpop.f32.mrb[0].mxu0
    %v6009 = vpop.f32.mrb[0].mxu0
    %6010 = vdwg.mxu0
    %6011 = vmatprep.subr.bf16.mxu0 %v4113
    %6012 = vmatpush1.bf16.msra.mxu0 %v4112
    %6013 = vmatprep.subr.bf16.mxu0 0
    %6014 = vmatpush1.bf16.msra.mxu0 0
    %6015 = vmatprep.subr.bf16.mxu0 0
    %6016 = vmatpush1.bf16.msra.mxu0 0
    %6017 = vmatprep.subr.bf16.mxu0 0
    %6018 = vmatpush1.bf16.msra.mxu0 0
    %6019 = vmatprep.subr.bf16.mxu0 0
    %6020 = vmatpush1.bf16.msra.mxu0 0
    %6021 = vmatprep.subr.bf16.mxu0 0
    %6022 = vmatpush1.bf16.msra.mxu0 0
    %6023 = vmatprep.subr.bf16.mxu0 0
    %6024 = vmatpush1.bf16.msra.mxu0 0
    %6025 = vmatprep.subr.bf16.mxu0 0
    %6026 = vmatpush1.bf16.msra.mxu0 0
    %6027 = vmatprep.subr.bf16.mxu0 0
    %6028 = vmatpush1.bf16.msra.mxu0 0
    %6029 = vmatprep.subr.bf16.mxu0 0
    %6030 = vmatpush1.bf16.msra.mxu0 0
    %6031 = vmatprep.subr.bf16.mxu0 0
    %6032 = vmatpush1.bf16.msra.mxu0 0
    %6033 = vmatprep.subr.bf16.mxu0 0
    %6034 = vmatpush1.bf16.msra.mxu0 0
    %6035 = vmatprep.subr.bf16.mxu0 0
    %6036 = vmatpush1.bf16.msra.mxu0 0
    %6037 = vmatprep.subr.bf16.mxu0 0
    %6038 = vmatpush1.bf16.msra.mxu0 0
    %6039 = vmatprep.subr.bf16.mxu0 0
    %6040 = vmatpush1.bf16.msra.mxu0 0
    %6041 = vmatprep.subr.bf16.mxu0 0
    %6042 = vmatpush1.bf16.msra.mxu0 0
    %6043 = vmatprep.mubr.bf16.mxu0 0
    %6044 = vmatmul.mubr.bf16.gmra.mrb[0].mxu0 %v4902
    %v6045 = vpop.f32.mrb[0].mxu0
    %v6046 = vadd.f32 %v6005, %v6045
    %v6047 = vpop.f32.mrb[0].mxu0
    %v6048 = vadd.f32 %v6007, %v6047
    %v6049 = vpop.f32.mrb[0].mxu0
    %v6050 = vpop.f32.mrb[0].mxu0
    %6051 = vdwg.mxu0
    %6052 = vmatprep.subr.bf16.mxu0 %v3347
    %6053 = vmatpush1.bf16.msra.mxu0 %v3346
    %6054 = vmatprep.subr.bf16.mxu0 %v3363
    %6055 = vmatpush1.bf16.msra.mxu0 %v3362
    %6056 = vmatprep.subr.bf16.mxu0 %v3379
    %6057 = vmatpush1.bf16.msra.mxu0 %v3378
    %6058 = vmatprep.subr.bf16.mxu0 %v3395
    %6059 = vmatpush1.bf16.msra.mxu0 %v3394
    %6060 = vmatprep.subr.bf16.mxu0 %v3411
    %6061 = vmatpush1.bf16.msra.mxu0 %v3410
    %6062 = vmatprep.subr.bf16.mxu0 %v3427
    %6063 = vmatpush1.bf16.msra.mxu0 %v3426
    %6064 = vmatprep.subr.bf16.mxu0 %v3443
    %6065 = vmatpush1.bf16.msra.mxu0 %v3442
    %6066 = vmatprep.subr.bf16.mxu0 %v3459
    %6067 = vmatpush1.bf16.msra.mxu0 %v3458
    %6068 = vmatprep.subr.bf16.mxu0 %v3475
    %6069 = vmatpush1.bf16.msra.mxu0 %v3474
    %6070 = vmatprep.subr.bf16.mxu0 %v3491
    %6071 = vmatpush1.bf16.msra.mxu0 %v3490
    %6072 = vmatprep.subr.bf16.mxu0 %v3507
    %6073 = vmatpush1.bf16.msra.mxu0 %v3506
    %6074 = vmatprep.subr.bf16.mxu0 %v3523
    %6075 = vmatpush1.bf16.msra.mxu0 %v3522
    %6076 = vmatprep.subr.bf16.mxu0 %v3539
    %6077 = vmatpush1.bf16.msra.mxu0 %v3538
    %6078 = vmatprep.subr.bf16.mxu0 %v3555
    %6079 = vmatpush1.bf16.msra.mxu0 %v3554
    %6080 = vmatprep.subr.bf16.mxu0 %v3571
    %6081 = vmatpush1.bf16.msra.mxu0 %v3570
    %6082 = vmatprep.subr.bf16.mxu0 %v3587
    %6083 = vmatpush1.bf16.msra.mxu0 %v3586
    %6084 = vmatprep.mubr.bf16.mxu0 %v968
    %6085 = vmatmul.mubr.bf16.gmra.mrb[0].mxu0 %v967
    %v6086 = vpop.f32.mrb[0].mxu0
    %v6087 = vadd.f32 %v935, %v6086
    %v6088 = vpop.f32.mrb[0].mxu0
    %v6089 = vadd.f32 %v939, %v6088
    %v6090 = vpop.f32.mrb[0].mxu0
    %v6091 = vpop.f32.mrb[0].mxu0
    %6092 = vdwg.mxu0
    %6093 = vmatprep.subr.bf16.mxu0 %v3603
    %6094 = vmatpush1.bf16.msra.mxu0 %v3602
    %6095 = vmatprep.subr.bf16.mxu0 %v3619
    %6096 = vmatpush1.bf16.msra.mxu0 %v3618
    %6097 = vmatprep.subr.bf16.mxu0 %v3635
    %6098 = vmatpush1.bf16.msra.mxu0 %v3634
    %6099 = vmatprep.subr.bf16.mxu0 %v3651
    %6100 = vmatpush1.bf16.msra.mxu0 %v3650
    %6101 = vmatprep.subr.bf16.mxu0 %v3667
    %6102 = vmatpush1.bf16.msra.mxu0 %v3666
    %6103 = vmatprep.subr.bf16.mxu0 %v3683
    %6104 = vmatpush1.bf16.msra.mxu0 %v3682
    %6105 = vmatprep.subr.bf16.mxu0 %v3699
    %6106 = vmatpush1.bf16.msra.mxu0 %v3698
    %6107 = vmatprep.subr.bf16.mxu0 %v3715
    %6108 = vmatpush1.bf16.msra.mxu0 %v3714
    %6109 = vmatprep.subr.bf16.mxu0 %v3731
    %6110 = vmatpush1.bf16.msra.mxu0 %v3730
    %6111 = vmatprep.subr.bf16.mxu0 %v3747
    %6112 = vmatpush1.bf16.msra.mxu0 %v3746
    %6113 = vmatprep.subr.bf16.mxu0 %v3763
    %6114 = vmatpush1.bf16.msra.mxu0 %v3762
    %6115 = vmatprep.subr.bf16.mxu0 %v3779
    %6116 = vmatpush1.bf16.msra.mxu0 %v3778
    %6117 = vmatprep.subr.bf16.mxu0 %v3795
    %6118 = vmatpush1.bf16.msra.mxu0 %v3794
    %6119 = vmatprep.subr.bf16.mxu0 %v3811
    %6120 = vmatpush1.bf16.msra.mxu0 %v3810
    %6121 = vmatprep.subr.bf16.mxu0 %v3827
    %6122 = vmatpush1.bf16.msra.mxu0 %v3826
    %6123 = vmatprep.subr.bf16.mxu0 %v3843
    %6124 = vmatpush1.bf16.msra.mxu0 %v3842
    %6125 = vmatprep.mubr.bf16.mxu0 %v970
    %6126 = vmatmul.mubr.bf16.gmra.mrb[0].mxu0 %v969
    %v6127 = vpop.f32.mrb[0].mxu0
    %v6128 = vadd.f32 %v6087, %v6127
    %v6129 = vpop.f32.mrb[0].mxu0
    %v6130 = vadd.f32 %v6089, %v6129
    %v6131 = vpop.f32.mrb[0].mxu0
    %v6132 = vpop.f32.mrb[0].mxu0
    %6133 = vdwg.mxu0
    %6134 = vmatprep.subr.bf16.mxu0 %v3859
    %6135 = vmatpush1.bf16.msra.mxu0 %v3858
    %6136 = vmatprep.subr.bf16.mxu0 %v3875
    %6137 = vmatpush1.bf16.msra.mxu0 %v3874
    %6138 = vmatprep.subr.bf16.mxu0 %v3891
    %6139 = vmatpush1.bf16.msra.mxu0 %v3890
    %6140 = vmatprep.subr.bf16.mxu0 %v3907
    %6141 = vmatpush1.bf16.msra.mxu0 %v3906
    %6142 = vmatprep.subr.bf16.mxu0 %v3923
    %6143 = vmatpush1.bf16.msra.mxu0 %v3922
    %6144 = vmatprep.subr.bf16.mxu0 %v3939
    %6145 = vmatpush1.bf16.msra.mxu0 %v3938
    %6146 = vmatprep.subr.bf16.mxu0 %v3955
    %6147 = vmatpush1.bf16.msra.mxu0 %v3954
    %6148 = vmatprep.subr.bf16.mxu0 %v3971
    %6149 = vmatpush1.bf16.msra.mxu0 %v3970
    %6150 = vmatprep.subr.bf16.mxu0 %v3987
    %6151 = vmatpush1.bf16.msra.mxu0 %v3986
    %6152 = vmatprep.subr.bf16.mxu0 %v4003
    %6153 = vmatpush1.bf16.msra.mxu0 %v4002
    %6154 = vmatprep.subr.bf16.mxu0 %v4019
    %6155 = vmatpush1.bf16.msra.mxu0 %v4018
    %6156 = vmatprep.subr.bf16.mxu0 %v4035
    %6157 = vmatpush1.bf16.msra.mxu0 %v4034
    %6158 = vmatprep.subr.bf16.mxu0 %v4051
    %6159 = vmatpush1.bf16.msra.mxu0 %v4050
    %6160 = vmatprep.subr.bf16.mxu0 %v4067
    %6161 = vmatpush1.bf16.msra.mxu0 %v4066
    %6162 = vmatprep.subr.bf16.mxu0 %v4083
    %6163 = vmatpush1.bf16.msra.mxu0 %v4082
    %6164 = vmatprep.subr.bf16.mxu0 %v4099
    %6165 = vmatpush1.bf16.msra.mxu0 %v4098
    %6166 = vmatprep.mubr.bf16.mxu0 %v972
    %6167 = vmatmul.mubr.bf16.gmra.mrb[0].mxu0 %v971
    %v6168 = vpop.f32.mrb[0].mxu0
    %v6169 = vadd.f32 %v6128, %v6168
    %v6170 = vpop.f32.mrb[0].mxu0
    %v6171 = vadd.f32 %v6130, %v6170
    %v6172 = vpop.f32.mrb[0].mxu0
    %v6173 = vpop.f32.mrb[0].mxu0
    %6174 = vdwg.mxu0
    %6175 = vmatprep.subr.bf16.mxu0 %v4115
    %6176 = vmatpush1.bf16.msra.mxu0 %v4114
    %6177 = vmatprep.subr.bf16.mxu0 0
    %6178 = vmatpush1.bf16.msra.mxu0 0
    %6179 = vmatprep.subr.bf16.mxu0 0
    %6180 = vmatpush1.bf16.msra.mxu0 0
    %6181 = vmatprep.subr.bf16.mxu0 0
    %6182 = vmatpush1.bf16.msra.mxu0 0
    %6183 = vmatprep.subr.bf16.mxu0 0
    %6184 = vmatpush1.bf16.msra.mxu0 0
    %6185 = vmatprep.subr.bf16.mxu0 0
    %6186 = vmatpush1.bf16.msra.mxu0 0
    %6187 = vmatprep.subr.bf16.mxu0 0
    %6188 = vmatpush1.bf16.msra.mxu0 0
    %6189 = vmatprep.subr.bf16.mxu0 0
    %6190 = vmatpush1.bf16.msra.mxu0 0
    %6191 = vmatprep.subr.bf16.mxu0 0
    %6192 = vmatpush1.bf16.msra.mxu0 0
    %6193 = vmatprep.subr.bf16.mxu0 0
    %6194 = vmatpush1.bf16.msra.mxu0 0
    %6195 = vmatprep.subr.bf16.mxu0 0
    %6196 = vmatpush1.bf16.msra.mxu0 0
    %6197 = vmatprep.subr.bf16.mxu0 0
    %6198 = vmatpush1.bf16.msra.mxu0 0
    %6199 = vmatprep.subr.bf16.mxu0 0
    %6200 = vmatpush1.bf16.msra.mxu0 0
    %6201 = vmatprep.subr.bf16.mxu0 0
    %6202 = vmatpush1.bf16.msra.mxu0 0
    %6203 = vmatprep.subr.bf16.mxu0 0
    %6204 = vmatpush1.bf16.msra.mxu0 0
    %6205 = vmatprep.subr.bf16.mxu0 0
    %6206 = vmatpush1.bf16.msra.mxu0 0
    %6207 = vmatprep.mubr.bf16.mxu0 0
    %6208 = vmatmul.mubr.bf16.gmra.mrb[0].mxu0 %v4902
    %v6209 = vpop.f32.mrb[0].mxu0
    %v6210 = vadd.f32 %v6169, %v6209
    %v6211 = vpop.f32.mrb[0].mxu0
    %v6212 = vadd.f32 %v6171, %v6211
    %v6213 = vpop.f32.mrb[0].mxu0
    %v6214 = vpop.f32.mrb[0].mxu0
    %6215 = vdwg.mxu0
    %v6216 = vmax.f32 %v5062, 0.0
    %v6217 = vmax.f32 %v5064, 0.0
    %v6218 = vmax.f32 %v5226, 0.0
    %v6219 = vmax.f32 %v5228, 0.0
    %v6220 = vmax.f32 %v5390, 0.0
    %v6221 = vmax.f32 %v5392, 0.0
    %v6222 = vmax.f32 %v5554, 0.0
    %v6223 = vmax.f32 %v5556, 0.0
    %v6224 = vmax.f32 %v5718, 0.0
    %v6225 = vmax.f32 %v5720, 0.0
    %v6226 = vmax.f32 %v5882, 0.0
    %v6227 = vmax.f32 %v5884, 0.0
    %v6228 = vmax.f32 %v6046, 0.0
    %v6229 = vmax.f32 %v6048, 0.0
    %v6230 = vmax.f32 %v6210, 0.0
    %v6231 = vmax.f32 %v6212, 0.0
    %v6232 = vpack.c.bf16 %v6216, %v6216
    %v6233 = vpack.c.bf16 %v6217, %v6217
    %v6234 = vpack.c.bf16 %v6218, %v6218
    %v6235 = vpack.c.bf16 %v6219, %v6219
    %v6236 = vpack.c.bf16 %v6220, %v6220
    %v6237 = vpack.c.bf16 %v6221, %v6221
    %v6238 = vpack.c.bf16 %v6222, %v6222
    %v6239 = vpack.c.bf16 %v6223, %v6223
    %v6240 = vpack.c.bf16 %v6224, %v6224
    %v6241 = vpack.c.bf16 %v6225, %v6225
    %v6242 = vpack.c.bf16 %v6226, %v6226
    %v6243 = vpack.c.bf16 %v6227, %v6227
    %v6244 = vpack.c.bf16 %v6228, %v6228
    %v6245 = vpack.c.bf16 %v6229, %v6229
    %v6246 = vpack.c.bf16 %v6230, %v6230
    %v6247 = vpack.c.bf16 %v6231, %v6231
    %v6248 = vld [vmem:[#allocation8] sm:$0xf]
    %v6249 = vld [vmem:[#allocation8 + $0x4] sm:$0xf]
    %v6250 = vld [vmem:[#allocation8 + $0x8] sm:$0xf]
    %v6251 = vld [vmem:[#allocation8 + $0xc] sm:$0xf]
    %v6252 = vld [vmem:[#allocation8 + $0x10] sm:$0xf]
    %v6253 = vld [vmem:[#allocation8 + $0x14] sm:$0xf]
    %v6254 = vld [vmem:[#allocation8 + $0x18] sm:$0xf]
    %v6255 = vld [vmem:[#allocation8 + $0x1c] sm:$0xf]
    %v6256 = vld [vmem:[#allocation8 + $0x20] sm:$0xf]
    %v6257 = vld [vmem:[#allocation8 + $0x24] sm:$0xf]
    %v6258 = vld [vmem:[#allocation8 + $0x28] sm:$0xf]
    %v6259 = vld [vmem:[#allocation8 + $0x2c] sm:$0xf]
    %v6260 = vld [vmem:[#allocation8 + $0x30] sm:$0xf]
    %v6261 = vld [vmem:[#allocation8 + $0x34] sm:$0xf]
    %v6262 = vld [vmem:[#allocation8 + $0x38] sm:$0xf]
    %v6263 = vld [vmem:[#allocation8 + $0x3c] sm:$0xf]
    %v6264 = vld [vmem:[#allocation8 + $0x40] sm:$0xf]
    %v6265 = vld [vmem:[#allocation8 + $0x44] sm:$0xf]
    %v6266 = vld [vmem:[#allocation8 + $0x48] sm:$0xf]
    %v6267 = vld [vmem:[#allocation8 + $0x4c] sm:$0xf]
    %v6268 = vld [vmem:[#allocation8 + $0x50] sm:$0xf]
    %v6269 = vld [vmem:[#allocation8 + $0x54] sm:$0xf]
    %v6270 = vld [vmem:[#allocation8 + $0x58] sm:$0xf]
    %v6271 = vld [vmem:[#allocation8 + $0x5c] sm:$0xf]
    %v6272 = vld [vmem:[#allocation8 + $0x60] sm:$0xf]
    %v6273 = vld [vmem:[#allocation8 + $0x64] sm:$0xf]
    %v6274 = vld [vmem:[#allocation8 + $0x68] sm:$0xf]
    %v6275 = vld [vmem:[#allocation8 + $0x6c] sm:$0xf]
    %v6276 = vld [vmem:[#allocation8 + $0x70] sm:$0xf]
    %v6277 = vld [vmem:[#allocation8 + $0x74] sm:$0xf]
    %v6278 = vld [vmem:[#allocation8 + $0x78] sm:$0xf]
    %v6279 = vld [vmem:[#allocation8 + $0x7c] sm:$0xf]
    %v6280 = vld [vmem:[#allocation8 + $0x80] sm:$0xf]
    %v6281 = vld [vmem:[#allocation8 + $0x84] sm:$0xf]
    %v6282 = vld [vmem:[#allocation8 + $0x88] sm:$0xf]
    %v6283 = vld [vmem:[#allocation8 + $0x8c] sm:$0xf]
    %v6284 = vld [vmem:[#allocation8 + $0x90] sm:$0xf]
    %v6285 = vld [vmem:[#allocation8 + $0x94] sm:$0xf]
    %v6286 = vld [vmem:[#allocation8 + $0x98] sm:$0xf]
    %v6287 = vld [vmem:[#allocation8 + $0x9c] sm:$0xf]
    %v6288 = vld [vmem:[#allocation8 + $0xa0] sm:$0xf]
    %v6289 = vld [vmem:[#allocation8 + $0xa4] sm:$0xf]
    %v6290 = vld [vmem:[#allocation8 + $0xa8] sm:$0xf]
    %v6291 = vld [vmem:[#allocation8 + $0xac] sm:$0xf]
    %v6292 = vld [vmem:[#allocation8 + $0xb0] sm:$0xf]
    %v6293 = vld [vmem:[#allocation8 + $0xb4] sm:$0xf]
    %v6294 = vld [vmem:[#allocation8 + $0xb8] sm:$0xf]
    %v6295 = vld [vmem:[#allocation8 + $0xbc] sm:$0xf]
    %v6296 = vld [vmem:[#allocation8 + $0xc0] sm:$0xf]
    %v6297 = vld [vmem:[#allocation8 + $0xc4] sm:$0xf]
    %v6298 = vld [vmem:[#allocation8 + $0xc8] sm:$0xf]
    %v6299 = vld [vmem:[#allocation8 + $0xcc] sm:$0xf]
    %v6300 = vld [vmem:[#allocation8 + $0xd0] sm:$0xf]
    %v6301 = vld [vmem:[#allocation8 + $0xd4] sm:$0xf]
    %v6302 = vld [vmem:[#allocation8 + $0xd8] sm:$0xf]
    %v6303 = vld [vmem:[#allocation8 + $0xdc] sm:$0xf]
    %v6304 = vld [vmem:[#allocation8 + $0xe0] sm:$0xf]
    %v6305 = vld [vmem:[#allocation8 + $0xe4] sm:$0xf]
    %v6306 = vld [vmem:[#allocation8 + $0xe8] sm:$0xf]
    %v6307 = vld [vmem:[#allocation8 + $0xec] sm:$0xf]
    %v6308 = vld [vmem:[#allocation8 + $0xf0] sm:$0xf]
    %v6309 = vld [vmem:[#allocation8 + $0xf4] sm:$0xf]
    %v6310 = vld [vmem:[#allocation8 + $0xf8] sm:$0xf]
    %v6311 = vld [vmem:[#allocation8 + $0xfc] sm:$0xf]
    %v6312 = vld [vmem:[#allocation8 + $0x100] sm:$0xf]
    %v6313 = vld [vmem:[#allocation8 + $0x104] sm:$0xf]
    %v6314 = vld [vmem:[#allocation8 + $0x108] sm:$0xf]
    %v6315 = vld [vmem:[#allocation8 + $0x10c] sm:$0xf]
    %v6316 = vld [vmem:[#allocation8 + $0x110] sm:$0xf]
    %v6317 = vld [vmem:[#allocation8 + $0x114] sm:$0xf]
    %v6318 = vld [vmem:[#allocation8 + $0x118] sm:$0xf]
    %v6319 = vld [vmem:[#allocation8 + $0x11c] sm:$0xf]
    %v6320 = vld [vmem:[#allocation8 + $0x120] sm:$0xf]
    %v6321 = vld [vmem:[#allocation8 + $0x124] sm:$0xf]
    %v6322 = vld [vmem:[#allocation8 + $0x128] sm:$0xf]
    %v6323 = vld [vmem:[#allocation8 + $0x12c] sm:$0xf]
    %v6324 = vld [vmem:[#allocation8 + $0x130] sm:$0xf]
    %v6325 = vld [vmem:[#allocation8 + $0x134] sm:$0xf]
    %v6326 = vld [vmem:[#allocation8 + $0x138] sm:$0xf]
    %v6327 = vld [vmem:[#allocation8 + $0x13c] sm:$0xf]
    %v6328 = vld [vmem:[#allocation8 + $0x140] sm:$0xf]
    %v6329 = vld [vmem:[#allocation8 + $0x144] sm:$0xf]
    %v6330 = vld [vmem:[#allocation8 + $0x148] sm:$0xf]
    %v6331 = vld [vmem:[#allocation8 + $0x14c] sm:$0xf]
    %v6332 = vld [vmem:[#allocation8 + $0x150] sm:$0xf]
    %v6333 = vld [vmem:[#allocation8 + $0x154] sm:$0xf]
    %v6334 = vld [vmem:[#allocation8 + $0x158] sm:$0xf]
    %v6335 = vld [vmem:[#allocation8 + $0x15c] sm:$0xf]
    %v6336 = vld [vmem:[#allocation8 + $0x160] sm:$0xf]
    %v6337 = vld [vmem:[#allocation8 + $0x164] sm:$0xf]
    %v6338 = vld [vmem:[#allocation8 + $0x168] sm:$0xf]
    %v6339 = vld [vmem:[#allocation8 + $0x16c] sm:$0xf]
    %v6340 = vld [vmem:[#allocation8 + $0x170] sm:$0xf]
    %v6341 = vld [vmem:[#allocation8 + $0x174] sm:$0xf]
    %v6342 = vld [vmem:[#allocation8 + $0x178] sm:$0xf]
    %v6343 = vld [vmem:[#allocation8 + $0x17c] sm:$0xf]
    %v6344 = vld [vmem:[#allocation8 + $0x180] sm:$0xf]
    %v6345 = vld [vmem:[#allocation8 + $0x184] sm:$0xf]
    %v6346 = vld [vmem:[#allocation8 + $0x188] sm:$0xf]
    %v6347 = vld [vmem:[#allocation8 + $0x18c] sm:$0xf]
    %v6348 = vld [vmem:[#allocation8 + $0x190] sm:$0xf]
    %v6349 = vld [vmem:[#allocation8 + $0x194] sm:$0xf]
    %v6350 = vld [vmem:[#allocation8 + $0x198] sm:$0xf]
    %v6351 = vld [vmem:[#allocation8 + $0x19c] sm:$0xf]
    %v6352 = vld [vmem:[#allocation8 + $0x1a0] sm:$0xf]
    %v6353 = vld [vmem:[#allocation8 + $0x1a4] sm:$0xf]
    %v6354 = vld [vmem:[#allocation8 + $0x1a8] sm:$0xf]
    %v6355 = vld [vmem:[#allocation8 + $0x1ac] sm:$0xf]
    %v6356 = vld [vmem:[#allocation8 + $0x1b0] sm:$0xf]
    %v6357 = vld [vmem:[#allocation8 + $0x1b4] sm:$0xf]
    %v6358 = vld [vmem:[#allocation8 + $0x1b8] sm:$0xf]
    %v6359 = vld [vmem:[#allocation8 + $0x1bc] sm:$0xf]
    %v6360 = vld [vmem:[#allocation8 + $0x1c0] sm:$0xf]
    %v6361 = vld [vmem:[#allocation8 + $0x1c4] sm:$0xf]
    %v6362 = vld [vmem:[#allocation8 + $0x1c8] sm:$0xf]
    %v6363 = vld [vmem:[#allocation8 + $0x1cc] sm:$0xf]
    %v6364 = vld [vmem:[#allocation8 + $0x1d0] sm:$0xf]
    %v6365 = vld [vmem:[#allocation8 + $0x1d4] sm:$0xf]
    %v6366 = vld [vmem:[#allocation8 + $0x1d8] sm:$0xf]
    %v6367 = vld [vmem:[#allocation8 + $0x1dc] sm:$0xf]
    %v6368 = vld [vmem:[#allocation8 + $0x1e0] sm:$0xf]
    %v6369 = vld [vmem:[#allocation8 + $0x1e4] sm:$0xf]
    %v6370 = vld [vmem:[#allocation8 + $0x1e8] sm:$0xf]
    %v6371 = vld [vmem:[#allocation8 + $0x1ec] sm:$0xf]
    %v6372 = vld [vmem:[#allocation8 + $0x1f0] sm:$0xf]
    %v6373 = vld [vmem:[#allocation8 + $0x1f4] sm:$0xf]
    %v6374 = vld [vmem:[#allocation8 + $0x1f8] sm:$0xf]
    %v6375 = vld [vmem:[#allocation8 + $0x1fc] sm:$0xf]
    %v6376 = vld [vmem:[#allocation8 + $0x200] sm:$0xf]
    %v6377 = vld [vmem:[#allocation8 + $0x204] sm:$0xf]
    %v6378 = vld [vmem:[#allocation8 + $0x208] sm:$0xf]
    %v6379 = vld [vmem:[#allocation8 + $0x20c] sm:$0xf]
    %v6380 = vld [vmem:[#allocation8 + $0x210] sm:$0xf]
    %v6381 = vld [vmem:[#allocation8 + $0x214] sm:$0xf]
    %v6382 = vld [vmem:[#allocation8 + $0x218] sm:$0xf]
    %v6383 = vld [vmem:[#allocation8 + $0x21c] sm:$0xf]
    %v6384 = vld [vmem:[#allocation8 + $0x220] sm:$0xf]
    %v6385 = vld [vmem:[#allocation8 + $0x224] sm:$0xf]
    %v6386 = vld [vmem:[#allocation8 + $0x228] sm:$0xf]
    %v6387 = vld [vmem:[#allocation8 + $0x22c] sm:$0xf]
    %v6388 = vld [vmem:[#allocation8 + $0x230] sm:$0xf]
    %v6389 = vld [vmem:[#allocation8 + $0x234] sm:$0xf]
    %v6390 = vld [vmem:[#allocation8 + $0x238] sm:$0xf]
    %v6391 = vld [vmem:[#allocation8 + $0x23c] sm:$0xf]
    %v6392 = vld [vmem:[#allocation8 + $0x240] sm:$0xf]
    %v6393 = vld [vmem:[#allocation8 + $0x244] sm:$0xf]
    %v6394 = vld [vmem:[#allocation8 + $0x248] sm:$0xf]
    %v6395 = vld [vmem:[#allocation8 + $0x24c] sm:$0xf]
    %v6396 = vld [vmem:[#allocation8 + $0x250] sm:$0xf]
    %v6397 = vld [vmem:[#allocation8 + $0x254] sm:$0xf]
    %v6398 = vld [vmem:[#allocation8 + $0x258] sm:$0xf]
    %v6399 = vld [vmem:[#allocation8 + $0x25c] sm:$0xf]
    %v6400 = vld [vmem:[#allocation8 + $0x260] sm:$0xf]
    %v6401 = vld [vmem:[#allocation8 + $0x264] sm:$0xf]
    %v6402 = vld [vmem:[#allocation8 + $0x268] sm:$0xf]
    %v6403 = vld [vmem:[#allocation8 + $0x26c] sm:$0xf]
    %v6404 = vld [vmem:[#allocation8 + $0x270] sm:$0xf]
    %v6405 = vld [vmem:[#allocation8 + $0x274] sm:$0xf]
    %v6406 = vld [vmem:[#allocation8 + $0x278] sm:$0xf]
    %v6407 = vld [vmem:[#allocation8 + $0x27c] sm:$0xf]
    %v6408 = vld [vmem:[#allocation8 + $0x280] sm:$0xf]
    %v6409 = vld [vmem:[#allocation8 + $0x284] sm:$0xf]
    %v6410 = vld [vmem:[#allocation8 + $0x288] sm:$0xf]
    %v6411 = vld [vmem:[#allocation8 + $0x28c] sm:$0xf]
    %v6412 = vld [vmem:[#allocation8 + $0x290] sm:$0xf]
    %v6413 = vld [vmem:[#allocation8 + $0x294] sm:$0xf]
    %v6414 = vld [vmem:[#allocation8 + $0x298] sm:$0xf]
    %v6415 = vld [vmem:[#allocation8 + $0x29c] sm:$0xf]
    %v6416 = vld [vmem:[#allocation8 + $0x2a0] sm:$0xf]
    %v6417 = vld [vmem:[#allocation8 + $0x2a4] sm:$0xf]
    %v6418 = vld [vmem:[#allocation8 + $0x2a8] sm:$0xf]
    %v6419 = vld [vmem:[#allocation8 + $0x2ac] sm:$0xf]
    %v6420 = vld [vmem:[#allocation8 + $0x2b0] sm:$0xf]
    %v6421 = vld [vmem:[#allocation8 + $0x2b4] sm:$0xf]
    %v6422 = vld [vmem:[#allocation8 + $0x2b8] sm:$0xf]
    %v6423 = vld [vmem:[#allocation8 + $0x2bc] sm:$0xf]
    %v6424 = vld [vmem:[#allocation8 + $0x2c0] sm:$0xf]
    %v6425 = vld [vmem:[#allocation8 + $0x2c4] sm:$0xf]
    %v6426 = vld [vmem:[#allocation8 + $0x2c8] sm:$0xf]
    %v6427 = vld [vmem:[#allocation8 + $0x2cc] sm:$0xf]
    %v6428 = vld [vmem:[#allocation8 + $0x2d0] sm:$0xf]
    %v6429 = vld [vmem:[#allocation8 + $0x2d4] sm:$0xf]
    %v6430 = vld [vmem:[#allocation8 + $0x2d8] sm:$0xf]
    %v6431 = vld [vmem:[#allocation8 + $0x2dc] sm:$0xf]
    %v6432 = vld [vmem:[#allocation8 + $0x2e0] sm:$0xf]
    %v6433 = vld [vmem:[#allocation8 + $0x2e4] sm:$0xf]
    %v6434 = vld [vmem:[#allocation8 + $0x2e8] sm:$0xf]
    %v6435 = vld [vmem:[#allocation8 + $0x2ec] sm:$0xf]
    %v6436 = vld [vmem:[#allocation8 + $0x2f0] sm:$0xf]
    %v6437 = vld [vmem:[#allocation8 + $0x2f4] sm:$0xf]
    %v6438 = vld [vmem:[#allocation8 + $0x2f8] sm:$0xf]
    %v6439 = vld [vmem:[#allocation8 + $0x2fc] sm:$0xf]
    %v6440 = vld [vmem:[#allocation8 + $0x300] sm:$0xf]
    %v6441 = vld [vmem:[#allocation8 + $0x304] sm:$0xf]
    %v6442 = vld [vmem:[#allocation8 + $0x308] sm:$0xf]
    %v6443 = vld [vmem:[#allocation8 + $0x30c] sm:$0xf]
    %v6444 = vld [vmem:[#allocation8 + $0x310] sm:$0xf]
    %v6445 = vld [vmem:[#allocation8 + $0x314] sm:$0xf]
    %v6446 = vld [vmem:[#allocation8 + $0x318] sm:$0xf]
    %v6447 = vld [vmem:[#allocation8 + $0x31c] sm:$0xf]
    %v6448 = vld [vmem:[#allocation8 + $0x320] sm:$0xf]
    %v6449 = vld [vmem:[#allocation8 + $0x324] sm:$0xf]
    %v6450 = vld [vmem:[#allocation8 + $0x328] sm:$0xf]
    %v6451 = vld [vmem:[#allocation8 + $0x32c] sm:$0xf]
    %v6452 = vld [vmem:[#allocation8 + $0x330] sm:$0xf]
    %v6453 = vld [vmem:[#allocation8 + $0x334] sm:$0xf]
    %v6454 = vld [vmem:[#allocation8 + $0x338] sm:$0xf]
    %v6455 = vld [vmem:[#allocation8 + $0x33c] sm:$0xf]
    %v6456 = vld [vmem:[#allocation8 + $0x340] sm:$0xf]
    %v6457 = vld [vmem:[#allocation8 + $0x344] sm:$0xf]
    %v6458 = vld [vmem:[#allocation8 + $0x348] sm:$0xf]
    %v6459 = vld [vmem:[#allocation8 + $0x34c] sm:$0xf]
    %v6460 = vld [vmem:[#allocation8 + $0x350] sm:$0xf]
    %v6461 = vld [vmem:[#allocation8 + $0x354] sm:$0xf]
    %v6462 = vld [vmem:[#allocation8 + $0x358] sm:$0xf]
    %v6463 = vld [vmem:[#allocation8 + $0x35c] sm:$0xf]
    %v6464 = vld [vmem:[#allocation8 + $0x360] sm:$0xf]
    %v6465 = vld [vmem:[#allocation8 + $0x364] sm:$0xf]
    %v6466 = vld [vmem:[#allocation8 + $0x368] sm:$0xf]
    %v6467 = vld [vmem:[#allocation8 + $0x36c] sm:$0xf]
    %v6468 = vld [vmem:[#allocation8 + $0x370] sm:$0xf]
    %v6469 = vld [vmem:[#allocation8 + $0x374] sm:$0xf]
    %v6470 = vld [vmem:[#allocation8 + $0x378] sm:$0xf]
    %v6471 = vld [vmem:[#allocation8 + $0x37c] sm:$0xf]
    %v6472 = vld [vmem:[#allocation8 + $0x380] sm:$0xf]
    %v6473 = vld [vmem:[#allocation8 + $0x384] sm:$0xf]
    %v6474 = vld [vmem:[#allocation8 + $0x388] sm:$0xf]
    %v6475 = vld [vmem:[#allocation8 + $0x38c] sm:$0xf]
    %v6476 = vld [vmem:[#allocation8 + $0x390] sm:$0xf]
    %v6477 = vld [vmem:[#allocation8 + $0x394] sm:$0xf]
    %v6478 = vld [vmem:[#allocation8 + $0x398] sm:$0xf]
    %v6479 = vld [vmem:[#allocation8 + $0x39c] sm:$0xf]
    %v6480 = vld [vmem:[#allocation8 + $0x3a0] sm:$0xf]
    %v6481 = vld [vmem:[#allocation8 + $0x3a4] sm:$0xf]
    %v6482 = vld [vmem:[#allocation8 + $0x3a8] sm:$0xf]
    %v6483 = vld [vmem:[#allocation8 + $0x3ac] sm:$0xf]
    %v6484 = vld [vmem:[#allocation8 + $0x3b0] sm:$0xf]
    %v6485 = vld [vmem:[#allocation8 + $0x3b4] sm:$0xf]
    %v6486 = vld [vmem:[#allocation8 + $0x3b8] sm:$0xf]
    %v6487 = vld [vmem:[#allocation8 + $0x3bc] sm:$0xf]
    %v6488 = vld [vmem:[#allocation8 + $0x3c0] sm:$0xf]
    %v6489 = vld [vmem:[#allocation8 + $0x3c4] sm:$0xf]
    %v6490 = vld [vmem:[#allocation8 + $0x3c8] sm:$0xf]
    %v6491 = vld [vmem:[#allocation8 + $0x3cc] sm:$0xf]
    %v6492 = vld [vmem:[#allocation8 + $0x3d0] sm:$0xf]
    %v6493 = vld [vmem:[#allocation8 + $0x3d4] sm:$0xf]
    %v6494 = vld [vmem:[#allocation8 + $0x3d8] sm:$0xf]
    %v6495 = vld [vmem:[#allocation8 + $0x3dc] sm:$0xf]
    %v6496 = vld [vmem:[#allocation8 + $0x3e0] sm:$0xf]
    %v6497 = vld [vmem:[#allocation8 + $0x3e4] sm:$0xf]
    %v6498 = vld [vmem:[#allocation8 + $0x3e8] sm:$0xf]
    %v6499 = vld [vmem:[#allocation8 + $0x3ec] sm:$0xf]
    %v6500 = vld [vmem:[#allocation8 + $0x3f0] sm:$0xf]
    %v6501 = vld [vmem:[#allocation8 + $0x3f4] sm:$0xf]
    %v6502 = vld [vmem:[#allocation8 + $0x3f8] sm:$0xf]
    %v6503 = vld [vmem:[#allocation8 + $0x3fc] sm:$0xf]
    %v6504 = vld [vmem:[#allocation10] sm:$0x1]
    %v6506 = vlaneseq
    %v6507 = vshrl.u32 %v6506, 7
    %v6508 = vsub.s32 0, %v6507
    %v6509 = vrot.slane %v6504, %v6508
    %v6767 = vunpack.c.l.b16 %v6248
    %v6768 = vunpack.c.l.b16 %v6249
    %v6769 = vunpack.c.l.b16 %v6250
    %v6770 = vunpack.c.l.b16 %v6251
    %v6771 = vunpack.c.l.b16 %v6252
    %v6772 = vunpack.c.l.b16 %v6253
    %v6773 = vunpack.c.l.b16 %v6254
    %v6774 = vunpack.c.l.b16 %v6255
    %v6775 = vunpack.c.l.b16 %v6256
    %v6776 = vunpack.c.l.b16 %v6257
    %v6777 = vunpack.c.l.b16 %v6258
    %v6778 = vunpack.c.l.b16 %v6259
    %v6779 = vunpack.c.l.b16 %v6260
    %v6780 = vunpack.c.l.b16 %v6261
    %v6781 = vunpack.c.l.b16 %v6262
    %v6782 = vunpack.c.l.b16 %v6263
    %v6783 = vunpack.c.l.b16 %v6264
    %v6784 = vunpack.c.l.b16 %v6265
    %v6785 = vunpack.c.l.b16 %v6266
    %v6786 = vunpack.c.l.b16 %v6267
    %v6787 = vunpack.c.l.b16 %v6268
    %v6788 = vunpack.c.l.b16 %v6269
    %v6789 = vunpack.c.l.b16 %v6270
    %v6790 = vunpack.c.l.b16 %v6271
    %v6791 = vunpack.c.l.b16 %v6272
    %v6792 = vunpack.c.l.b16 %v6273
    %v6793 = vunpack.c.l.b16 %v6274
    %v6794 = vunpack.c.l.b16 %v6275
    %v6795 = vunpack.c.l.b16 %v6276
    %v6796 = vunpack.c.l.b16 %v6277
    %v6797 = vunpack.c.l.b16 %v6278
    %v6798 = vunpack.c.l.b16 %v6279
    %v6799 = vunpack.c.l.b16 %v6280
    %v6800 = vunpack.c.l.b16 %v6281
    %v6801 = vunpack.c.l.b16 %v6282
    %v6802 = vunpack.c.l.b16 %v6283
    %v6803 = vunpack.c.l.b16 %v6284
    %v6804 = vunpack.c.l.b16 %v6285
    %v6805 = vunpack.c.l.b16 %v6286
    %v6806 = vunpack.c.l.b16 %v6287
    %v6807 = vunpack.c.l.b16 %v6288
    %v6808 = vunpack.c.l.b16 %v6289
    %v6809 = vunpack.c.l.b16 %v6290
    %v6810 = vunpack.c.l.b16 %v6291
    %v6811 = vunpack.c.l.b16 %v6292
    %v6812 = vunpack.c.l.b16 %v6293
    %v6813 = vunpack.c.l.b16 %v6294
    %v6814 = vunpack.c.l.b16 %v6295
    %v6815 = vunpack.c.l.b16 %v6296
    %v6816 = vunpack.c.l.b16 %v6297
    %v6817 = vunpack.c.l.b16 %v6298
    %v6818 = vunpack.c.l.b16 %v6299
    %v6819 = vunpack.c.l.b16 %v6300
    %v6820 = vunpack.c.l.b16 %v6301
    %v6821 = vunpack.c.l.b16 %v6302
    %v6822 = vunpack.c.l.b16 %v6303
    %v6823 = vunpack.c.l.b16 %v6304
    %v6824 = vunpack.c.l.b16 %v6305
    %v6825 = vunpack.c.l.b16 %v6306
    %v6826 = vunpack.c.l.b16 %v6307
    %v6827 = vunpack.c.l.b16 %v6308
    %v6828 = vunpack.c.l.b16 %v6309
    %v6829 = vunpack.c.l.b16 %v6310
    %v6830 = vunpack.c.l.b16 %v6311
    %v6831 = vunpack.c.l.b16 %v6312
    %v6832 = vunpack.c.l.b16 %v6313
    %v6833 = vunpack.c.l.b16 %v6314
    %v6834 = vunpack.c.l.b16 %v6315
    %v6835 = vunpack.c.l.b16 %v6316
    %v6836 = vunpack.c.l.b16 %v6317
    %v6837 = vunpack.c.l.b16 %v6318
    %v6838 = vunpack.c.l.b16 %v6319
    %v6839 = vunpack.c.l.b16 %v6320
    %v6840 = vunpack.c.l.b16 %v6321
    %v6841 = vunpack.c.l.b16 %v6322
    %v6842 = vunpack.c.l.b16 %v6323
    %v6843 = vunpack.c.l.b16 %v6324
    %v6844 = vunpack.c.l.b16 %v6325
    %v6845 = vunpack.c.l.b16 %v6326
    %v6846 = vunpack.c.l.b16 %v6327
    %v6847 = vunpack.c.l.b16 %v6328
    %v6848 = vunpack.c.l.b16 %v6329
    %v6849 = vunpack.c.l.b16 %v6330
    %v6850 = vunpack.c.l.b16 %v6331
    %v6851 = vunpack.c.l.b16 %v6332
    %v6852 = vunpack.c.l.b16 %v6333
    %v6853 = vunpack.c.l.b16 %v6334
    %v6854 = vunpack.c.l.b16 %v6335
    %v6855 = vunpack.c.l.b16 %v6336
    %v6856 = vunpack.c.l.b16 %v6337
    %v6857 = vunpack.c.l.b16 %v6338
    %v6858 = vunpack.c.l.b16 %v6339
    %v6859 = vunpack.c.l.b16 %v6340
    %v6860 = vunpack.c.l.b16 %v6341
    %v6861 = vunpack.c.l.b16 %v6342
    %v6862 = vunpack.c.l.b16 %v6343
    %v6863 = vunpack.c.l.b16 %v6344
    %v6864 = vunpack.c.l.b16 %v6345
    %v6865 = vunpack.c.l.b16 %v6346
    %v6866 = vunpack.c.l.b16 %v6347
    %v6867 = vunpack.c.l.b16 %v6348
    %v6868 = vunpack.c.l.b16 %v6349
    %v6869 = vunpack.c.l.b16 %v6350
    %v6870 = vunpack.c.l.b16 %v6351
    %v6871 = vunpack.c.l.b16 %v6352
    %v6872 = vunpack.c.l.b16 %v6353
    %v6873 = vunpack.c.l.b16 %v6354
    %v6874 = vunpack.c.l.b16 %v6355
    %v6875 = vunpack.c.l.b16 %v6356
    %v6876 = vunpack.c.l.b16 %v6357
    %v6877 = vunpack.c.l.b16 %v6358
    %v6878 = vunpack.c.l.b16 %v6359
    %v6879 = vunpack.c.l.b16 %v6360
    %v6880 = vunpack.c.l.b16 %v6361
    %v6881 = vunpack.c.l.b16 %v6362
    %v6882 = vunpack.c.l.b16 %v6363
    %v6883 = vunpack.c.l.b16 %v6364
    %v6884 = vunpack.c.l.b16 %v6365
    %v6885 = vunpack.c.l.b16 %v6366
    %v6886 = vunpack.c.l.b16 %v6367
    %v6887 = vunpack.c.l.b16 %v6368
    %v6888 = vunpack.c.l.b16 %v6369
    %v6889 = vunpack.c.l.b16 %v6370
    %v6890 = vunpack.c.l.b16 %v6371
    %v6891 = vunpack.c.l.b16 %v6372
    %v6892 = vunpack.c.l.b16 %v6373
    %v6893 = vunpack.c.l.b16 %v6374
    %v6894 = vunpack.c.l.b16 %v6375
    %v6895 = vunpack.c.l.b16 %v6376
    %v6896 = vunpack.c.l.b16 %v6377
    %v6897 = vunpack.c.l.b16 %v6378
    %v6898 = vunpack.c.l.b16 %v6379
    %v6899 = vunpack.c.l.b16 %v6380
    %v6900 = vunpack.c.l.b16 %v6381
    %v6901 = vunpack.c.l.b16 %v6382
    %v6902 = vunpack.c.l.b16 %v6383
    %v6903 = vunpack.c.l.b16 %v6384
    %v6904 = vunpack.c.l.b16 %v6385
    %v6905 = vunpack.c.l.b16 %v6386
    %v6906 = vunpack.c.l.b16 %v6387
    %v6907 = vunpack.c.l.b16 %v6388
    %v6908 = vunpack.c.l.b16 %v6389
    %v6909 = vunpack.c.l.b16 %v6390
    %v6910 = vunpack.c.l.b16 %v6391
    %v6911 = vunpack.c.l.b16 %v6392
    %v6912 = vunpack.c.l.b16 %v6393
    %v6913 = vunpack.c.l.b16 %v6394
    %v6914 = vunpack.c.l.b16 %v6395
    %v6915 = vunpack.c.l.b16 %v6396
    %v6916 = vunpack.c.l.b16 %v6397
    %v6917 = vunpack.c.l.b16 %v6398
    %v6918 = vunpack.c.l.b16 %v6399
    %v6919 = vunpack.c.l.b16 %v6400
    %v6920 = vunpack.c.l.b16 %v6401
    %v6921 = vunpack.c.l.b16 %v6402
    %v6922 = vunpack.c.l.b16 %v6403
    %v6923 = vunpack.c.l.b16 %v6404
    %v6924 = vunpack.c.l.b16 %v6405
    %v6925 = vunpack.c.l.b16 %v6406
    %v6926 = vunpack.c.l.b16 %v6407
    %v6927 = vunpack.c.l.b16 %v6408
    %v6928 = vunpack.c.l.b16 %v6409
    %v6929 = vunpack.c.l.b16 %v6410
    %v6930 = vunpack.c.l.b16 %v6411
    %v6931 = vunpack.c.l.b16 %v6412
    %v6932 = vunpack.c.l.b16 %v6413
    %v6933 = vunpack.c.l.b16 %v6414
    %v6934 = vunpack.c.l.b16 %v6415
    %v6935 = vunpack.c.l.b16 %v6416
    %v6936 = vunpack.c.l.b16 %v6417
    %v6937 = vunpack.c.l.b16 %v6418
    %v6938 = vunpack.c.l.b16 %v6419
    %v6939 = vunpack.c.l.b16 %v6420
    %v6940 = vunpack.c.l.b16 %v6421
    %v6941 = vunpack.c.l.b16 %v6422
    %v6942 = vunpack.c.l.b16 %v6423
    %v6943 = vunpack.c.l.b16 %v6424
    %v6944 = vunpack.c.l.b16 %v6425
    %v6945 = vunpack.c.l.b16 %v6426
    %v6946 = vunpack.c.l.b16 %v6427
    %v6947 = vunpack.c.l.b16 %v6428
    %v6948 = vunpack.c.l.b16 %v6429
    %v6949 = vunpack.c.l.b16 %v6430
    %v6950 = vunpack.c.l.b16 %v6431
    %v6951 = vunpack.c.l.b16 %v6432
    %v6952 = vunpack.c.l.b16 %v6433
    %v6953 = vunpack.c.l.b16 %v6434
    %v6954 = vunpack.c.l.b16 %v6435
    %v6955 = vunpack.c.l.b16 %v6436
    %v6956 = vunpack.c.l.b16 %v6437
    %v6957 = vunpack.c.l.b16 %v6438
    %v6958 = vunpack.c.l.b16 %v6439
    %v6959 = vunpack.c.l.b16 %v6440
    %v6960 = vunpack.c.l.b16 %v6441
    %v6961 = vunpack.c.l.b16 %v6442
    %v6962 = vunpack.c.l.b16 %v6443
    %v6963 = vunpack.c.l.b16 %v6444
    %v6964 = vunpack.c.l.b16 %v6445
    %v6965 = vunpack.c.l.b16 %v6446
    %v6966 = vunpack.c.l.b16 %v6447
    %v6967 = vunpack.c.l.b16 %v6448
    %v6968 = vunpack.c.l.b16 %v6449
    %v6969 = vunpack.c.l.b16 %v6450
    %v6970 = vunpack.c.l.b16 %v6451
    %v6971 = vunpack.c.l.b16 %v6452
    %v6972 = vunpack.c.l.b16 %v6453
    %v6973 = vunpack.c.l.b16 %v6454
    %v6974 = vunpack.c.l.b16 %v6455
    %v6975 = vunpack.c.l.b16 %v6456
    %v6976 = vunpack.c.l.b16 %v6457
    %v6977 = vunpack.c.l.b16 %v6458
    %v6978 = vunpack.c.l.b16 %v6459
    %v6979 = vunpack.c.l.b16 %v6460
    %v6980 = vunpack.c.l.b16 %v6461
    %v6981 = vunpack.c.l.b16 %v6462
    %v6982 = vunpack.c.l.b16 %v6463
    %v6983 = vunpack.c.l.b16 %v6464
    %v6984 = vunpack.c.l.b16 %v6465
    %v6985 = vunpack.c.l.b16 %v6466
    %v6986 = vunpack.c.l.b16 %v6467
    %v6987 = vunpack.c.l.b16 %v6468
    %v6988 = vunpack.c.l.b16 %v6469
    %v6989 = vunpack.c.l.b16 %v6470
    %v6990 = vunpack.c.l.b16 %v6471
    %v6991 = vunpack.c.l.b16 %v6472
    %v6992 = vunpack.c.l.b16 %v6473
    %v6993 = vunpack.c.l.b16 %v6474
    %v6994 = vunpack.c.l.b16 %v6475
    %v6995 = vunpack.c.l.b16 %v6476
    %v6996 = vunpack.c.l.b16 %v6477
    %v6997 = vunpack.c.l.b16 %v6478
    %v6998 = vunpack.c.l.b16 %v6479
    %v6999 = vunpack.c.l.b16 %v6480
    %v7000 = vunpack.c.l.b16 %v6481
    %v7001 = vunpack.c.l.b16 %v6482
    %v7002 = vunpack.c.l.b16 %v6483
    %v7003 = vunpack.c.l.b16 %v6484
    %v7004 = vunpack.c.l.b16 %v6485
    %v7005 = vunpack.c.l.b16 %v6486
    %v7006 = vunpack.c.l.b16 %v6487
    %v7007 = vunpack.c.l.b16 %v6488
    %v7008 = vunpack.c.l.b16 %v6489
    %v7009 = vunpack.c.l.b16 %v6490
    %v7010 = vunpack.c.l.b16 %v6491
    %v7011 = vunpack.c.l.b16 %v6492
    %v7012 = vunpack.c.l.b16 %v6493
    %v7013 = vunpack.c.l.b16 %v6494
    %v7014 = vunpack.c.l.b16 %v6495
    %v7015 = vunpack.c.l.b16 %v6496
    %v7016 = vunpack.c.l.b16 %v6497
    %v7017 = vunpack.c.l.b16 %v6498
    %v7018 = vunpack.c.l.b16 %v6499
    %v7019 = vunpack.c.l.b16 %v6500
    %v7020 = vunpack.c.l.b16 %v6501
    %v7021 = vunpack.c.l.b16 %v6502
    %v7022 = vunpack.c.l.b16 %v6503
    %v7023 = vpack.c.b16 %v6768, %v6767
    %v7024 = vpack.c.b16 %v6770, %v6769
    %v7025 = vpack.c.b16 %v6772, %v6771
    %v7026 = vpack.c.b16 %v6774, %v6773
    %v7027 = vpack.c.b16 %v6776, %v6775
    %v7028 = vpack.c.b16 %v6778, %v6777
    %v7029 = vpack.c.b16 %v6780, %v6779
    %v7030 = vpack.c.b16 %v6782, %v6781
    %v7031 = vpack.c.b16 %v6784, %v6783
    %v7032 = vpack.c.b16 %v6786, %v6785
    %v7033 = vpack.c.b16 %v6788, %v6787
    %v7034 = vpack.c.b16 %v6790, %v6789
    %v7035 = vpack.c.b16 %v6792, %v6791
    %v7036 = vpack.c.b16 %v6794, %v6793
    %v7037 = vpack.c.b16 %v6796, %v6795
    %v7038 = vpack.c.b16 %v6798, %v6797
    %v7039 = vpack.c.b16 %v6800, %v6799
    %v7040 = vpack.c.b16 %v6802, %v6801
    %v7041 = vpack.c.b16 %v6804, %v6803
    %v7042 = vpack.c.b16 %v6806, %v6805
    %v7043 = vpack.c.b16 %v6808, %v6807
    %v7044 = vpack.c.b16 %v6810, %v6809
    %v7045 = vpack.c.b16 %v6812, %v6811
    %v7046 = vpack.c.b16 %v6814, %v6813
    %v7047 = vpack.c.b16 %v6816, %v6815
    %v7048 = vpack.c.b16 %v6818, %v6817
    %v7049 = vpack.c.b16 %v6820, %v6819
    %v7050 = vpack.c.b16 %v6822, %v6821
    %v7051 = vpack.c.b16 %v6824, %v6823
    %v7052 = vpack.c.b16 %v6826, %v6825
    %v7053 = vpack.c.b16 %v6828, %v6827
    %v7054 = vpack.c.b16 %v6830, %v6829
    %v7055 = vpack.c.b16 %v6832, %v6831
    %v7056 = vpack.c.b16 %v6834, %v6833
    %v7057 = vpack.c.b16 %v6836, %v6835
    %v7058 = vpack.c.b16 %v6838, %v6837
    %v7059 = vpack.c.b16 %v6840, %v6839
    %v7060 = vpack.c.b16 %v6842, %v6841
    %v7061 = vpack.c.b16 %v6844, %v6843
    %v7062 = vpack.c.b16 %v6846, %v6845
    %v7063 = vpack.c.b16 %v6848, %v6847
    %v7064 = vpack.c.b16 %v6850, %v6849
    %v7065 = vpack.c.b16 %v6852, %v6851
    %v7066 = vpack.c.b16 %v6854, %v6853
    %v7067 = vpack.c.b16 %v6856, %v6855
    %v7068 = vpack.c.b16 %v6858, %v6857
    %v7069 = vpack.c.b16 %v6860, %v6859
    %v7070 = vpack.c.b16 %v6862, %v6861
    %v7071 = vpack.c.b16 %v6864, %v6863
    %v7072 = vpack.c.b16 %v6866, %v6865
    %v7073 = vpack.c.b16 %v6868, %v6867
    %v7074 = vpack.c.b16 %v6870, %v6869
    %v7075 = vpack.c.b16 %v6872, %v6871
    %v7076 = vpack.c.b16 %v6874, %v6873
    %v7077 = vpack.c.b16 %v6876, %v6875
    %v7078 = vpack.c.b16 %v6878, %v6877
    %v7079 = vpack.c.b16 %v6880, %v6879
    %v7080 = vpack.c.b16 %v6882, %v6881
    %v7081 = vpack.c.b16 %v6884, %v6883
    %v7082 = vpack.c.b16 %v6886, %v6885
    %v7083 = vpack.c.b16 %v6888, %v6887
    %v7084 = vpack.c.b16 %v6890, %v6889
    %v7085 = vpack.c.b16 %v6892, %v6891
    %v7086 = vpack.c.b16 %v6894, %v6893
    %v7087 = vpack.c.b16 %v6896, %v6895
    %v7088 = vpack.c.b16 %v6898, %v6897
    %v7089 = vpack.c.b16 %v6900, %v6899
    %v7090 = vpack.c.b16 %v6902, %v6901
    %v7091 = vpack.c.b16 %v6904, %v6903
    %v7092 = vpack.c.b16 %v6906, %v6905
    %v7093 = vpack.c.b16 %v6908, %v6907
    %v7094 = vpack.c.b16 %v6910, %v6909
    %v7095 = vpack.c.b16 %v6912, %v6911
    %v7096 = vpack.c.b16 %v6914, %v6913
    %v7097 = vpack.c.b16 %v6916, %v6915
    %v7098 = vpack.c.b16 %v6918, %v6917
    %v7099 = vpack.c.b16 %v6920, %v6919
    %v7100 = vpack.c.b16 %v6922, %v6921
    %v7101 = vpack.c.b16 %v6924, %v6923
    %v7102 = vpack.c.b16 %v6926, %v6925
    %v7103 = vpack.c.b16 %v6928, %v6927
    %v7104 = vpack.c.b16 %v6930, %v6929
    %v7105 = vpack.c.b16 %v6932, %v6931
    %v7106 = vpack.c.b16 %v6934, %v6933
    %v7107 = vpack.c.b16 %v6936, %v6935
    %v7108 = vpack.c.b16 %v6938, %v6937
    %v7109 = vpack.c.b16 %v6940, %v6939
    %v7110 = vpack.c.b16 %v6942, %v6941
    %v7111 = vpack.c.b16 %v6944, %v6943
    %v7112 = vpack.c.b16 %v6946, %v6945
    %v7113 = vpack.c.b16 %v6948, %v6947
    %v7114 = vpack.c.b16 %v6950, %v6949
    %v7115 = vpack.c.b16 %v6952, %v6951
    %v7116 = vpack.c.b16 %v6954, %v6953
    %v7117 = vpack.c.b16 %v6956, %v6955
    %v7118 = vpack.c.b16 %v6958, %v6957
    %v7119 = vpack.c.b16 %v6960, %v6959
    %v7120 = vpack.c.b16 %v6962, %v6961
    %v7121 = vpack.c.b16 %v6964, %v6963
    %v7122 = vpack.c.b16 %v6966, %v6965
    %v7123 = vpack.c.b16 %v6968, %v6967
    %v7124 = vpack.c.b16 %v6970, %v6969
    %v7125 = vpack.c.b16 %v6972, %v6971
    %v7126 = vpack.c.b16 %v6974, %v6973
    %v7127 = vpack.c.b16 %v6976, %v6975
    %v7128 = vpack.c.b16 %v6978, %v6977
    %v7129 = vpack.c.b16 %v6980, %v6979
    %v7130 = vpack.c.b16 %v6982, %v6981
    %v7131 = vpack.c.b16 %v6984, %v6983
    %v7132 = vpack.c.b16 %v6986, %v6985
    %v7133 = vpack.c.b16 %v6988, %v6987
    %v7134 = vpack.c.b16 %v6990, %v6989
    %v7135 = vpack.c.b16 %v6992, %v6991
    %v7136 = vpack.c.b16 %v6994, %v6993
    %v7137 = vpack.c.b16 %v6996, %v6995
    %v7138 = vpack.c.b16 %v6998, %v6997
    %v7139 = vpack.c.b16 %v7000, %v6999
    %v7140 = vpack.c.b16 %v7002, %v7001
    %v7141 = vpack.c.b16 %v7004, %v7003
    %v7142 = vpack.c.b16 %v7006, %v7005
    %v7143 = vpack.c.b16 %v7008, %v7007
    %v7144 = vpack.c.b16 %v7010, %v7009
    %v7145 = vpack.c.b16 %v7012, %v7011
    %v7146 = vpack.c.b16 %v7014, %v7013
    %v7147 = vpack.c.b16 %v7016, %v7015
    %v7148 = vpack.c.b16 %v7018, %v7017
    %v7149 = vpack.c.b16 %v7020, %v7019
    %v7150 = vpack.c.b16 %v7022, %v7021
    %7279 = vmatprep.subr.bf16.mxu0 0
    %7280 = vmatpush1.bf16.msra.mxu0 %v7023
    %7281 = vmatprep.subr.bf16.mxu0 0
    %7282 = vmatpush1.bf16.msra.mxu0 %v7024
    %7283 = vmatprep.subr.bf16.mxu0 0
    %7284 = vmatpush1.bf16.msra.mxu0 %v7025
    %7285 = vmatprep.subr.bf16.mxu0 0
    %7286 = vmatpush1.bf16.msra.mxu0 %v7026
    %7287 = vmatprep.subr.bf16.mxu0 0
    %7288 = vmatpush1.bf16.msra.mxu0 %v7027
    %7289 = vmatprep.subr.bf16.mxu0 0
    %7290 = vmatpush1.bf16.msra.mxu0 %v7028
    %7291 = vmatprep.subr.bf16.mxu0 0
    %7292 = vmatpush1.bf16.msra.mxu0 %v7029
    %7293 = vmatprep.subr.bf16.mxu0 0
    %7294 = vmatpush1.bf16.msra.mxu0 %v7030
    %7295 = vmatprep.subr.bf16.mxu0 0
    %7296 = vmatpush1.bf16.msra.mxu0 %v7031
    %7297 = vmatprep.subr.bf16.mxu0 0
    %7298 = vmatpush1.bf16.msra.mxu0 %v7032
    %7299 = vmatprep.subr.bf16.mxu0 0
    %7300 = vmatpush1.bf16.msra.mxu0 %v7033
    %7301 = vmatprep.subr.bf16.mxu0 0
    %7302 = vmatpush1.bf16.msra.mxu0 %v7034
    %7303 = vmatprep.subr.bf16.mxu0 0
    %7304 = vmatpush1.bf16.msra.mxu0 %v7035
    %7305 = vmatprep.subr.bf16.mxu0 0
    %7306 = vmatpush1.bf16.msra.mxu0 %v7036
    %7307 = vmatprep.subr.bf16.mxu0 0
    %7308 = vmatpush1.bf16.msra.mxu0 %v7037
    %7309 = vmatprep.subr.bf16.mxu0 0
    %7310 = vmatpush1.bf16.msra.mxu0 %v7038
    %7311 = vmatprep.mubr.bf16.mxu0 %v6233
    %7312 = vmatmul.mubr.bf16.gmra.mrb[0].mxu0 %v6232
    %v7313 = vpop.f32.mrb[0].mxu0
    %v7314 = vadd.f32 %v6509, %v7313
    %v7315 = vpop.f32.mrb[0].mxu0
    %v7316 = vpop.f32.mrb[0].mxu0
    %v7317 = vpop.f32.mrb[0].mxu0
    %7318 = vdwg.mxu0
    %7319 = vmatprep.subr.bf16.mxu0 0
    %7320 = vmatpush1.bf16.msra.mxu0 %v7039
    %7321 = vmatprep.subr.bf16.mxu0 0
    %7322 = vmatpush1.bf16.msra.mxu0 %v7040
    %7323 = vmatprep.subr.bf16.mxu0 0
    %7324 = vmatpush1.bf16.msra.mxu0 %v7041
    %7325 = vmatprep.subr.bf16.mxu0 0
    %7326 = vmatpush1.bf16.msra.mxu0 %v7042
    %7327 = vmatprep.subr.bf16.mxu0 0
    %7328 = vmatpush1.bf16.msra.mxu0 %v7043
    %7329 = vmatprep.subr.bf16.mxu0 0
    %7330 = vmatpush1.bf16.msra.mxu0 %v7044
    %7331 = vmatprep.subr.bf16.mxu0 0
    %7332 = vmatpush1.bf16.msra.mxu0 %v7045
    %7333 = vmatprep.subr.bf16.mxu0 0
    %7334 = vmatpush1.bf16.msra.mxu0 %v7046
    %7335 = vmatprep.subr.bf16.mxu0 0
    %7336 = vmatpush1.bf16.msra.mxu0 %v7047
    %7337 = vmatprep.subr.bf16.mxu0 0
    %7338 = vmatpush1.bf16.msra.mxu0 %v7048
    %7339 = vmatprep.subr.bf16.mxu0 0
    %7340 = vmatpush1.bf16.msra.mxu0 %v7049
    %7341 = vmatprep.subr.bf16.mxu0 0
    %7342 = vmatpush1.bf16.msra.mxu0 %v7050
    %7343 = vmatprep.subr.bf16.mxu0 0
    %7344 = vmatpush1.bf16.msra.mxu0 %v7051
    %7345 = vmatprep.subr.bf16.mxu0 0
    %7346 = vmatpush1.bf16.msra.mxu0 %v7052
    %7347 = vmatprep.subr.bf16.mxu0 0
    %7348 = vmatpush1.bf16.msra.mxu0 %v7053
    %7349 = vmatprep.subr.bf16.mxu0 0
    %7350 = vmatpush1.bf16.msra.mxu0 %v7054
    %7351 = vmatprep.mubr.bf16.mxu0 %v6235
    %7352 = vmatmul.mubr.bf16.gmra.mrb[0].mxu0 %v6234
    %v7353 = vpop.f32.mrb[0].mxu0
    %v7354 = vadd.f32 %v7314, %v7353
    %v7355 = vpop.f32.mrb[0].mxu0
    %v7356 = vpop.f32.mrb[0].mxu0
    %v7357 = vpop.f32.mrb[0].mxu0
    %7358 = vdwg.mxu0
    %7359 = vmatprep.subr.bf16.mxu0 0
    %7360 = vmatpush1.bf16.msra.mxu0 %v7055
    %7361 = vmatprep.subr.bf16.mxu0 0
    %7362 = vmatpush1.bf16.msra.mxu0 %v7056
    %7363 = vmatprep.subr.bf16.mxu0 0
    %7364 = vmatpush1.bf16.msra.mxu0 %v7057
    %7365 = vmatprep.subr.bf16.mxu0 0
    %7366 = vmatpush1.bf16.msra.mxu0 %v7058
    %7367 = vmatprep.subr.bf16.mxu0 0
    %7368 = vmatpush1.bf16.msra.mxu0 %v7059
    %7369 = vmatprep.subr.bf16.mxu0 0
    %7370 = vmatpush1.bf16.msra.mxu0 %v7060
    %7371 = vmatprep.subr.bf16.mxu0 0
    %7372 = vmatpush1.bf16.msra.mxu0 %v7061
    %7373 = vmatprep.subr.bf16.mxu0 0
    %7374 = vmatpush1.bf16.msra.mxu0 %v7062
    %7375 = vmatprep.subr.bf16.mxu0 0
    %7376 = vmatpush1.bf16.msra.mxu0 %v7063
    %7377 = vmatprep.subr.bf16.mxu0 0
    %7378 = vmatpush1.bf16.msra.mxu0 %v7064
    %7379 = vmatprep.subr.bf16.mxu0 0
    %7380 = vmatpush1.bf16.msra.mxu0 %v7065
    %7381 = vmatprep.subr.bf16.mxu0 0
    %7382 = vmatpush1.bf16.msra.mxu0 %v7066
    %7383 = vmatprep.subr.bf16.mxu0 0
    %7384 = vmatpush1.bf16.msra.mxu0 %v7067
    %7385 = vmatprep.subr.bf16.mxu0 0
    %7386 = vmatpush1.bf16.msra.mxu0 %v7068
    %7387 = vmatprep.subr.bf16.mxu0 0
    %7388 = vmatpush1.bf16.msra.mxu0 %v7069
    %7389 = vmatprep.subr.bf16.mxu0 0
    %7390 = vmatpush1.bf16.msra.mxu0 %v7070
    %7391 = vmatprep.mubr.bf16.mxu0 %v6237
    %7392 = vmatmul.mubr.bf16.gmra.mrb[0].mxu0 %v6236
    %v7393 = vpop.f32.mrb[0].mxu0
    %v7394 = vadd.f32 %v7354, %v7393
    %v7395 = vpop.f32.mrb[0].mxu0
    %v7396 = vpop.f32.mrb[0].mxu0
    %v7397 = vpop.f32.mrb[0].mxu0
    %7398 = vdwg.mxu0
    %7399 = vmatprep.subr.bf16.mxu0 0
    %7400 = vmatpush1.bf16.msra.mxu0 %v7071
    %7401 = vmatprep.subr.bf16.mxu0 0
    %7402 = vmatpush1.bf16.msra.mxu0 %v7072
    %7403 = vmatprep.subr.bf16.mxu0 0
    %7404 = vmatpush1.bf16.msra.mxu0 %v7073
    %7405 = vmatprep.subr.bf16.mxu0 0
    %7406 = vmatpush1.bf16.msra.mxu0 %v7074
    %7407 = vmatprep.subr.bf16.mxu0 0
    %7408 = vmatpush1.bf16.msra.mxu0 %v7075
    %7409 = vmatprep.subr.bf16.mxu0 0
    %7410 = vmatpush1.bf16.msra.mxu0 %v7076
    %7411 = vmatprep.subr.bf16.mxu0 0
    %7412 = vmatpush1.bf16.msra.mxu0 %v7077
    %7413 = vmatprep.subr.bf16.mxu0 0
    %7414 = vmatpush1.bf16.msra.mxu0 %v7078
    %7415 = vmatprep.subr.bf16.mxu0 0
    %7416 = vmatpush1.bf16.msra.mxu0 %v7079
    %7417 = vmatprep.subr.bf16.mxu0 0
    %7418 = vmatpush1.bf16.msra.mxu0 %v7080
    %7419 = vmatprep.subr.bf16.mxu0 0
    %7420 = vmatpush1.bf16.msra.mxu0 %v7081
    %7421 = vmatprep.subr.bf16.mxu0 0
    %7422 = vmatpush1.bf16.msra.mxu0 %v7082
    %7423 = vmatprep.subr.bf16.mxu0 0
    %7424 = vmatpush1.bf16.msra.mxu0 %v7083
    %7425 = vmatprep.subr.bf16.mxu0 0
    %7426 = vmatpush1.bf16.msra.mxu0 %v7084
    %7427 = vmatprep.subr.bf16.mxu0 0
    %7428 = vmatpush1.bf16.msra.mxu0 %v7085
    %7429 = vmatprep.subr.bf16.mxu0 0
    %7430 = vmatpush1.bf16.msra.mxu0 %v7086
    %7431 = vmatprep.mubr.bf16.mxu0 %v6239
    %7432 = vmatmul.mubr.bf16.gmra.mrb[0].mxu0 %v6238
    %v7433 = vpop.f32.mrb[0].mxu0
    %v7434 = vadd.f32 %v7394, %v7433
    %v7435 = vpop.f32.mrb[0].mxu0
    %v7436 = vpop.f32.mrb[0].mxu0
    %v7437 = vpop.f32.mrb[0].mxu0
    %7438 = vdwg.mxu0
    %7439 = vmatprep.subr.bf16.mxu0 0
    %7440 = vmatpush1.bf16.msra.mxu0 %v7087
    %7441 = vmatprep.subr.bf16.mxu0 0
    %7442 = vmatpush1.bf16.msra.mxu0 %v7088
    %7443 = vmatprep.subr.bf16.mxu0 0
    %7444 = vmatpush1.bf16.msra.mxu0 %v7089
    %7445 = vmatprep.subr.bf16.mxu0 0
    %7446 = vmatpush1.bf16.msra.mxu0 %v7090
    %7447 = vmatprep.subr.bf16.mxu0 0
    %7448 = vmatpush1.bf16.msra.mxu0 %v7091
    %7449 = vmatprep.subr.bf16.mxu0 0
    %7450 = vmatpush1.bf16.msra.mxu0 %v7092
    %7451 = vmatprep.subr.bf16.mxu0 0
    %7452 = vmatpush1.bf16.msra.mxu0 %v7093
    %7453 = vmatprep.subr.bf16.mxu0 0
    %7454 = vmatpush1.bf16.msra.mxu0 %v7094
    %7455 = vmatprep.subr.bf16.mxu0 0
    %7456 = vmatpush1.bf16.msra.mxu0 %v7095
    %7457 = vmatprep.subr.bf16.mxu0 0
    %7458 = vmatpush1.bf16.msra.mxu0 %v7096
    %7459 = vmatprep.subr.bf16.mxu0 0
    %7460 = vmatpush1.bf16.msra.mxu0 %v7097
    %7461 = vmatprep.subr.bf16.mxu0 0
    %7462 = vmatpush1.bf16.msra.mxu0 %v7098
    %7463 = vmatprep.subr.bf16.mxu0 0
    %7464 = vmatpush1.bf16.msra.mxu0 %v7099
    %7465 = vmatprep.subr.bf16.mxu0 0
    %7466 = vmatpush1.bf16.msra.mxu0 %v7100
    %7467 = vmatprep.subr.bf16.mxu0 0
    %7468 = vmatpush1.bf16.msra.mxu0 %v7101
    %7469 = vmatprep.subr.bf16.mxu0 0
    %7470 = vmatpush1.bf16.msra.mxu0 %v7102
    %7471 = vmatprep.mubr.bf16.mxu0 %v6241
    %7472 = vmatmul.mubr.bf16.gmra.mrb[0].mxu0 %v6240
    %v7473 = vpop.f32.mrb[0].mxu0
    %v7474 = vadd.f32 %v7434, %v7473
    %v7475 = vpop.f32.mrb[0].mxu0
    %v7476 = vpop.f32.mrb[0].mxu0
    %v7477 = vpop.f32.mrb[0].mxu0
    %7478 = vdwg.mxu0
    %7479 = vmatprep.subr.bf16.mxu0 0
    %7480 = vmatpush1.bf16.msra.mxu0 %v7103
    %7481 = vmatprep.subr.bf16.mxu0 0
    %7482 = vmatpush1.bf16.msra.mxu0 %v7104
    %7483 = vmatprep.subr.bf16.mxu0 0
    %7484 = vmatpush1.bf16.msra.mxu0 %v7105
    %7485 = vmatprep.subr.bf16.mxu0 0
    %7486 = vmatpush1.bf16.msra.mxu0 %v7106
    %7487 = vmatprep.subr.bf16.mxu0 0
    %7488 = vmatpush1.bf16.msra.mxu0 %v7107
    %7489 = vmatprep.subr.bf16.mxu0 0
    %7490 = vmatpush1.bf16.msra.mxu0 %v7108
    %7491 = vmatprep.subr.bf16.mxu0 0
    %7492 = vmatpush1.bf16.msra.mxu0 %v7109
    %7493 = vmatprep.subr.bf16.mxu0 0
    %7494 = vmatpush1.bf16.msra.mxu0 %v7110
    %7495 = vmatprep.subr.bf16.mxu0 0
    %7496 = vmatpush1.bf16.msra.mxu0 %v7111
    %7497 = vmatprep.subr.bf16.mxu0 0
    %7498 = vmatpush1.bf16.msra.mxu0 %v7112
    %7499 = vmatprep.subr.bf16.mxu0 0
    %7500 = vmatpush1.bf16.msra.mxu0 %v7113
    %7501 = vmatprep.subr.bf16.mxu0 0
    %7502 = vmatpush1.bf16.msra.mxu0 %v7114
    %7503 = vmatprep.subr.bf16.mxu0 0
    %7504 = vmatpush1.bf16.msra.mxu0 %v7115
    %7505 = vmatprep.subr.bf16.mxu0 0
    %7506 = vmatpush1.bf16.msra.mxu0 %v7116
    %7507 = vmatprep.subr.bf16.mxu0 0
    %7508 = vmatpush1.bf16.msra.mxu0 %v7117
    %7509 = vmatprep.subr.bf16.mxu0 0
    %7510 = vmatpush1.bf16.msra.mxu0 %v7118
    %7511 = vmatprep.mubr.bf16.mxu0 %v6243
    %7512 = vmatmul.mubr.bf16.gmra.mrb[0].mxu0 %v6242
    %v7513 = vpop.f32.mrb[0].mxu0
    %v7514 = vadd.f32 %v7474, %v7513
    %v7515 = vpop.f32.mrb[0].mxu0
    %v7516 = vpop.f32.mrb[0].mxu0
    %v7517 = vpop.f32.mrb[0].mxu0
    %7518 = vdwg.mxu0
    %7519 = vmatprep.subr.bf16.mxu0 0
    %7520 = vmatpush1.bf16.msra.mxu0 %v7119
    %7521 = vmatprep.subr.bf16.mxu0 0
    %7522 = vmatpush1.bf16.msra.mxu0 %v7120
    %7523 = vmatprep.subr.bf16.mxu0 0
    %7524 = vmatpush1.bf16.msra.mxu0 %v7121
    %7525 = vmatprep.subr.bf16.mxu0 0
    %7526 = vmatpush1.bf16.msra.mxu0 %v7122
    %7527 = vmatprep.subr.bf16.mxu0 0
    %7528 = vmatpush1.bf16.msra.mxu0 %v7123
    %7529 = vmatprep.subr.bf16.mxu0 0
    %7530 = vmatpush1.bf16.msra.mxu0 %v7124
    %7531 = vmatprep.subr.bf16.mxu0 0
    %7532 = vmatpush1.bf16.msra.mxu0 %v7125
    %7533 = vmatprep.subr.bf16.mxu0 0
    %7534 = vmatpush1.bf16.msra.mxu0 %v7126
    %7535 = vmatprep.subr.bf16.mxu0 0
    %7536 = vmatpush1.bf16.msra.mxu0 %v7127
    %7537 = vmatprep.subr.bf16.mxu0 0
    %7538 = vmatpush1.bf16.msra.mxu0 %v7128
    %7539 = vmatprep.subr.bf16.mxu0 0
    %7540 = vmatpush1.bf16.msra.mxu0 %v7129
    %7541 = vmatprep.subr.bf16.mxu0 0
    %7542 = vmatpush1.bf16.msra.mxu0 %v7130
    %7543 = vmatprep.subr.bf16.mxu0 0
    %7544 = vmatpush1.bf16.msra.mxu0 %v7131
    %7545 = vmatprep.subr.bf16.mxu0 0
    %7546 = vmatpush1.bf16.msra.mxu0 %v7132
    %7547 = vmatprep.subr.bf16.mxu0 0
    %7548 = vmatpush1.bf16.msra.mxu0 %v7133
    %7549 = vmatprep.subr.bf16.mxu0 0
    %7550 = vmatpush1.bf16.msra.mxu0 %v7134
    %7551 = vmatprep.mubr.bf16.mxu0 %v6245
    %7552 = vmatmul.mubr.bf16.gmra.mrb[0].mxu0 %v6244
    %v7553 = vpop.f32.mrb[0].mxu0
    %v7554 = vadd.f32 %v7514, %v7553
    %v7555 = vpop.f32.mrb[0].mxu0
    %v7556 = vpop.f32.mrb[0].mxu0
    %v7557 = vpop.f32.mrb[0].mxu0
    %7558 = vdwg.mxu0
    %7559 = vmatprep.subr.bf16.mxu0 0
    %7560 = vmatpush1.bf16.msra.mxu0 %v7135
    %7561 = vmatprep.subr.bf16.mxu0 0
    %7562 = vmatpush1.bf16.msra.mxu0 %v7136
    %7563 = vmatprep.subr.bf16.mxu0 0
    %7564 = vmatpush1.bf16.msra.mxu0 %v7137
    %7565 = vmatprep.subr.bf16.mxu0 0
    %7566 = vmatpush1.bf16.msra.mxu0 %v7138
    %7567 = vmatprep.subr.bf16.mxu0 0
    %7568 = vmatpush1.bf16.msra.mxu0 %v7139
    %7569 = vmatprep.subr.bf16.mxu0 0
    %7570 = vmatpush1.bf16.msra.mxu0 %v7140
    %7571 = vmatprep.subr.bf16.mxu0 0
    %7572 = vmatpush1.bf16.msra.mxu0 %v7141
    %7573 = vmatprep.subr.bf16.mxu0 0
    %7574 = vmatpush1.bf16.msra.mxu0 %v7142
    %7575 = vmatprep.subr.bf16.mxu0 0
    %7576 = vmatpush1.bf16.msra.mxu0 %v7143
    %7577 = vmatprep.subr.bf16.mxu0 0
    %7578 = vmatpush1.bf16.msra.mxu0 %v7144
    %7579 = vmatprep.subr.bf16.mxu0 0
    %7580 = vmatpush1.bf16.msra.mxu0 %v7145
    %7581 = vmatprep.subr.bf16.mxu0 0
    %7582 = vmatpush1.bf16.msra.mxu0 %v7146
    %7583 = vmatprep.subr.bf16.mxu0 0
    %7584 = vmatpush1.bf16.msra.mxu0 %v7147
    %7585 = vmatprep.subr.bf16.mxu0 0
    %7586 = vmatpush1.bf16.msra.mxu0 %v7148
    %7587 = vmatprep.subr.bf16.mxu0 0
    %7588 = vmatpush1.bf16.msra.mxu0 %v7149
    %7589 = vmatprep.subr.bf16.mxu0 0
    %7590 = vmatpush1.bf16.msra.mxu0 %v7150
    %7591 = vmatprep.mubr.bf16.mxu0 %v6247
    %7592 = vmatmul.mubr.bf16.gmra.mrb[0].mxu0 %v6246
    %v7593 = vpop.f32.mrb[0].mxu0
    %v7594 = vadd.f32 %v7554, %v7593
    %v7595 = vpop.f32.mrb[0].mxu0
    %v7596 = vpop.f32.mrb[0].mxu0
    %v7597 = vpop.f32.mrb[0].mxu0
    %7598 = vdwg.mxu0
    %7599 = vst [vmem:[#allocation11] sm:$0xff] %v7594
    // Predicated region
    $region42: #{tpu_custom_call.1} parent=1 // pred_check
      _
    $region43: #{tpu_custom_call.1} parent=1 // pred_check_branch
      %7601 = sbr.rel (0) target = $region45
    $region44: #{tpu_custom_call.1} parent=1 // pred_region
      %s7603 = ssub.s32 128, 128
      %7604 = vsyncadd [#allocation4], %s7603
      %s7606 = sshll.u32 [#allocation11], 4
      %s7607 = int_to_ptr.vmem [resolvable:$true] %s7606
      %7609 = dma.vmem_to_hbm [thread:$0]  %s7607, 128, %s5, [#allocation4]
    $region45: #{tpu_custom_call.1} parent=1 // pred_fallthru
      _
    // Predicated region
    $region46: #{tpu_custom_call.1} parent=1 // pred_check
      _
    $region47: #{tpu_custom_call.1} parent=1 // pred_check_branch
      %7611 = sbr.rel (0) target = $region49
    $region48: #{tpu_custom_call.1} parent=1 // pred_region
      %7612 = dma.done [#allocation4], 128
    $region49: #{tpu_custom_call.1} parent=1 // pred_fallthru
      _
    %7613 = vsyncpa [#allocation3], 1
    %7614 = vsyncpa [#allocation6], 1
    %7615 = vsyncpa [#allocation9], 1
    %7616 = vsyncpa [#allocation4], 1

</llo_original>
